<compile_context>
chip_gen: v6e
topology: v6e:2x2x1
jax: 0.10.0
libtpu: 0.0.40
codegen_flags: <defaults>
</compile_context>

<pallas_src>
import functools
import math

import jax
import jax.numpy as jnp
from jax.experimental import pallas as pl
from jax.experimental.pallas import tpu as pltpu

D_MODEL = 32
N_HEADS = 4
D_FF = 64
N_LAYERS = 2
LN_EPS = 1e-6


def _layernorm(x, a, b, eps=LN_EPS):
    # Matches the PyTorch LayerNorm in the reference module:
    #   mean over last dim, unbiased std (divide by D-1), eps added to std.
    d = x.shape[-1]
    mean = jnp.mean(x, axis=-1, keepdims=True)
    var = jnp.sum((x - mean) ** 2, axis=-1, keepdims=True) / (d - 1)
    std = jnp.sqrt(var)
    return a * (x - mean) / (std + eps) + b


# ---------------------------------------------------------------------------
# Fused Pallas kernel: N_LAYERS encoder layers + final LayerNorm
# ---------------------------------------------------------------------------
def encoder_kernel(x_ref, bias_ref, wqkvo_ref, bqkv_ref, vecs_ref,
                   w1_ref, b1_ref, w2_ref, out_ref, *, batch, seq):
    D, H = D_MODEL, N_HEADS
    dk = D // H

    # Load everything once; weights are shared by all layers.
    x = x_ref[...]                       # (B*S, D) residual stream
    bias = bias_ref[...]                 # (B, S) additive key-mask bias (0 / -1e9)
    wqkvo = wqkvo_ref[...]               # (D, 4D): [Wq*scale | Wk | Wv | Wo]
    w_qkv = wqkvo[:, :3 * D]             # (D, 3D)
    w_o = wqkvo[:, 3 * D:]               # (D, D)
    b_qkv = bqkv_ref[...]                # (1, 3D): [bq*scale | bk | bv]
    vecs = vecs_ref[...]                 # (8, D): bo, b2, ln1a, ln1b, ln2a, ln2b, norm_a, norm_b
    bo, b2 = vecs[0:1], vecs[1:2]
    ln1a, ln1b = vecs[2:3], vecs[3:4]
    ln2a, ln2b = vecs[4:5], vecs[5:6]
    norm_a, norm_b = vecs[6:7], vecs[7:8]
    w1 = w1_ref[...]                     # (D, D_FF)
    b1 = b1_ref[...]                     # (1, D_FF)
    w2 = w2_ref[...]                     # (D_FF, D)

    for _ in range(N_LAYERS):            # static unroll; layers share weights
        # ---- sublayer 1: x + MultiHeadAttention(LayerNorm(x)) ----
        h = _layernorm(x, ln1a, ln1b)
        qkv = jnp.dot(h, w_qkv, preferred_element_type=jnp.float32) + b_qkv   # (B*S, 3D)

        attn_slabs = []
        for b in range(batch):                                   # static batch loop
            qkv_b = qkv[b * seq:(b + 1) * seq]                   # (S, 3D), sublane-aligned
            bias_b = bias[b:b + 1, :]                            # (1, S)
            acc = jnp.zeros((seq, D), jnp.float32)
            for hd in range(H):                                  # static head loop
                q = qkv_b[:, hd * dk:(hd + 1) * dk]              # 1/sqrt(dk) folded into Wq
                k = qkv_b[:, D + hd * dk:D + (hd + 1) * dk]
                v = qkv_b[:, 2 * D + hd * dk:2 * D + (hd + 1) * dk]
                s = jnp.dot(q, k.T, preferred_element_type=jnp.float32) + bias_b  # (S, S)
                m = jnp.max(s, axis=-1, keepdims=True)
                e = jnp.exp(s - m)
                # Row reciprocal instead of per-element divide (EUP path).
                # approx=False keeps the reference 1e-4 tolerance; flip to
                # approx=True if a looser tolerance is acceptable.
                p = e * pl.reciprocal(jnp.sum(e, axis=-1, keepdims=True), approx=False)
                o = jnp.dot(p, v, preferred_element_type=jnp.float32)          # (S, dk)
                # Fold output projection into the head loop -> no head concat.
                acc = acc + jnp.dot(o, w_o[hd * dk:(hd + 1) * dk, :],
                                    preferred_element_type=jnp.float32)
            attn_slabs.append(acc)
        # Sublane-aligned stack over the (static, tiny) batch dimension.
        attn = jnp.concatenate(attn_slabs, axis=0)               # (B*S, D)
        x = x + attn + bo                                        # residual (dropout = identity)

        # ---- sublayer 2: x + FeedForward(LayerNorm(x)) ----
        h2 = _layernorm(x, ln2a, ln2b)
        f = jnp.maximum(jnp.dot(h2, w1, preferred_element_type=jnp.float32) + b1, 0.0)
        x = x + jnp.dot(f, w2, preferred_element_type=jnp.float32) + b2

    # final LayerNorm
    out_ref[...] = _layernorm(x, norm_a, norm_b)


# ---------------------------------------------------------------------------
# Wrapper: parameter packing + single pallas_call
# ---------------------------------------------------------------------------
def pack_params(params):
    p = params["layer"]
    dk = D_MODEL // N_HEADS
    scale = 1.0 / math.sqrt(dk)
    # Fold the attention scale into Wq / bq; pack q/k/v/o weights lane-dense.
    w_qkvo = jnp.concatenate([p["wq"] * scale, p["wk"], p["wv"], p["wo"]], axis=1)  # (D, 4D)
    b_qkv = jnp.concatenate([p["bq"] * scale, p["bk"], p["bv"]], axis=1)            # (1, 3D)
    vecs = jnp.concatenate([p["bo"], p["b2"],
                            p["ln1a"], p["ln1b"], p["ln2a"], p["ln2b"],
                            params["norm_a"], params["norm_b"]], axis=0)            # (8, D)
    return w_qkvo, b_qkv, vecs, p["w1"], p["b1"], p["w2"]


@jax.jit
def encoder_forward(x, mask, params):
    B, S, Dm = x.shape
    w_qkvo, b_qkv, vecs, w1, b1, w2 = pack_params(params)

    x2 = x.reshape(B * S, Dm)                                         # row-flattened activations
    bias = jnp.where(mask == 0.0, jnp.float32(-1e9), jnp.float32(0.0))  # (B, S) additive mask

    vmem = pl.BlockSpec(memory_space=pltpu.MemorySpace.VMEM)          # whole-array VMEM blocks
    out2 = pl.pallas_call(
        functools.partial(encoder_kernel, batch=B, seq=S),
        out_shape=jax.ShapeDtypeStruct((B * S, Dm), jnp.float32),
        in_specs=[vmem] * 8,
        out_specs=vmem,
    )(x2, bias, w_qkvo, b_qkv, vecs, w1, b1, w2)
    return out2.reshape(B, S, Dm)


# ---------------------------------------------------------------------------
# Deterministic parameter init + pure-JAX reference
# ---------------------------------------------------------------------------
def init_params(key):
    ks = jax.random.split(key, 6)

    def lin(k, din, dout):
        kw, kb = jax.random.split(k)
        bound = 1.0 / math.sqrt(din)
        w = jax.random.uniform(kw, (din, dout), jnp.float32, -bound, bound)
        b = jax.random.uniform(kb, (1, dout), jnp.float32, -bound, bound)
        return w, b

    wq, bq = lin(ks[0], D_MODEL, D_MODEL)
    wk, bk = lin(ks[1], D_MODEL, D_MODEL)
    wv, bv = lin(ks[2], D_MODEL, D_MODEL)
    wo, bo = lin(ks[3], D_MODEL, D_MODEL)
    w1, b1 = lin(ks[4], D_MODEL, D_FF)
    w2, b2 = lin(ks[5], D_FF, D_MODEL)
    layer = dict(
        wq=wq, bq=bq, wk=wk, bk=bk, wv=wv, bv=bv, wo=wo, bo=bo,
        ln1a=jnp.ones((1, D_MODEL), jnp.float32),
        ln1b=jnp.zeros((1, D_MODEL), jnp.float32),
        ln2a=jnp.ones((1, D_MODEL), jnp.float32),
        ln2b=jnp.zeros((1, D_MODEL), jnp.float32),
        w1=w1, b1=b1, w2=w2, b2=b2,
    )
    return dict(layer=layer,
                norm_a=jnp.ones((1, D_MODEL), jnp.float32),
                norm_b=jnp.zeros((1, D_MODEL), jnp.float32))


def encoder_forward_ref(x, mask, params):
    p = params["layer"]
    B, S, D = x.shape
    H, dk = N_HEADS, D // N_HEADS
    m = mask[:, None, None, :]                       # (B,1,1,S)
    for _ in range(N_LAYERS):
        h = _layernorm(x, p["ln1a"], p["ln1b"])
        q = h @ p["wq"] + p["bq"]
        k = h @ p["wk"] + p["bk"]
        v = h @ p["wv"] + p["bv"]
        split = lambda t: t.reshape(B, S, H, dk).transpose(0, 2, 1, 3)
        qh, kh, vh = split(q), split(k), split(v)
        scores = jnp.einsum("bhqd,bhkd->bhqk", qh, kh) / math.sqrt(dk)
        scores = jnp.where(m == 0.0, -1e9, scores)
        pattn = jax.nn.softmax(scores, axis=-1)
        o = jnp.einsum("bhqk,bhkd->bhqd", pattn, vh)
        o = o.transpose(0, 2, 1, 3).reshape(B, S, D)
        x = x + (o @ p["wo"] + p["bo"])
        h2 = _layernorm(x, p["ln2a"], p["ln2b"])
        f = jnp.maximum(h2 @ p["w1"] + p["b1"], 0.0)
        x = x + (f @ p["w2"] + p["b2"])
    return _layernorm(x, params["norm_a"], params["norm_b"])


if __name__ == "__main__":
    key = jax.random.PRNGKey(0)
    kx, kp = jax.random.split(key)
    B, S = 2, 8
    x = jax.random.normal(kx, (B, S, D_MODEL), jnp.float32)
    # mask: 1 = attend, 0 = padding; mask out last 2 key positions of batch 1
    mask = jnp.ones((B, S), jnp.float32).at[1, -2:].set(0.0)
    params = init_params(kp)

    out = jax.block_until_ready(encoder_forward(x, mask, params))

    ref = encoder_forward_ref(x, mask, params)
    assert out.shape == (B, S, D_MODEL) and out.dtype == jnp.float32
    assert jnp.allclose(out, ref, atol=1e-4, rtol=1e-4), float(jnp.max(jnp.abs(out - ref)))
    print("KERNEL_OK")
</pallas_src>

<mosaic_0001>
module attributes {stable_mosaic.version = 11 : i64} {
  func.func @encoder_kernel(%arg0: memref<16x32xf32, #tpu.memory_space<vmem>>, %arg1: memref<2x8xf32, #tpu.memory_space<vmem>>, %arg2: memref<32x128xf32, #tpu.memory_space<vmem>>, %arg3: memref<1x96xf32, #tpu.memory_space<vmem>>, %arg4: memref<8x32xf32, #tpu.memory_space<vmem>>, %arg5: memref<32x64xf32, #tpu.memory_space<vmem>>, %arg6: memref<1x64xf32, #tpu.memory_space<vmem>>, %arg7: memref<64x32xf32, #tpu.memory_space<vmem>>, %arg8: memref<16x32xf32, #tpu.memory_space<vmem>>) attributes {dimension_semantics = [], scalar_prefetch = 0 : i64, scratch_operands = 0 : i64, tpu.core_type = #tpu.core_type<tc>} {
    %c0 = arith.constant 0 : index
    %c0_0 = arith.constant 0 : index
    %0 = vector.load %arg0[%c0, %c0_0] : memref<16x32xf32, #tpu.memory_space<vmem>>, vector<16x32xf32>
    %c0_1 = arith.constant 0 : index
    %c0_2 = arith.constant 0 : index
    %1 = vector.load %arg1[%c0_1, %c0_2] : memref<2x8xf32, #tpu.memory_space<vmem>>, vector<2x8xf32>
    %c0_3 = arith.constant 0 : index
    %c0_4 = arith.constant 0 : index
    %2 = vector.load %arg2[%c0_3, %c0_4] : memref<32x128xf32, #tpu.memory_space<vmem>>, vector<32x128xf32>
    %3 = vector.extract_strided_slice %2 {offsets = [0, 0], sizes = [32, 96], strides = [1, 1]} : vector<32x128xf32> to vector<32x96xf32>
    %4 = vector.extract_strided_slice %2 {offsets = [0, 96], sizes = [32, 32], strides = [1, 1]} : vector<32x128xf32> to vector<32x32xf32>
    %c0_5 = arith.constant 0 : index
    %c0_6 = arith.constant 0 : index
    %5 = vector.load %arg3[%c0_5, %c0_6] : memref<1x96xf32, #tpu.memory_space<vmem>>, vector<1x96xf32>
    %c0_7 = arith.constant 0 : index
    %c0_8 = arith.constant 0 : index
    %6 = vector.load %arg4[%c0_7, %c0_8] : memref<8x32xf32, #tpu.memory_space<vmem>>, vector<8x32xf32>
    %7 = vector.extract_strided_slice %6 {offsets = [0, 0], sizes = [1, 32], strides = [1, 1]} : vector<8x32xf32> to vector<1x32xf32>
    %8 = vector.extract_strided_slice %6 {offsets = [1, 0], sizes = [1, 32], strides = [1, 1]} : vector<8x32xf32> to vector<1x32xf32>
    %9 = vector.extract_strided_slice %6 {offsets = [2, 0], sizes = [1, 32], strides = [1, 1]} : vector<8x32xf32> to vector<1x32xf32>
    %10 = vector.extract_strided_slice %6 {offsets = [3, 0], sizes = [1, 32], strides = [1, 1]} : vector<8x32xf32> to vector<1x32xf32>
    %11 = vector.extract_strided_slice %6 {offsets = [4, 0], sizes = [1, 32], strides = [1, 1]} : vector<8x32xf32> to vector<1x32xf32>
    %12 = vector.extract_strided_slice %6 {offsets = [5, 0], sizes = [1, 32], strides = [1, 1]} : vector<8x32xf32> to vector<1x32xf32>
    %13 = vector.extract_strided_slice %6 {offsets = [6, 0], sizes = [1, 32], strides = [1, 1]} : vector<8x32xf32> to vector<1x32xf32>
    %14 = vector.extract_strided_slice %6 {offsets = [7, 0], sizes = [1, 32], strides = [1, 1]} : vector<8x32xf32> to vector<1x32xf32>
    %c0_9 = arith.constant 0 : index
    %c0_10 = arith.constant 0 : index
    %15 = vector.load %arg5[%c0_9, %c0_10] : memref<32x64xf32, #tpu.memory_space<vmem>>, vector<32x64xf32>
    %c0_11 = arith.constant 0 : index
    %c0_12 = arith.constant 0 : index
    %16 = vector.load %arg6[%c0_11, %c0_12] : memref<1x64xf32, #tpu.memory_space<vmem>>, vector<1x64xf32>
    %c0_13 = arith.constant 0 : index
    %c0_14 = arith.constant 0 : index
    %17 = vector.load %arg7[%c0_13, %c0_14] : memref<64x32xf32, #tpu.memory_space<vmem>>, vector<64x32xf32>
    %cst = arith.constant dense<0.000000e+00> : vector<16xf32>
    %18 = vector.multi_reduction <add>, %0, %cst [1] : vector<16x32xf32> to vector<16xf32>
    %19 = vector.shape_cast %18 : vector<16xf32> to vector<16x1xf32>
    %cst_15 = arith.constant 3.200000e+01 : f32
    %20 = vector.broadcast %cst_15 : f32 to vector<16x1xf32>
    %21 = arith.divf %19, %20 : vector<16x1xf32>
    %22 = vector.broadcast %21 : vector<16x1xf32> to vector<16x32xf32>
    %23 = arith.subf %0, %22 : vector<16x32xf32>
    %24 = arith.mulf %23, %23 : vector<16x32xf32>
    %cst_16 = arith.constant dense<0.000000e+00> : vector<16xf32>
    %25 = vector.multi_reduction <add>, %24, %cst_16 [1] : vector<16x32xf32> to vector<16xf32>
    %26 = vector.shape_cast %25 : vector<16xf32> to vector<16x1xf32>
    %cst_17 = arith.constant 3.100000e+01 : f32
    %27 = vector.broadcast %cst_17 : f32 to vector<16x1xf32>
    %28 = arith.divf %26, %27 : vector<16x1xf32>
    %29 = math.sqrt %28 : vector<16x1xf32>
    %30 = vector.broadcast %21 : vector<16x1xf32> to vector<16x32xf32>
    %31 = arith.subf %0, %30 : vector<16x32xf32>
    %32 = vector.broadcast %9 : vector<1x32xf32> to vector<16x32xf32>
    %33 = arith.mulf %32, %31 : vector<16x32xf32>
    %cst_18 = arith.constant 9.99999997E-7 : f32
    %34 = vector.broadcast %cst_18 : f32 to vector<16x1xf32>
    %35 = arith.addf %29, %34 : vector<16x1xf32>
    %36 = vector.broadcast %35 : vector<16x1xf32> to vector<16x32xf32>
    %37 = arith.divf %33, %36 : vector<16x32xf32>
    %38 = vector.broadcast %10 : vector<1x32xf32> to vector<16x32xf32>
    %39 = arith.addf %37, %38 : vector<16x32xf32>
    %cst_19 = arith.constant dense<0.000000e+00> : vector<16x96xf32>
    %40 = tpu.matmul %39, %3, %cst_19 {dimension_numbers = #tpu.dot_dimension_numbers<[1], [0], [0], [1], [0, 0, 1, 1], [], []>} : vector<16x32xf32>, vector<32x96xf32>, vector<16x96xf32> -> vector<16x96xf32>
    %41 = vector.broadcast %5 : vector<1x96xf32> to vector<16x96xf32>
    %42 = arith.addf %40, %41 : vector<16x96xf32>
    %43 = vector.extract_strided_slice %42 {offsets = [0, 0], sizes = [8, 96], strides = [1, 1]} : vector<16x96xf32> to vector<8x96xf32>
    %44 = vector.extract_strided_slice %1 {offsets = [0, 0], sizes = [1, 8], strides = [1, 1]} : vector<2x8xf32> to vector<1x8xf32>
    %cst_20 = arith.constant 0.000000e+00 : f32
    %45 = vector.broadcast %cst_20 : f32 to vector<8x32xf32>
    %46 = vector.extract_strided_slice %43 {offsets = [0, 0], sizes = [8, 8], strides = [1, 1]} : vector<8x96xf32> to vector<8x8xf32>
    %47 = vector.extract_strided_slice %43 {offsets = [0, 32], sizes = [8, 8], strides = [1, 1]} : vector<8x96xf32> to vector<8x8xf32>
    %48 = vector.extract_strided_slice %43 {offsets = [0, 64], sizes = [8, 8], strides = [1, 1]} : vector<8x96xf32> to vector<8x8xf32>
    %49 = tpu.transpose %47, [1, 0] : vector<8x8xf32> -> vector<8x8xf32>
    %cst_21 = arith.constant dense<0.000000e+00> : vector<8x8xf32>
    %50 = tpu.matmul %46, %49, %cst_21 {dimension_numbers = #tpu.dot_dimension_numbers<[1], [0], [0], [1], [0, 0, 1, 1], [], []>} : vector<8x8xf32>, vector<8x8xf32>, vector<8x8xf32> -> vector<8x8xf32>
    %51 = vector.broadcast %44 : vector<1x8xf32> to vector<8x8xf32>
    %52 = arith.addf %50, %51 : vector<8x8xf32>
    %cst_22 = arith.constant dense<0xFF800000> : vector<8xf32>
    %53 = vector.multi_reduction <maximumf>, %52, %cst_22 [1] : vector<8x8xf32> to vector<8xf32>
    %54 = vector.shape_cast %53 : vector<8xf32> to vector<8x1xf32>
    %55 = vector.broadcast %54 : vector<8x1xf32> to vector<8x8xf32>
    %56 = arith.subf %52, %55 : vector<8x8xf32>
    %57 = math.exp %56 : vector<8x8xf32>
    %cst_23 = arith.constant dense<0.000000e+00> : vector<8xf32>
    %58 = vector.multi_reduction <add>, %57, %cst_23 [1] : vector<8x8xf32> to vector<8xf32>
    %59 = vector.shape_cast %58 : vector<8xf32> to vector<8x1xf32>
    %60 = tpu.reciprocal %59 : vector<8x1xf32> -> vector<8x1xf32>
    %61 = vector.broadcast %60 : vector<8x1xf32> to vector<8x8xf32>
    %62 = arith.mulf %57, %61 : vector<8x8xf32>
    %cst_24 = arith.constant dense<0.000000e+00> : vector<8x8xf32>
    %63 = tpu.matmul %62, %48, %cst_24 {dimension_numbers = #tpu.dot_dimension_numbers<[1], [0], [0], [1], [0, 0, 1, 1], [], []>} : vector<8x8xf32>, vector<8x8xf32>, vector<8x8xf32> -> vector<8x8xf32>
    %64 = vector.extract_strided_slice %4 {offsets = [0, 0], sizes = [8, 32], strides = [1, 1]} : vector<32x32xf32> to vector<8x32xf32>
    %cst_25 = arith.constant dense<0.000000e+00> : vector<8x32xf32>
    %65 = tpu.matmul %63, %64, %cst_25 {dimension_numbers = #tpu.dot_dimension_numbers<[1], [0], [0], [1], [0, 0, 1, 1], [], []>} : vector<8x8xf32>, vector<8x32xf32>, vector<8x32xf32> -> vector<8x32xf32>
    %66 = arith.addf %45, %65 : vector<8x32xf32>
    %67 = vector.extract_strided_slice %43 {offsets = [0, 8], sizes = [8, 8], strides = [1, 1]} : vector<8x96xf32> to vector<8x8xf32>
    %68 = vector.extract_strided_slice %43 {offsets = [0, 40], sizes = [8, 8], strides = [1, 1]} : vector<8x96xf32> to vector<8x8xf32>
    %69 = vector.extract_strided_slice %43 {offsets = [0, 72], sizes = [8, 8], strides = [1, 1]} : vector<8x96xf32> to vector<8x8xf32>
    %70 = tpu.transpose %68, [1, 0] : vector<8x8xf32> -> vector<8x8xf32>
    %cst_26 = arith.constant dense<0.000000e+00> : vector<8x8xf32>
    %71 = tpu.matmul %67, %70, %cst_26 {dimension_numbers = #tpu.dot_dimension_numbers<[1], [0], [0], [1], [0, 0, 1, 1], [], []>} : vector<8x8xf32>, vector<8x8xf32>, vector<8x8xf32> -> vector<8x8xf32>
    %72 = vector.broadcast %44 : vector<1x8xf32> to vector<8x8xf32>
    %73 = arith.addf %71, %72 : vector<8x8xf32>
    %cst_27 = arith.constant dense<0xFF800000> : vector<8xf32>
    %74 = vector.multi_reduction <maximumf>, %73, %cst_27 [1] : vector<8x8xf32> to vector<8xf32>
    %75 = vector.shape_cast %74 : vector<8xf32> to vector<8x1xf32>
    %76 = vector.broadcast %75 : vector<8x1xf32> to vector<8x8xf32>
    %77 = arith.subf %73, %76 : vector<8x8xf32>
    %78 = math.exp %77 : vector<8x8xf32>
    %cst_28 = arith.constant dense<0.000000e+00> : vector<8xf32>
    %79 = vector.multi_reduction <add>, %78, %cst_28 [1] : vector<8x8xf32> to vector<8xf32>
    %80 = vector.shape_cast %79 : vector<8xf32> to vector<8x1xf32>
    %81 = tpu.reciprocal %80 : vector<8x1xf32> -> vector<8x1xf32>
    %82 = vector.broadcast %81 : vector<8x1xf32> to vector<8x8xf32>
    %83 = arith.mulf %78, %82 : vector<8x8xf32>
    %cst_29 = arith.constant dense<0.000000e+00> : vector<8x8xf32>
    %84 = tpu.matmul %83, %69, %cst_29 {dimension_numbers = #tpu.dot_dimension_numbers<[1], [0], [0], [1], [0, 0, 1, 1], [], []>} : vector<8x8xf32>, vector<8x8xf32>, vector<8x8xf32> -> vector<8x8xf32>
    %85 = vector.extract_strided_slice %4 {offsets = [8, 0], sizes = [8, 32], strides = [1, 1]} : vector<32x32xf32> to vector<8x32xf32>
    %cst_30 = arith.constant dense<0.000000e+00> : vector<8x32xf32>
    %86 = tpu.matmul %84, %85, %cst_30 {dimension_numbers = #tpu.dot_dimension_numbers<[1], [0], [0], [1], [0, 0, 1, 1], [], []>} : vector<8x8xf32>, vector<8x32xf32>, vector<8x32xf32> -> vector<8x32xf32>
    %87 = arith.addf %66, %86 : vector<8x32xf32>
    %88 = vector.extract_strided_slice %43 {offsets = [0, 16], sizes = [8, 8], strides = [1, 1]} : vector<8x96xf32> to vector<8x8xf32>
    %89 = vector.extract_strided_slice %43 {offsets = [0, 48], sizes = [8, 8], strides = [1, 1]} : vector<8x96xf32> to vector<8x8xf32>
    %90 = vector.extract_strided_slice %43 {offsets = [0, 80], sizes = [8, 8], strides = [1, 1]} : vector<8x96xf32> to vector<8x8xf32>
    %91 = tpu.transpose %89, [1, 0] : vector<8x8xf32> -> vector<8x8xf32>
    %cst_31 = arith.constant dense<0.000000e+00> : vector<8x8xf32>
    %92 = tpu.matmul %88, %91, %cst_31 {dimension_numbers = #tpu.dot_dimension_numbers<[1], [0], [0], [1], [0, 0, 1, 1], [], []>} : vector<8x8xf32>, vector<8x8xf32>, vector<8x8xf32> -> vector<8x8xf32>
    %93 = vector.broadcast %44 : vector<1x8xf32> to vector<8x8xf32>
    %94 = arith.addf %92, %93 : vector<8x8xf32>
    %cst_32 = arith.constant dense<0xFF800000> : vector<8xf32>
    %95 = vector.multi_reduction <maximumf>, %94, %cst_32 [1] : vector<8x8xf32> to vector<8xf32>
    %96 = vector.shape_cast %95 : vector<8xf32> to vector<8x1xf32>
    %97 = vector.broadcast %96 : vector<8x1xf32> to vector<8x8xf32>
    %98 = arith.subf %94, %97 : vector<8x8xf32>
    %99 = math.exp %98 : vector<8x8xf32>
    %cst_33 = arith.constant dense<0.000000e+00> : vector<8xf32>
    %100 = vector.multi_reduction <add>, %99, %cst_33 [1] : vector<8x8xf32> to vector<8xf32>
    %101 = vector.shape_cast %100 : vector<8xf32> to vector<8x1xf32>
    %102 = tpu.reciprocal %101 : vector<8x1xf32> -> vector<8x1xf32>
    %103 = vector.broadcast %102 : vector<8x1xf32> to vector<8x8xf32>
    %104 = arith.mulf %99, %103 : vector<8x8xf32>
    %cst_34 = arith.constant dense<0.000000e+00> : vector<8x8xf32>
    %105 = tpu.matmul %104, %90, %cst_34 {dimension_numbers = #tpu.dot_dimension_numbers<[1], [0], [0], [1], [0, 0, 1, 1], [], []>} : vector<8x8xf32>, vector<8x8xf32>, vector<8x8xf32> -> vector<8x8xf32>
    %106 = vector.extract_strided_slice %4 {offsets = [16, 0], sizes = [8, 32], strides = [1, 1]} : vector<32x32xf32> to vector<8x32xf32>
    %cst_35 = arith.constant dense<0.000000e+00> : vector<8x32xf32>
    %107 = tpu.matmul %105, %106, %cst_35 {dimension_numbers = #tpu.dot_dimension_numbers<[1], [0], [0], [1], [0, 0, 1, 1], [], []>} : vector<8x8xf32>, vector<8x32xf32>, vector<8x32xf32> -> vector<8x32xf32>
    %108 = arith.addf %87, %107 : vector<8x32xf32>
    %109 = vector.extract_strided_slice %43 {offsets = [0, 24], sizes = [8, 8], strides = [1, 1]} : vector<8x96xf32> to vector<8x8xf32>
    %110 = vector.extract_strided_slice %43 {offsets = [0, 56], sizes = [8, 8], strides = [1, 1]} : vector<8x96xf32> to vector<8x8xf32>
    %111 = vector.extract_strided_slice %43 {offsets = [0, 88], sizes = [8, 8], strides = [1, 1]} : vector<8x96xf32> to vector<8x8xf32>
    %112 = tpu.transpose %110, [1, 0] : vector<8x8xf32> -> vector<8x8xf32>
    %cst_36 = arith.constant dense<0.000000e+00> : vector<8x8xf32>
    %113 = tpu.matmul %109, %112, %cst_36 {dimension_numbers = #tpu.dot_dimension_numbers<[1], [0], [0], [1], [0, 0, 1, 1], [], []>} : vector<8x8xf32>, vector<8x8xf32>, vector<8x8xf32> -> vector<8x8xf32>
    %114 = vector.broadcast %44 : vector<1x8xf32> to vector<8x8xf32>
    %115 = arith.addf %113, %114 : vector<8x8xf32>
    %cst_37 = arith.constant dense<0xFF800000> : vector<8xf32>
    %116 = vector.multi_reduction <maximumf>, %115, %cst_37 [1] : vector<8x8xf32> to vector<8xf32>
    %117 = vector.shape_cast %116 : vector<8xf32> to vector<8x1xf32>
    %118 = vector.broadcast %117 : vector<8x1xf32> to vector<8x8xf32>
    %119 = arith.subf %115, %118 : vector<8x8xf32>
    %120 = math.exp %119 : vector<8x8xf32>
    %cst_38 = arith.constant dense<0.000000e+00> : vector<8xf32>
    %121 = vector.multi_reduction <add>, %120, %cst_38 [1] : vector<8x8xf32> to vector<8xf32>
    %122 = vector.shape_cast %121 : vector<8xf32> to vector<8x1xf32>
    %123 = tpu.reciprocal %122 : vector<8x1xf32> -> vector<8x1xf32>
    %124 = vector.broadcast %123 : vector<8x1xf32> to vector<8x8xf32>
    %125 = arith.mulf %120, %124 : vector<8x8xf32>
    %cst_39 = arith.constant dense<0.000000e+00> : vector<8x8xf32>
    %126 = tpu.matmul %125, %111, %cst_39 {dimension_numbers = #tpu.dot_dimension_numbers<[1], [0], [0], [1], [0, 0, 1, 1], [], []>} : vector<8x8xf32>, vector<8x8xf32>, vector<8x8xf32> -> vector<8x8xf32>
    %127 = vector.extract_strided_slice %4 {offsets = [24, 0], sizes = [8, 32], strides = [1, 1]} : vector<32x32xf32> to vector<8x32xf32>
    %cst_40 = arith.constant dense<0.000000e+00> : vector<8x32xf32>
    %128 = tpu.matmul %126, %127, %cst_40 {dimension_numbers = #tpu.dot_dimension_numbers<[1], [0], [0], [1], [0, 0, 1, 1], [], []>} : vector<8x8xf32>, vector<8x32xf32>, vector<8x32xf32> -> vector<8x32xf32>
    %129 = arith.addf %108, %128 : vector<8x32xf32>
    %130 = vector.extract_strided_slice %42 {offsets = [8, 0], sizes = [8, 96], strides = [1, 1]} : vector<16x96xf32> to vector<8x96xf32>
    %131 = vector.extract_strided_slice %1 {offsets = [1, 0], sizes = [1, 8], strides = [1, 1]} : vector<2x8xf32> to vector<1x8xf32>
    %cst_41 = arith.constant 0.000000e+00 : f32
    %132 = vector.broadcast %cst_41 : f32 to vector<8x32xf32>
    %133 = vector.extract_strided_slice %130 {offsets = [0, 0], sizes = [8, 8], strides = [1, 1]} : vector<8x96xf32> to vector<8x8xf32>
    %134 = vector.extract_strided_slice %130 {offsets = [0, 32], sizes = [8, 8], strides = [1, 1]} : vector<8x96xf32> to vector<8x8xf32>
    %135 = vector.extract_strided_slice %130 {offsets = [0, 64], sizes = [8, 8], strides = [1, 1]} : vector<8x96xf32> to vector<8x8xf32>
    %136 = tpu.transpose %134, [1, 0] : vector<8x8xf32> -> vector<8x8xf32>
    %cst_42 = arith.constant dense<0.000000e+00> : vector<8x8xf32>
    %137 = tpu.matmul %133, %136, %cst_42 {dimension_numbers = #tpu.dot_dimension_numbers<[1], [0], [0], [1], [0, 0, 1, 1], [], []>} : vector<8x8xf32>, vector<8x8xf32>, vector<8x8xf32> -> vector<8x8xf32>
    %138 = vector.broadcast %131 : vector<1x8xf32> to vector<8x8xf32>
    %139 = arith.addf %137, %138 : vector<8x8xf32>
    %cst_43 = arith.constant dense<0xFF800000> : vector<8xf32>
    %140 = vector.multi_reduction <maximumf>, %139, %cst_43 [1] : vector<8x8xf32> to vector<8xf32>
    %141 = vector.shape_cast %140 : vector<8xf32> to vector<8x1xf32>
    %142 = vector.broadcast %141 : vector<8x1xf32> to vector<8x8xf32>
    %143 = arith.subf %139, %142 : vector<8x8xf32>
    %144 = math.exp %143 : vector<8x8xf32>
    %cst_44 = arith.constant dense<0.000000e+00> : vector<8xf32>
    %145 = vector.multi_reduction <add>, %144, %cst_44 [1] : vector<8x8xf32> to vector<8xf32>
    %146 = vector.shape_cast %145 : vector<8xf32> to vector<8x1xf32>
    %147 = tpu.reciprocal %146 : vector<8x1xf32> -> vector<8x1xf32>
    %148 = vector.broadcast %147 : vector<8x1xf32> to vector<8x8xf32>
    %149 = arith.mulf %144, %148 : vector<8x8xf32>
    %cst_45 = arith.constant dense<0.000000e+00> : vector<8x8xf32>
    %150 = tpu.matmul %149, %135, %cst_45 {dimension_numbers = #tpu.dot_dimension_numbers<[1], [0], [0], [1], [0, 0, 1, 1], [], []>} : vector<8x8xf32>, vector<8x8xf32>, vector<8x8xf32> -> vector<8x8xf32>
    %151 = vector.extract_strided_slice %4 {offsets = [0, 0], sizes = [8, 32], strides = [1, 1]} : vector<32x32xf32> to vector<8x32xf32>
    %cst_46 = arith.constant dense<0.000000e+00> : vector<8x32xf32>
    %152 = tpu.matmul %150, %151, %cst_46 {dimension_numbers = #tpu.dot_dimension_numbers<[1], [0], [0], [1], [0, 0, 1, 1], [], []>} : vector<8x8xf32>, vector<8x32xf32>, vector<8x32xf32> -> vector<8x32xf32>
    %153 = arith.addf %132, %152 : vector<8x32xf32>
    %154 = vector.extract_strided_slice %130 {offsets = [0, 8], sizes = [8, 8], strides = [1, 1]} : vector<8x96xf32> to vector<8x8xf32>
    %155 = vector.extract_strided_slice %130 {offsets = [0, 40], sizes = [8, 8], strides = [1, 1]} : vector<8x96xf32> to vector<8x8xf32>
    %156 = vector.extract_strided_slice %130 {offsets = [0, 72], sizes = [8, 8], strides = [1, 1]} : vector<8x96xf32> to vector<8x8xf32>
    %157 = tpu.transpose %155, [1, 0] : vector<8x8xf32> -> vector<8x8xf32>
    %cst_47 = arith.constant dense<0.000000e+00> : vector<8x8xf32>
    %158 = tpu.matmul %154, %157, %cst_47 {dimension_numbers = #tpu.dot_dimension_numbers<[1], [0], [0], [1], [0, 0, 1, 1], [], []>} : vector<8x8xf32>, vector<8x8xf32>, vector<8x8xf32> -> vector<8x8xf32>
    %159 = vector.broadcast %131 : vector<1x8xf32> to vector<8x8xf32>
    %160 = arith.addf %158, %159 : vector<8x8xf32>
    %cst_48 = arith.constant dense<0xFF800000> : vector<8xf32>
    %161 = vector.multi_reduction <maximumf>, %160, %cst_48 [1] : vector<8x8xf32> to vector<8xf32>
    %162 = vector.shape_cast %161 : vector<8xf32> to vector<8x1xf32>
    %163 = vector.broadcast %162 : vector<8x1xf32> to vector<8x8xf32>
    %164 = arith.subf %160, %163 : vector<8x8xf32>
    %165 = math.exp %164 : vector<8x8xf32>
    %cst_49 = arith.constant dense<0.000000e+00> : vector<8xf32>
    %166 = vector.multi_reduction <add>, %165, %cst_49 [1] : vector<8x8xf32> to vector<8xf32>
    %167 = vector.shape_cast %166 : vector<8xf32> to vector<8x1xf32>
    %168 = tpu.reciprocal %167 : vector<8x1xf32> -> vector<8x1xf32>
    %169 = vector.broadcast %168 : vector<8x1xf32> to vector<8x8xf32>
    %170 = arith.mulf %165, %169 : vector<8x8xf32>
    %cst_50 = arith.constant dense<0.000000e+00> : vector<8x8xf32>
    %171 = tpu.matmul %170, %156, %cst_50 {dimension_numbers = #tpu.dot_dimension_numbers<[1], [0], [0], [1], [0, 0, 1, 1], [], []>} : vector<8x8xf32>, vector<8x8xf32>, vector<8x8xf32> -> vector<8x8xf32>
    %172 = vector.extract_strided_slice %4 {offsets = [8, 0], sizes = [8, 32], strides = [1, 1]} : vector<32x32xf32> to vector<8x32xf32>
    %cst_51 = arith.constant dense<0.000000e+00> : vector<8x32xf32>
    %173 = tpu.matmul %171, %172, %cst_51 {dimension_numbers = #tpu.dot_dimension_numbers<[1], [0], [0], [1], [0, 0, 1, 1], [], []>} : vector<8x8xf32>, vector<8x32xf32>, vector<8x32xf32> -> vector<8x32xf32>
    %174 = arith.addf %153, %173 : vector<8x32xf32>
    %175 = vector.extract_strided_slice %130 {offsets = [0, 16], sizes = [8, 8], strides = [1, 1]} : vector<8x96xf32> to vector<8x8xf32>
    %176 = vector.extract_strided_slice %130 {offsets = [0, 48], sizes = [8, 8], strides = [1, 1]} : vector<8x96xf32> to vector<8x8xf32>
    %177 = vector.extract_strided_slice %130 {offsets = [0, 80], sizes = [8, 8], strides = [1, 1]} : vector<8x96xf32> to vector<8x8xf32>
    %178 = tpu.transpose %176, [1, 0] : vector<8x8xf32> -> vector<8x8xf32>
    %cst_52 = arith.constant dense<0.000000e+00> : vector<8x8xf32>
    %179 = tpu.matmul %175, %178, %cst_52 {dimension_numbers = #tpu.dot_dimension_numbers<[1], [0], [0], [1], [0, 0, 1, 1], [], []>} : vector<8x8xf32>, vector<8x8xf32>, vector<8x8xf32> -> vector<8x8xf32>
    %180 = vector.broadcast %131 : vector<1x8xf32> to vector<8x8xf32>
    %181 = arith.addf %179, %180 : vector<8x8xf32>
    %cst_53 = arith.constant dense<0xFF800000> : vector<8xf32>
    %182 = vector.multi_reduction <maximumf>, %181, %cst_53 [1] : vector<8x8xf32> to vector<8xf32>
    %183 = vector.shape_cast %182 : vector<8xf32> to vector<8x1xf32>
    %184 = vector.broadcast %183 : vector<8x1xf32> to vector<8x8xf32>
    %185 = arith.subf %181, %184 : vector<8x8xf32>
    %186 = math.exp %185 : vector<8x8xf32>
    %cst_54 = arith.constant dense<0.000000e+00> : vector<8xf32>
    %187 = vector.multi_reduction <add>, %186, %cst_54 [1] : vector<8x8xf32> to vector<8xf32>
    %188 = vector.shape_cast %187 : vector<8xf32> to vector<8x1xf32>
    %189 = tpu.reciprocal %188 : vector<8x1xf32> -> vector<8x1xf32>
    %190 = vector.broadcast %189 : vector<8x1xf32> to vector<8x8xf32>
    %191 = arith.mulf %186, %190 : vector<8x8xf32>
    %cst_55 = arith.constant dense<0.000000e+00> : vector<8x8xf32>
    %192 = tpu.matmul %191, %177, %cst_55 {dimension_numbers = #tpu.dot_dimension_numbers<[1], [0], [0], [1], [0, 0, 1, 1], [], []>} : vector<8x8xf32>, vector<8x8xf32>, vector<8x8xf32> -> vector<8x8xf32>
    %193 = vector.extract_strided_slice %4 {offsets = [16, 0], sizes = [8, 32], strides = [1, 1]} : vector<32x32xf32> to vector<8x32xf32>
    %cst_56 = arith.constant dense<0.000000e+00> : vector<8x32xf32>
    %194 = tpu.matmul %192, %193, %cst_56 {dimension_numbers = #tpu.dot_dimension_numbers<[1], [0], [0], [1], [0, 0, 1, 1], [], []>} : vector<8x8xf32>, vector<8x32xf32>, vector<8x32xf32> -> vector<8x32xf32>
    %195 = arith.addf %174, %194 : vector<8x32xf32>
    %196 = vector.extract_strided_slice %130 {offsets = [0, 24], sizes = [8, 8], strides = [1, 1]} : vector<8x96xf32> to vector<8x8xf32>
    %197 = vector.extract_strided_slice %130 {offsets = [0, 56], sizes = [8, 8], strides = [1, 1]} : vector<8x96xf32> to vector<8x8xf32>
    %198 = vector.extract_strided_slice %130 {offsets = [0, 88], sizes = [8, 8], strides = [1, 1]} : vector<8x96xf32> to vector<8x8xf32>
    %199 = tpu.transpose %197, [1, 0] : vector<8x8xf32> -> vector<8x8xf32>
    %cst_57 = arith.constant dense<0.000000e+00> : vector<8x8xf32>
    %200 = tpu.matmul %196, %199, %cst_57 {dimension_numbers = #tpu.dot_dimension_numbers<[1], [0], [0], [1], [0, 0, 1, 1], [], []>} : vector<8x8xf32>, vector<8x8xf32>, vector<8x8xf32> -> vector<8x8xf32>
    %201 = vector.broadcast %131 : vector<1x8xf32> to vector<8x8xf32>
    %202 = arith.addf %200, %201 : vector<8x8xf32>
    %cst_58 = arith.constant dense<0xFF800000> : vector<8xf32>
    %203 = vector.multi_reduction <maximumf>, %202, %cst_58 [1] : vector<8x8xf32> to vector<8xf32>
    %204 = vector.shape_cast %203 : vector<8xf32> to vector<8x1xf32>
    %205 = vector.broadcast %204 : vector<8x1xf32> to vector<8x8xf32>
    %206 = arith.subf %202, %205 : vector<8x8xf32>
    %207 = math.exp %206 : vector<8x8xf32>
    %cst_59 = arith.constant dense<0.000000e+00> : vector<8xf32>
    %208 = vector.multi_reduction <add>, %207, %cst_59 [1] : vector<8x8xf32> to vector<8xf32>
    %209 = vector.shape_cast %208 : vector<8xf32> to vector<8x1xf32>
    %210 = tpu.reciprocal %209 : vector<8x1xf32> -> vector<8x1xf32>
    %211 = vector.broadcast %210 : vector<8x1xf32> to vector<8x8xf32>
    %212 = arith.mulf %207, %211 : vector<8x8xf32>
    %cst_60 = arith.constant dense<0.000000e+00> : vector<8x8xf32>
    %213 = tpu.matmul %212, %198, %cst_60 {dimension_numbers = #tpu.dot_dimension_numbers<[1], [0], [0], [1], [0, 0, 1, 1], [], []>} : vector<8x8xf32>, vector<8x8xf32>, vector<8x8xf32> -> vector<8x8xf32>
    %214 = vector.extract_strided_slice %4 {offsets = [24, 0], sizes = [8, 32], strides = [1, 1]} : vector<32x32xf32> to vector<8x32xf32>
    %cst_61 = arith.constant dense<0.000000e+00> : vector<8x32xf32>
    %215 = tpu.matmul %213, %214, %cst_61 {dimension_numbers = #tpu.dot_dimension_numbers<[1], [0], [0], [1], [0, 0, 1, 1], [], []>} : vector<8x8xf32>, vector<8x32xf32>, vector<8x32xf32> -> vector<8x32xf32>
    %216 = arith.addf %195, %215 : vector<8x32xf32>
    %217 = tpu.concatenate %129, %216 in 0 : vector<8x32xf32>, vector<8x32xf32> -> vector<16x32xf32>
    %218 = arith.addf %0, %217 : vector<16x32xf32>
    %219 = vector.broadcast %7 : vector<1x32xf32> to vector<16x32xf32>
    %220 = arith.addf %218, %219 : vector<16x32xf32>
    %cst_62 = arith.constant dense<0.000000e+00> : vector<16xf32>
    %221 = vector.multi_reduction <add>, %220, %cst_62 [1] : vector<16x32xf32> to vector<16xf32>
    %222 = vector.shape_cast %221 : vector<16xf32> to vector<16x1xf32>
    %cst_63 = arith.constant 3.200000e+01 : f32
    %223 = vector.broadcast %cst_63 : f32 to vector<16x1xf32>
    %224 = arith.divf %222, %223 : vector<16x1xf32>
    %225 = vector.broadcast %224 : vector<16x1xf32> to vector<16x32xf32>
    %226 = arith.subf %220, %225 : vector<16x32xf32>
    %227 = arith.mulf %226, %226 : vector<16x32xf32>
    %cst_64 = arith.constant dense<0.000000e+00> : vector<16xf32>
    %228 = vector.multi_reduction <add>, %227, %cst_64 [1] : vector<16x32xf32> to vector<16xf32>
    %229 = vector.shape_cast %228 : vector<16xf32> to vector<16x1xf32>
    %cst_65 = arith.constant 3.100000e+01 : f32
    %230 = vector.broadcast %cst_65 : f32 to vector<16x1xf32>
    %231 = arith.divf %229, %230 : vector<16x1xf32>
    %232 = math.sqrt %231 : vector<16x1xf32>
    %233 = vector.broadcast %224 : vector<16x1xf32> to vector<16x32xf32>
    %234 = arith.subf %220, %233 : vector<16x32xf32>
    %235 = vector.broadcast %11 : vector<1x32xf32> to vector<16x32xf32>
    %236 = arith.mulf %235, %234 : vector<16x32xf32>
    %cst_66 = arith.constant 9.99999997E-7 : f32
    %237 = vector.broadcast %cst_66 : f32 to vector<16x1xf32>
    %238 = arith.addf %232, %237 : vector<16x1xf32>
    %239 = vector.broadcast %238 : vector<16x1xf32> to vector<16x32xf32>
    %240 = arith.divf %236, %239 : vector<16x32xf32>
    %241 = vector.broadcast %12 : vector<1x32xf32> to vector<16x32xf32>
    %242 = arith.addf %240, %241 : vector<16x32xf32>
    %cst_67 = arith.constant dense<0.000000e+00> : vector<16x64xf32>
    %243 = tpu.matmul %242, %15, %cst_67 {dimension_numbers = #tpu.dot_dimension_numbers<[1], [0], [0], [1], [0, 0, 1, 1], [], []>} : vector<16x32xf32>, vector<32x64xf32>, vector<16x64xf32> -> vector<16x64xf32>
    %244 = vector.broadcast %16 : vector<1x64xf32> to vector<16x64xf32>
    %245 = arith.addf %243, %244 : vector<16x64xf32>
    %cst_68 = arith.constant 0.000000e+00 : f32
    %246 = vector.broadcast %cst_68 : f32 to vector<16x64xf32>
    %247 = arith.maximumf %245, %246 : vector<16x64xf32>
    %cst_69 = arith.constant dense<0.000000e+00> : vector<16x32xf32>
    %248 = tpu.matmul %247, %17, %cst_69 {dimension_numbers = #tpu.dot_dimension_numbers<[1], [0], [0], [1], [0, 0, 1, 1], [], []>} : vector<16x64xf32>, vector<64x32xf32>, vector<16x32xf32> -> vector<16x32xf32>
    %249 = arith.addf %220, %248 : vector<16x32xf32>
    %250 = vector.broadcast %8 : vector<1x32xf32> to vector<16x32xf32>
    %251 = arith.addf %249, %250 : vector<16x32xf32>
    %cst_70 = arith.constant dense<0.000000e+00> : vector<16xf32>
    %252 = vector.multi_reduction <add>, %251, %cst_70 [1] : vector<16x32xf32> to vector<16xf32>
    %253 = vector.shape_cast %252 : vector<16xf32> to vector<16x1xf32>
    %cst_71 = arith.constant 3.200000e+01 : f32
    %254 = vector.broadcast %cst_71 : f32 to vector<16x1xf32>
    %255 = arith.divf %253, %254 : vector<16x1xf32>
    %256 = vector.broadcast %255 : vector<16x1xf32> to vector<16x32xf32>
    %257 = arith.subf %251, %256 : vector<16x32xf32>
    %258 = arith.mulf %257, %257 : vector<16x32xf32>
    %cst_72 = arith.constant dense<0.000000e+00> : vector<16xf32>
    %259 = vector.multi_reduction <add>, %258, %cst_72 [1] : vector<16x32xf32> to vector<16xf32>
    %260 = vector.shape_cast %259 : vector<16xf32> to vector<16x1xf32>
    %cst_73 = arith.constant 3.100000e+01 : f32
    %261 = vector.broadcast %cst_73 : f32 to vector<16x1xf32>
    %262 = arith.divf %260, %261 : vector<16x1xf32>
    %263 = math.sqrt %262 : vector<16x1xf32>
    %264 = vector.broadcast %255 : vector<16x1xf32> to vector<16x32xf32>
    %265 = arith.subf %251, %264 : vector<16x32xf32>
    %266 = vector.broadcast %9 : vector<1x32xf32> to vector<16x32xf32>
    %267 = arith.mulf %266, %265 : vector<16x32xf32>
    %cst_74 = arith.constant 9.99999997E-7 : f32
    %268 = vector.broadcast %cst_74 : f32 to vector<16x1xf32>
    %269 = arith.addf %263, %268 : vector<16x1xf32>
    %270 = vector.broadcast %269 : vector<16x1xf32> to vector<16x32xf32>
    %271 = arith.divf %267, %270 : vector<16x32xf32>
    %272 = vector.broadcast %10 : vector<1x32xf32> to vector<16x32xf32>
    %273 = arith.addf %271, %272 : vector<16x32xf32>
    %cst_75 = arith.constant dense<0.000000e+00> : vector<16x96xf32>
    %274 = tpu.matmul %273, %3, %cst_75 {dimension_numbers = #tpu.dot_dimension_numbers<[1], [0], [0], [1], [0, 0, 1, 1], [], []>} : vector<16x32xf32>, vector<32x96xf32>, vector<16x96xf32> -> vector<16x96xf32>
    %275 = vector.broadcast %5 : vector<1x96xf32> to vector<16x96xf32>
    %276 = arith.addf %274, %275 : vector<16x96xf32>
    %277 = vector.extract_strided_slice %276 {offsets = [0, 0], sizes = [8, 96], strides = [1, 1]} : vector<16x96xf32> to vector<8x96xf32>
    %278 = vector.extract_strided_slice %1 {offsets = [0, 0], sizes = [1, 8], strides = [1, 1]} : vector<2x8xf32> to vector<1x8xf32>
    %cst_76 = arith.constant 0.000000e+00 : f32
    %279 = vector.broadcast %cst_76 : f32 to vector<8x32xf32>
    %280 = vector.extract_strided_slice %277 {offsets = [0, 0], sizes = [8, 8], strides = [1, 1]} : vector<8x96xf32> to vector<8x8xf32>
    %281 = vector.extract_strided_slice %277 {offsets = [0, 32], sizes = [8, 8], strides = [1, 1]} : vector<8x96xf32> to vector<8x8xf32>
    %282 = vector.extract_strided_slice %277 {offsets = [0, 64], sizes = [8, 8], strides = [1, 1]} : vector<8x96xf32> to vector<8x8xf32>
    %283 = tpu.transpose %281, [1, 0] : vector<8x8xf32> -> vector<8x8xf32>
    %cst_77 = arith.constant dense<0.000000e+00> : vector<8x8xf32>
    %284 = tpu.matmul %280, %283, %cst_77 {dimension_numbers = #tpu.dot_dimension_numbers<[1], [0], [0], [1], [0, 0, 1, 1], [], []>} : vector<8x8xf32>, vector<8x8xf32>, vector<8x8xf32> -> vector<8x8xf32>
    %285 = vector.broadcast %278 : vector<1x8xf32> to vector<8x8xf32>
    %286 = arith.addf %284, %285 : vector<8x8xf32>
    %cst_78 = arith.constant dense<0xFF800000> : vector<8xf32>
    %287 = vector.multi_reduction <maximumf>, %286, %cst_78 [1] : vector<8x8xf32> to vector<8xf32>
    %288 = vector.shape_cast %287 : vector<8xf32> to vector<8x1xf32>
    %289 = vector.broadcast %288 : vector<8x1xf32> to vector<8x8xf32>
    %290 = arith.subf %286, %289 : vector<8x8xf32>
    %291 = math.exp %290 : vector<8x8xf32>
    %cst_79 = arith.constant dense<0.000000e+00> : vector<8xf32>
    %292 = vector.multi_reduction <add>, %291, %cst_79 [1] : vector<8x8xf32> to vector<8xf32>
    %293 = vector.shape_cast %292 : vector<8xf32> to vector<8x1xf32>
    %294 = tpu.reciprocal %293 : vector<8x1xf32> -> vector<8x1xf32>
    %295 = vector.broadcast %294 : vector<8x1xf32> to vector<8x8xf32>
    %296 = arith.mulf %291, %295 : vector<8x8xf32>
    %cst_80 = arith.constant dense<0.000000e+00> : vector<8x8xf32>
    %297 = tpu.matmul %296, %282, %cst_80 {dimension_numbers = #tpu.dot_dimension_numbers<[1], [0], [0], [1], [0, 0, 1, 1], [], []>} : vector<8x8xf32>, vector<8x8xf32>, vector<8x8xf32> -> vector<8x8xf32>
    %298 = vector.extract_strided_slice %4 {offsets = [0, 0], sizes = [8, 32], strides = [1, 1]} : vector<32x32xf32> to vector<8x32xf32>
    %cst_81 = arith.constant dense<0.000000e+00> : vector<8x32xf32>
    %299 = tpu.matmul %297, %298, %cst_81 {dimension_numbers = #tpu.dot_dimension_numbers<[1], [0], [0], [1], [0, 0, 1, 1], [], []>} : vector<8x8xf32>, vector<8x32xf32>, vector<8x32xf32> -> vector<8x32xf32>
    %300 = arith.addf %279, %299 : vector<8x32xf32>
    %301 = vector.extract_strided_slice %277 {offsets = [0, 8], sizes = [8, 8], strides = [1, 1]} : vector<8x96xf32> to vector<8x8xf32>
    %302 = vector.extract_strided_slice %277 {offsets = [0, 40], sizes = [8, 8], strides = [1, 1]} : vector<8x96xf32> to vector<8x8xf32>
    %303 = vector.extract_strided_slice %277 {offsets = [0, 72], sizes = [8, 8], strides = [1, 1]} : vector<8x96xf32> to vector<8x8xf32>
    %304 = tpu.transpose %302, [1, 0] : vector<8x8xf32> -> vector<8x8xf32>
    %cst_82 = arith.constant dense<0.000000e+00> : vector<8x8xf32>
    %305 = tpu.matmul %301, %304, %cst_82 {dimension_numbers = #tpu.dot_dimension_numbers<[1], [0], [0], [1], [0, 0, 1, 1], [], []>} : vector<8x8xf32>, vector<8x8xf32>, vector<8x8xf32> -> vector<8x8xf32>
    %306 = vector.broadcast %278 : vector<1x8xf32> to vector<8x8xf32>
    %307 = arith.addf %305, %306 : vector<8x8xf32>
    %cst_83 = arith.constant dense<0xFF800000> : vector<8xf32>
    %308 = vector.multi_reduction <maximumf>, %307, %cst_83 [1] : vector<8x8xf32> to vector<8xf32>
    %309 = vector.shape_cast %308 : vector<8xf32> to vector<8x1xf32>
    %310 = vector.broadcast %309 : vector<8x1xf32> to vector<8x8xf32>
    %311 = arith.subf %307, %310 : vector<8x8xf32>
    %312 = math.exp %311 : vector<8x8xf32>
    %cst_84 = arith.constant dense<0.000000e+00> : vector<8xf32>
    %313 = vector.multi_reduction <add>, %312, %cst_84 [1] : vector<8x8xf32> to vector<8xf32>
    %314 = vector.shape_cast %313 : vector<8xf32> to vector<8x1xf32>
    %315 = tpu.reciprocal %314 : vector<8x1xf32> -> vector<8x1xf32>
    %316 = vector.broadcast %315 : vector<8x1xf32> to vector<8x8xf32>
    %317 = arith.mulf %312, %316 : vector<8x8xf32>
    %cst_85 = arith.constant dense<0.000000e+00> : vector<8x8xf32>
    %318 = tpu.matmul %317, %303, %cst_85 {dimension_numbers = #tpu.dot_dimension_numbers<[1], [0], [0], [1], [0, 0, 1, 1], [], []>} : vector<8x8xf32>, vector<8x8xf32>, vector<8x8xf32> -> vector<8x8xf32>
    %319 = vector.extract_strided_slice %4 {offsets = [8, 0], sizes = [8, 32], strides = [1, 1]} : vector<32x32xf32> to vector<8x32xf32>
    %cst_86 = arith.constant dense<0.000000e+00> : vector<8x32xf32>
    %320 = tpu.matmul %318, %319, %cst_86 {dimension_numbers = #tpu.dot_dimension_numbers<[1], [0], [0], [1], [0, 0, 1, 1], [], []>} : vector<8x8xf32>, vector<8x32xf32>, vector<8x32xf32> -> vector<8x32xf32>
    %321 = arith.addf %300, %320 : vector<8x32xf32>
    %322 = vector.extract_strided_slice %277 {offsets = [0, 16], sizes = [8, 8], strides = [1, 1]} : vector<8x96xf32> to vector<8x8xf32>
    %323 = vector.extract_strided_slice %277 {offsets = [0, 48], sizes = [8, 8], strides = [1, 1]} : vector<8x96xf32> to vector<8x8xf32>
    %324 = vector.extract_strided_slice %277 {offsets = [0, 80], sizes = [8, 8], strides = [1, 1]} : vector<8x96xf32> to vector<8x8xf32>
    %325 = tpu.transpose %323, [1, 0] : vector<8x8xf32> -> vector<8x8xf32>
    %cst_87 = arith.constant dense<0.000000e+00> : vector<8x8xf32>
    %326 = tpu.matmul %322, %325, %cst_87 {dimension_numbers = #tpu.dot_dimension_numbers<[1], [0], [0], [1], [0, 0, 1, 1], [], []>} : vector<8x8xf32>, vector<8x8xf32>, vector<8x8xf32> -> vector<8x8xf32>
    %327 = vector.broadcast %278 : vector<1x8xf32> to vector<8x8xf32>
    %328 = arith.addf %326, %327 : vector<8x8xf32>
    %cst_88 = arith.constant dense<0xFF800000> : vector<8xf32>
    %329 = vector.multi_reduction <maximumf>, %328, %cst_88 [1] : vector<8x8xf32> to vector<8xf32>
    %330 = vector.shape_cast %329 : vector<8xf32> to vector<8x1xf32>
    %331 = vector.broadcast %330 : vector<8x1xf32> to vector<8x8xf32>
    %332 = arith.subf %328, %331 : vector<8x8xf32>
    %333 = math.exp %332 : vector<8x8xf32>
    %cst_89 = arith.constant dense<0.000000e+00> : vector<8xf32>
    %334 = vector.multi_reduction <add>, %333, %cst_89 [1] : vector<8x8xf32> to vector<8xf32>
    %335 = vector.shape_cast %334 : vector<8xf32> to vector<8x1xf32>
    %336 = tpu.reciprocal %335 : vector<8x1xf32> -> vector<8x1xf32>
    %337 = vector.broadcast %336 : vector<8x1xf32> to vector<8x8xf32>
    %338 = arith.mulf %333, %337 : vector<8x8xf32>
    %cst_90 = arith.constant dense<0.000000e+00> : vector<8x8xf32>
    %339 = tpu.matmul %338, %324, %cst_90 {dimension_numbers = #tpu.dot_dimension_numbers<[1], [0], [0], [1], [0, 0, 1, 1], [], []>} : vector<8x8xf32>, vector<8x8xf32>, vector<8x8xf32> -> vector<8x8xf32>
    %340 = vector.extract_strided_slice %4 {offsets = [16, 0], sizes = [8, 32], strides = [1, 1]} : vector<32x32xf32> to vector<8x32xf32>
    %cst_91 = arith.constant dense<0.000000e+00> : vector<8x32xf32>
    %341 = tpu.matmul %339, %340, %cst_91 {dimension_numbers = #tpu.dot_dimension_numbers<[1], [0], [0], [1], [0, 0, 1, 1], [], []>} : vector<8x8xf32>, vector<8x32xf32>, vector<8x32xf32> -> vector<8x32xf32>
    %342 = arith.addf %321, %341 : vector<8x32xf32>
    %343 = vector.extract_strided_slice %277 {offsets = [0, 24], sizes = [8, 8], strides = [1, 1]} : vector<8x96xf32> to vector<8x8xf32>
    %344 = vector.extract_strided_slice %277 {offsets = [0, 56], sizes = [8, 8], strides = [1, 1]} : vector<8x96xf32> to vector<8x8xf32>
    %345 = vector.extract_strided_slice %277 {offsets = [0, 88], sizes = [8, 8], strides = [1, 1]} : vector<8x96xf32> to vector<8x8xf32>
    %346 = tpu.transpose %344, [1, 0] : vector<8x8xf32> -> vector<8x8xf32>
    %cst_92 = arith.constant dense<0.000000e+00> : vector<8x8xf32>
    %347 = tpu.matmul %343, %346, %cst_92 {dimension_numbers = #tpu.dot_dimension_numbers<[1], [0], [0], [1], [0, 0, 1, 1], [], []>} : vector<8x8xf32>, vector<8x8xf32>, vector<8x8xf32> -> vector<8x8xf32>
    %348 = vector.broadcast %278 : vector<1x8xf32> to vector<8x8xf32>
    %349 = arith.addf %347, %348 : vector<8x8xf32>
    %cst_93 = arith.constant dense<0xFF800000> : vector<8xf32>
    %350 = vector.multi_reduction <maximumf>, %349, %cst_93 [1] : vector<8x8xf32> to vector<8xf32>
    %351 = vector.shape_cast %350 : vector<8xf32> to vector<8x1xf32>
    %352 = vector.broadcast %351 : vector<8x1xf32> to vector<8x8xf32>
    %353 = arith.subf %349, %352 : vector<8x8xf32>
    %354 = math.exp %353 : vector<8x8xf32>
    %cst_94 = arith.constant dense<0.000000e+00> : vector<8xf32>
    %355 = vector.multi_reduction <add>, %354, %cst_94 [1] : vector<8x8xf32> to vector<8xf32>
    %356 = vector.shape_cast %355 : vector<8xf32> to vector<8x1xf32>
    %357 = tpu.reciprocal %356 : vector<8x1xf32> -> vector<8x1xf32>
    %358 = vector.broadcast %357 : vector<8x1xf32> to vector<8x8xf32>
    %359 = arith.mulf %354, %358 : vector<8x8xf32>
    %cst_95 = arith.constant dense<0.000000e+00> : vector<8x8xf32>
    %360 = tpu.matmul %359, %345, %cst_95 {dimension_numbers = #tpu.dot_dimension_numbers<[1], [0], [0], [1], [0, 0, 1, 1], [], []>} : vector<8x8xf32>, vector<8x8xf32>, vector<8x8xf32> -> vector<8x8xf32>
    %361 = vector.extract_strided_slice %4 {offsets = [24, 0], sizes = [8, 32], strides = [1, 1]} : vector<32x32xf32> to vector<8x32xf32>
    %cst_96 = arith.constant dense<0.000000e+00> : vector<8x32xf32>
    %362 = tpu.matmul %360, %361, %cst_96 {dimension_numbers = #tpu.dot_dimension_numbers<[1], [0], [0], [1], [0, 0, 1, 1], [], []>} : vector<8x8xf32>, vector<8x32xf32>, vector<8x32xf32> -> vector<8x32xf32>
    %363 = arith.addf %342, %362 : vector<8x32xf32>
    %364 = vector.extract_strided_slice %276 {offsets = [8, 0], sizes = [8, 96], strides = [1, 1]} : vector<16x96xf32> to vector<8x96xf32>
    %365 = vector.extract_strided_slice %1 {offsets = [1, 0], sizes = [1, 8], strides = [1, 1]} : vector<2x8xf32> to vector<1x8xf32>
    %cst_97 = arith.constant 0.000000e+00 : f32
    %366 = vector.broadcast %cst_97 : f32 to vector<8x32xf32>
    %367 = vector.extract_strided_slice %364 {offsets = [0, 0], sizes = [8, 8], strides = [1, 1]} : vector<8x96xf32> to vector<8x8xf32>
    %368 = vector.extract_strided_slice %364 {offsets = [0, 32], sizes = [8, 8], strides = [1, 1]} : vector<8x96xf32> to vector<8x8xf32>
    %369 = vector.extract_strided_slice %364 {offsets = [0, 64], sizes = [8, 8], strides = [1, 1]} : vector<8x96xf32> to vector<8x8xf32>
    %370 = tpu.transpose %368, [1, 0] : vector<8x8xf32> -> vector<8x8xf32>
    %cst_98 = arith.constant dense<0.000000e+00> : vector<8x8xf32>
    %371 = tpu.matmul %367, %370, %cst_98 {dimension_numbers = #tpu.dot_dimension_numbers<[1], [0], [0], [1], [0, 0, 1, 1], [], []>} : vector<8x8xf32>, vector<8x8xf32>, vector<8x8xf32> -> vector<8x8xf32>
    %372 = vector.broadcast %365 : vector<1x8xf32> to vector<8x8xf32>
    %373 = arith.addf %371, %372 : vector<8x8xf32>
    %cst_99 = arith.constant dense<0xFF800000> : vector<8xf32>
    %374 = vector.multi_reduction <maximumf>, %373, %cst_99 [1] : vector<8x8xf32> to vector<8xf32>
    %375 = vector.shape_cast %374 : vector<8xf32> to vector<8x1xf32>
    %376 = vector.broadcast %375 : vector<8x1xf32> to vector<8x8xf32>
    %377 = arith.subf %373, %376 : vector<8x8xf32>
    %378 = math.exp %377 : vector<8x8xf32>
    %cst_100 = arith.constant dense<0.000000e+00> : vector<8xf32>
    %379 = vector.multi_reduction <add>, %378, %cst_100 [1] : vector<8x8xf32> to vector<8xf32>
    %380 = vector.shape_cast %379 : vector<8xf32> to vector<8x1xf32>
    %381 = tpu.reciprocal %380 : vector<8x1xf32> -> vector<8x1xf32>
    %382 = vector.broadcast %381 : vector<8x1xf32> to vector<8x8xf32>
    %383 = arith.mulf %378, %382 : vector<8x8xf32>
    %cst_101 = arith.constant dense<0.000000e+00> : vector<8x8xf32>
    %384 = tpu.matmul %383, %369, %cst_101 {dimension_numbers = #tpu.dot_dimension_numbers<[1], [0], [0], [1], [0, 0, 1, 1], [], []>} : vector<8x8xf32>, vector<8x8xf32>, vector<8x8xf32> -> vector<8x8xf32>
    %385 = vector.extract_strided_slice %4 {offsets = [0, 0], sizes = [8, 32], strides = [1, 1]} : vector<32x32xf32> to vector<8x32xf32>
    %cst_102 = arith.constant dense<0.000000e+00> : vector<8x32xf32>
    %386 = tpu.matmul %384, %385, %cst_102 {dimension_numbers = #tpu.dot_dimension_numbers<[1], [0], [0], [1], [0, 0, 1, 1], [], []>} : vector<8x8xf32>, vector<8x32xf32>, vector<8x32xf32> -> vector<8x32xf32>
    %387 = arith.addf %366, %386 : vector<8x32xf32>
    %388 = vector.extract_strided_slice %364 {offsets = [0, 8], sizes = [8, 8], strides = [1, 1]} : vector<8x96xf32> to vector<8x8xf32>
    %389 = vector.extract_strided_slice %364 {offsets = [0, 40], sizes = [8, 8], strides = [1, 1]} : vector<8x96xf32> to vector<8x8xf32>
    %390 = vector.extract_strided_slice %364 {offsets = [0, 72], sizes = [8, 8], strides = [1, 1]} : vector<8x96xf32> to vector<8x8xf32>
    %391 = tpu.transpose %389, [1, 0] : vector<8x8xf32> -> vector<8x8xf32>
    %cst_103 = arith.constant dense<0.000000e+00> : vector<8x8xf32>
    %392 = tpu.matmul %388, %391, %cst_103 {dimension_numbers = #tpu.dot_dimension_numbers<[1], [0], [0], [1], [0, 0, 1, 1], [], []>} : vector<8x8xf32>, vector<8x8xf32>, vector<8x8xf32> -> vector<8x8xf32>
    %393 = vector.broadcast %365 : vector<1x8xf32> to vector<8x8xf32>
    %394 = arith.addf %392, %393 : vector<8x8xf32>
    %cst_104 = arith.constant dense<0xFF800000> : vector<8xf32>
    %395 = vector.multi_reduction <maximumf>, %394, %cst_104 [1] : vector<8x8xf32> to vector<8xf32>
    %396 = vector.shape_cast %395 : vector<8xf32> to vector<8x1xf32>
    %397 = vector.broadcast %396 : vector<8x1xf32> to vector<8x8xf32>
    %398 = arith.subf %394, %397 : vector<8x8xf32>
    %399 = math.exp %398 : vector<8x8xf32>
    %cst_105 = arith.constant dense<0.000000e+00> : vector<8xf32>
    %400 = vector.multi_reduction <add>, %399, %cst_105 [1] : vector<8x8xf32> to vector<8xf32>
    %401 = vector.shape_cast %400 : vector<8xf32> to vector<8x1xf32>
    %402 = tpu.reciprocal %401 : vector<8x1xf32> -> vector<8x1xf32>
    %403 = vector.broadcast %402 : vector<8x1xf32> to vector<8x8xf32>
    %404 = arith.mulf %399, %403 : vector<8x8xf32>
    %cst_106 = arith.constant dense<0.000000e+00> : vector<8x8xf32>
    %405 = tpu.matmul %404, %390, %cst_106 {dimension_numbers = #tpu.dot_dimension_numbers<[1], [0], [0], [1], [0, 0, 1, 1], [], []>} : vector<8x8xf32>, vector<8x8xf32>, vector<8x8xf32> -> vector<8x8xf32>
    %406 = vector.extract_strided_slice %4 {offsets = [8, 0], sizes = [8, 32], strides = [1, 1]} : vector<32x32xf32> to vector<8x32xf32>
    %cst_107 = arith.constant dense<0.000000e+00> : vector<8x32xf32>
    %407 = tpu.matmul %405, %406, %cst_107 {dimension_numbers = #tpu.dot_dimension_numbers<[1], [0], [0], [1], [0, 0, 1, 1], [], []>} : vector<8x8xf32>, vector<8x32xf32>, vector<8x32xf32> -> vector<8x32xf32>
    %408 = arith.addf %387, %407 : vector<8x32xf32>
    %409 = vector.extract_strided_slice %364 {offsets = [0, 16], sizes = [8, 8], strides = [1, 1]} : vector<8x96xf32> to vector<8x8xf32>
    %410 = vector.extract_strided_slice %364 {offsets = [0, 48], sizes = [8, 8], strides = [1, 1]} : vector<8x96xf32> to vector<8x8xf32>
    %411 = vector.extract_strided_slice %364 {offsets = [0, 80], sizes = [8, 8], strides = [1, 1]} : vector<8x96xf32> to vector<8x8xf32>
    %412 = tpu.transpose %410, [1, 0] : vector<8x8xf32> -> vector<8x8xf32>
    %cst_108 = arith.constant dense<0.000000e+00> : vector<8x8xf32>
    %413 = tpu.matmul %409, %412, %cst_108 {dimension_numbers = #tpu.dot_dimension_numbers<[1], [0], [0], [1], [0, 0, 1, 1], [], []>} : vector<8x8xf32>, vector<8x8xf32>, vector<8x8xf32> -> vector<8x8xf32>
    %414 = vector.broadcast %365 : vector<1x8xf32> to vector<8x8xf32>
    %415 = arith.addf %413, %414 : vector<8x8xf32>
    %cst_109 = arith.constant dense<0xFF800000> : vector<8xf32>
    %416 = vector.multi_reduction <maximumf>, %415, %cst_109 [1] : vector<8x8xf32> to vector<8xf32>
    %417 = vector.shape_cast %416 : vector<8xf32> to vector<8x1xf32>
    %418 = vector.broadcast %417 : vector<8x1xf32> to vector<8x8xf32>
    %419 = arith.subf %415, %418 : vector<8x8xf32>
    %420 = math.exp %419 : vector<8x8xf32>
    %cst_110 = arith.constant dense<0.000000e+00> : vector<8xf32>
    %421 = vector.multi_reduction <add>, %420, %cst_110 [1] : vector<8x8xf32> to vector<8xf32>
    %422 = vector.shape_cast %421 : vector<8xf32> to vector<8x1xf32>
    %423 = tpu.reciprocal %422 : vector<8x1xf32> -> vector<8x1xf32>
    %424 = vector.broadcast %423 : vector<8x1xf32> to vector<8x8xf32>
    %425 = arith.mulf %420, %424 : vector<8x8xf32>
    %cst_111 = arith.constant dense<0.000000e+00> : vector<8x8xf32>
    %426 = tpu.matmul %425, %411, %cst_111 {dimension_numbers = #tpu.dot_dimension_numbers<[1], [0], [0], [1], [0, 0, 1, 1], [], []>} : vector<8x8xf32>, vector<8x8xf32>, vector<8x8xf32> -> vector<8x8xf32>
    %427 = vector.extract_strided_slice %4 {offsets = [16, 0], sizes = [8, 32], strides = [1, 1]} : vector<32x32xf32> to vector<8x32xf32>
    %cst_112 = arith.constant dense<0.000000e+00> : vector<8x32xf32>
    %428 = tpu.matmul %426, %427, %cst_112 {dimension_numbers = #tpu.dot_dimension_numbers<[1], [0], [0], [1], [0, 0, 1, 1], [], []>} : vector<8x8xf32>, vector<8x32xf32>, vector<8x32xf32> -> vector<8x32xf32>
    %429 = arith.addf %408, %428 : vector<8x32xf32>
    %430 = vector.extract_strided_slice %364 {offsets = [0, 24], sizes = [8, 8], strides = [1, 1]} : vector<8x96xf32> to vector<8x8xf32>
    %431 = vector.extract_strided_slice %364 {offsets = [0, 56], sizes = [8, 8], strides = [1, 1]} : vector<8x96xf32> to vector<8x8xf32>
    %432 = vector.extract_strided_slice %364 {offsets = [0, 88], sizes = [8, 8], strides = [1, 1]} : vector<8x96xf32> to vector<8x8xf32>
    %433 = tpu.transpose %431, [1, 0] : vector<8x8xf32> -> vector<8x8xf32>
    %cst_113 = arith.constant dense<0.000000e+00> : vector<8x8xf32>
    %434 = tpu.matmul %430, %433, %cst_113 {dimension_numbers = #tpu.dot_dimension_numbers<[1], [0], [0], [1], [0, 0, 1, 1], [], []>} : vector<8x8xf32>, vector<8x8xf32>, vector<8x8xf32> -> vector<8x8xf32>
    %435 = vector.broadcast %365 : vector<1x8xf32> to vector<8x8xf32>
    %436 = arith.addf %434, %435 : vector<8x8xf32>
    %cst_114 = arith.constant dense<0xFF800000> : vector<8xf32>
    %437 = vector.multi_reduction <maximumf>, %436, %cst_114 [1] : vector<8x8xf32> to vector<8xf32>
    %438 = vector.shape_cast %437 : vector<8xf32> to vector<8x1xf32>
    %439 = vector.broadcast %438 : vector<8x1xf32> to vector<8x8xf32>
    %440 = arith.subf %436, %439 : vector<8x8xf32>
    %441 = math.exp %440 : vector<8x8xf32>
    %cst_115 = arith.constant dense<0.000000e+00> : vector<8xf32>
    %442 = vector.multi_reduction <add>, %441, %cst_115 [1] : vector<8x8xf32> to vector<8xf32>
    %443 = vector.shape_cast %442 : vector<8xf32> to vector<8x1xf32>
    %444 = tpu.reciprocal %443 : vector<8x1xf32> -> vector<8x1xf32>
    %445 = vector.broadcast %444 : vector<8x1xf32> to vector<8x8xf32>
    %446 = arith.mulf %441, %445 : vector<8x8xf32>
    %cst_116 = arith.constant dense<0.000000e+00> : vector<8x8xf32>
    %447 = tpu.matmul %446, %432, %cst_116 {dimension_numbers = #tpu.dot_dimension_numbers<[1], [0], [0], [1], [0, 0, 1, 1], [], []>} : vector<8x8xf32>, vector<8x8xf32>, vector<8x8xf32> -> vector<8x8xf32>
    %448 = vector.extract_strided_slice %4 {offsets = [24, 0], sizes = [8, 32], strides = [1, 1]} : vector<32x32xf32> to vector<8x32xf32>
    %cst_117 = arith.constant dense<0.000000e+00> : vector<8x32xf32>
    %449 = tpu.matmul %447, %448, %cst_117 {dimension_numbers = #tpu.dot_dimension_numbers<[1], [0], [0], [1], [0, 0, 1, 1], [], []>} : vector<8x8xf32>, vector<8x32xf32>, vector<8x32xf32> -> vector<8x32xf32>
    %450 = arith.addf %429, %449 : vector<8x32xf32>
    %451 = tpu.concatenate %363, %450 in 0 : vector<8x32xf32>, vector<8x32xf32> -> vector<16x32xf32>
    %452 = arith.addf %251, %451 : vector<16x32xf32>
    %453 = vector.broadcast %7 : vector<1x32xf32> to vector<16x32xf32>
    %454 = arith.addf %452, %453 : vector<16x32xf32>
    %cst_118 = arith.constant dense<0.000000e+00> : vector<16xf32>
    %455 = vector.multi_reduction <add>, %454, %cst_118 [1] : vector<16x32xf32> to vector<16xf32>
    %456 = vector.shape_cast %455 : vector<16xf32> to vector<16x1xf32>
    %cst_119 = arith.constant 3.200000e+01 : f32
    %457 = vector.broadcast %cst_119 : f32 to vector<16x1xf32>
    %458 = arith.divf %456, %457 : vector<16x1xf32>
    %459 = vector.broadcast %458 : vector<16x1xf32> to vector<16x32xf32>
    %460 = arith.subf %454, %459 : vector<16x32xf32>
    %461 = arith.mulf %460, %460 : vector<16x32xf32>
    %cst_120 = arith.constant dense<0.000000e+00> : vector<16xf32>
    %462 = vector.multi_reduction <add>, %461, %cst_120 [1] : vector<16x32xf32> to vector<16xf32>
    %463 = vector.shape_cast %462 : vector<16xf32> to vector<16x1xf32>
    %cst_121 = arith.constant 3.100000e+01 : f32
    %464 = vector.broadcast %cst_121 : f32 to vector<16x1xf32>
    %465 = arith.divf %463, %464 : vector<16x1xf32>
    %466 = math.sqrt %465 : vector<16x1xf32>
    %467 = vector.broadcast %458 : vector<16x1xf32> to vector<16x32xf32>
    %468 = arith.subf %454, %467 : vector<16x32xf32>
    %469 = vector.broadcast %11 : vector<1x32xf32> to vector<16x32xf32>
    %470 = arith.mulf %469, %468 : vector<16x32xf32>
    %cst_122 = arith.constant 9.99999997E-7 : f32
    %471 = vector.broadcast %cst_122 : f32 to vector<16x1xf32>
    %472 = arith.addf %466, %471 : vector<16x1xf32>
    %473 = vector.broadcast %472 : vector<16x1xf32> to vector<16x32xf32>
    %474 = arith.divf %470, %473 : vector<16x32xf32>
    %475 = vector.broadcast %12 : vector<1x32xf32> to vector<16x32xf32>
    %476 = arith.addf %474, %475 : vector<16x32xf32>
    %cst_123 = arith.constant dense<0.000000e+00> : vector<16x64xf32>
    %477 = tpu.matmul %476, %15, %cst_123 {dimension_numbers = #tpu.dot_dimension_numbers<[1], [0], [0], [1], [0, 0, 1, 1], [], []>} : vector<16x32xf32>, vector<32x64xf32>, vector<16x64xf32> -> vector<16x64xf32>
    %478 = vector.broadcast %16 : vector<1x64xf32> to vector<16x64xf32>
    %479 = arith.addf %477, %478 : vector<16x64xf32>
    %cst_124 = arith.constant 0.000000e+00 : f32
    %480 = vector.broadcast %cst_124 : f32 to vector<16x64xf32>
    %481 = arith.maximumf %479, %480 : vector<16x64xf32>
    %cst_125 = arith.constant dense<0.000000e+00> : vector<16x32xf32>
    %482 = tpu.matmul %481, %17, %cst_125 {dimension_numbers = #tpu.dot_dimension_numbers<[1], [0], [0], [1], [0, 0, 1, 1], [], []>} : vector<16x64xf32>, vector<64x32xf32>, vector<16x32xf32> -> vector<16x32xf32>
    %483 = arith.addf %454, %482 : vector<16x32xf32>
    %484 = vector.broadcast %8 : vector<1x32xf32> to vector<16x32xf32>
    %485 = arith.addf %483, %484 : vector<16x32xf32>
    %cst_126 = arith.constant dense<0.000000e+00> : vector<16xf32>
    %486 = vector.multi_reduction <add>, %485, %cst_126 [1] : vector<16x32xf32> to vector<16xf32>
    %487 = vector.shape_cast %486 : vector<16xf32> to vector<16x1xf32>
    %cst_127 = arith.constant 3.200000e+01 : f32
    %488 = vector.broadcast %cst_127 : f32 to vector<16x1xf32>
    %489 = arith.divf %487, %488 : vector<16x1xf32>
    %490 = vector.broadcast %489 : vector<16x1xf32> to vector<16x32xf32>
    %491 = arith.subf %485, %490 : vector<16x32xf32>
    %492 = arith.mulf %491, %491 : vector<16x32xf32>
    %cst_128 = arith.constant dense<0.000000e+00> : vector<16xf32>
    %493 = vector.multi_reduction <add>, %492, %cst_128 [1] : vector<16x32xf32> to vector<16xf32>
    %494 = vector.shape_cast %493 : vector<16xf32> to vector<16x1xf32>
    %cst_129 = arith.constant 3.100000e+01 : f32
    %495 = vector.broadcast %cst_129 : f32 to vector<16x1xf32>
    %496 = arith.divf %494, %495 : vector<16x1xf32>
    %497 = math.sqrt %496 : vector<16x1xf32>
    %498 = vector.broadcast %489 : vector<16x1xf32> to vector<16x32xf32>
    %499 = arith.subf %485, %498 : vector<16x32xf32>
    %500 = vector.broadcast %13 : vector<1x32xf32> to vector<16x32xf32>
    %501 = arith.mulf %500, %499 : vector<16x32xf32>
    %cst_130 = arith.constant 9.99999997E-7 : f32
    %502 = vector.broadcast %cst_130 : f32 to vector<16x1xf32>
    %503 = arith.addf %497, %502 : vector<16x1xf32>
    %504 = vector.broadcast %503 : vector<16x1xf32> to vector<16x32xf32>
    %505 = arith.divf %501, %504 : vector<16x32xf32>
    %506 = vector.broadcast %14 : vector<1x32xf32> to vector<16x32xf32>
    %507 = arith.addf %505, %506 : vector<16x32xf32>
    %c0_131 = arith.constant 0 : index
    %c0_132 = arith.constant 0 : index
    %508 = vector.load %arg8[%c0_131, %c0_132] : memref<16x32xf32, #tpu.memory_space<vmem>>, vector<16x32xf32>
    tpu.vector_store %arg8[%c0_131, %c0_132], %507 {strides = array<i32>} : memref<16x32xf32, #tpu.memory_space<vmem>>, vector<16x32xf32>,
    return
  }
}

</mosaic_0001>

<llo_original>
// kernel: encoder_forward.1
$region0: #{encoder_forward.1}
  #allocation0 [shape = 'u32[]', space=smem, size = 0x4, offset = 0x4, fixed_abs, tag = 'smem constant byte address 0x4 - core index']
  #allocation1 [shape = 'u32[144,128]{1,0:T(1,128)}', space=vmem, size = 0x12000, scoped, tag = 'internal scratch']
  %s0 = inlined_call_operand.vmem [shape: f32[16,32], index: 0, kind: input, shape index: {}]
  %s1 = inlined_call_operand.vmem [shape: f32[2,8], index: 1, kind: input, shape index: {}]
  %s2 = inlined_call_operand.vmem [shape: f32[32,128], index: 2, kind: input, shape index: {}]
  %s3 = inlined_call_operand.vmem [shape: f32[1,96], index: 3, kind: input, shape index: {}]
  %s4 = inlined_call_operand.vmem [shape: f32[8,32], index: 4, kind: input, shape index: {}]
  %s5 = inlined_call_operand.vmem [shape: f32[32,64], index: 5, kind: input, shape index: {}]
  %s6 = inlined_call_operand.vmem [shape: f32[1,64], index: 6, kind: input, shape index: {}]
  %s7 = inlined_call_operand.vmem [shape: f32[64,32], index: 7, kind: input, shape index: {}]
  %s8 = inlined_call_operand.hbm [shape: f32[16,32], index: 8, kind: output, shape index: {}]
  %s9 = sld [smem:[#allocation0]]
  $region42: #{encoder_forward.1} parent=0
    _
  %s11 = ssub.s32 1, %s9
  %s12 = scalar_select 0, %s11, %s9
  $region1: #{encoder_forward.1} parent=0
    #allocation2 [shape = 'u8[8192]{0}', space=vmem, size = 0x2000, scoped, tag = 'output window, operand 0, single buffered']
    #allocation3 [shape = 's32[1]{0}', space=sflag, size = 0x4, scoped, tag = 'scoped memory for encoder_forward.1']
    %13 = vsyncpa [#allocation3], 0
    // Predicated region
    $region2: #{encoder_forward.1} parent=1 // pred_check
      _
    $region3: #{encoder_forward.1} parent=1 // pred_check_branch
      %15 = sbr.rel (0) target = $region5
    $region4: #{encoder_forward.1} parent=1 // pred_region
      _
    $region5: #{encoder_forward.1} parent=1 // pred_fallthru
      _
    // Predicated region
    $region6: #{encoder_forward.1} parent=1 // pred_check
      _
    $region7: #{encoder_forward.1} parent=1 // pred_check_branch
      %17 = sbr.rel (0) target = $region9
    $region8: #{encoder_forward.1} parent=1 // pred_region
      _
    $region9: #{encoder_forward.1} parent=1 // pred_fallthru
      _
    // Predicated region
    $region10: #{encoder_forward.1} parent=1 // pred_check
      _
    $region11: #{encoder_forward.1} parent=1 // pred_check_branch
      %19 = sbr.rel (0) target = $region13
    $region12: #{encoder_forward.1} parent=1 // pred_region
      _
    $region13: #{encoder_forward.1} parent=1 // pred_fallthru
      _
    // Predicated region
    $region14: #{encoder_forward.1} parent=1 // pred_check
      _
    $region15: #{encoder_forward.1} parent=1 // pred_check_branch
      %21 = sbr.rel (0) target = $region17
    $region16: #{encoder_forward.1} parent=1 // pred_region
      _
    $region17: #{encoder_forward.1} parent=1 // pred_fallthru
      _
    // Predicated region
    $region18: #{encoder_forward.1} parent=1 // pred_check
      _
    $region19: #{encoder_forward.1} parent=1 // pred_check_branch
      %23 = sbr.rel (0) target = $region21
    $region20: #{encoder_forward.1} parent=1 // pred_region
      _
    $region21: #{encoder_forward.1} parent=1 // pred_fallthru
      _
    // Predicated region
    $region22: #{encoder_forward.1} parent=1 // pred_check
      _
    $region23: #{encoder_forward.1} parent=1 // pred_check_branch
      %25 = sbr.rel (0) target = $region25
    $region24: #{encoder_forward.1} parent=1 // pred_region
      _
    $region25: #{encoder_forward.1} parent=1 // pred_fallthru
      _
    // Predicated region
    $region26: #{encoder_forward.1} parent=1 // pred_check
      _
    $region27: #{encoder_forward.1} parent=1 // pred_check_branch
      %27 = sbr.rel (0) target = $region29
    $region28: #{encoder_forward.1} parent=1 // pred_region
      _
    $region29: #{encoder_forward.1} parent=1 // pred_fallthru
      _
    // Predicated region
    $region30: #{encoder_forward.1} parent=1 // pred_check
      _
    $region31: #{encoder_forward.1} parent=1 // pred_check_branch
      %29 = sbr.rel (0) target = $region33
    $region32: #{encoder_forward.1} parent=1 // pred_region
      _
    $region33: #{encoder_forward.1} parent=1 // pred_fallthru
      _
    %v30 = vld [vmem:[%s0] sm:$0xff]
    %v31 = vld [vmem:[%s0 + $0x8] sm:$0xff]
    %v32 = vld [vmem:[%s1] sm:$0x3]
    %v33 = vld [vmem:[%s2] sm:$0xff]
    %v34 = vld [vmem:[%s2 + $0x8] sm:$0xff]
    %v35 = vld [vmem:[%s2 + $0x10] sm:$0xff]
    %v36 = vld [vmem:[%s2 + $0x18] sm:$0xff]
    %v37 = vld [vmem:[%s3] sm:$0x1]
    %v38 = vld [vmem:[%s4] sm:$0xff]
    %v39 = vld [vmem:[%s5] sm:$0xff]
    %v40 = vld [vmem:[%s5 + $0x8] sm:$0xff]
    %v41 = vld [vmem:[%s5 + $0x10] sm:$0xff]
    %v42 = vld [vmem:[%s5 + $0x18] sm:$0xff]
    %v43 = vld [vmem:[%s6] sm:$0x1]
    %v44 = vld [vmem:[%s7] sm:$0xff]
    %v45 = vld [vmem:[%s7 + $0x8] sm:$0xff]
    %v46 = vld [vmem:[%s7 + $0x10] sm:$0xff]
    %v47 = vld [vmem:[%s7 + $0x18] sm:$0xff]
    %v48 = vld [vmem:[%s7 + $0x20] sm:$0xff]
    %v49 = vld [vmem:[%s7 + $0x28] sm:$0xff]
    %v50 = vld [vmem:[%s7 + $0x30] sm:$0xff]
    %v51 = vld [vmem:[%s7 + $0x38] sm:$0xff]
    %vm52 = vcmask 261120
    %v53 = vsel %vm52, %v30, 0.0
    %54 = vadd.xlane.f32.xlu0 %v53
    %v55 = vpop.xlane.xlu0 %54
    %v56 = vsel %vm52, %v31, 0.0
    %57 = vadd.xlane.f32.xlu0 %v56
    %v58 = vpop.xlane.xlu0 %57
    %v59 = vrcp.pop 32.0
    %v60 = vmul.f32 %v55, %v59
    %v61 = vmul.f32 %v58, %v59
    %v62 = vsub.f32 %v30, %v60
    %v63 = vsub.f32 %v31, %v61
    %v64 = vmul.f32 %v62, %v62
    %v65 = vmul.f32 %v63, %v63
    %v66 = vsel %vm52, %v64, 0.0
    %67 = vadd.xlane.f32.xlu0 %v66
    %v68 = vpop.xlane.xlu0 %67
    %v69 = vsel %vm52, %v65, 0.0
    %70 = vadd.xlane.f32.xlu0 %v69
    %v71 = vpop.xlane.xlu0 %70
    %v72 = vrcp.pop 31.0
    %v73 = vmul.f32 %v68, %v72
    %v74 = vmul.f32 %v71, %v72
    %v75 = vrsqrt.pop %v73
    %v76 = vmul.f32 %v73, %v75
    %vm77 = vcmp.eq.f32.partialorder %v73, inf
    %v78 = vsel %vm77, %v73, %v76
    %vm79 = vcmp.eq.f32.partialorder %v73, 0.0
    %v80 = vand.u32 %v73, 2147483648
    %v81 = vsel %vm79, %v80, %v78
    %v82 = vrsqrt.pop %v74
    %v83 = vmul.f32 %v74, %v82
    %vm84 = vcmp.eq.f32.partialorder %v74, inf
    %v85 = vsel %vm84, %v74, %v83
    %vm86 = vcmp.eq.f32.partialorder %v74, 0.0
    %v87 = vand.u32 %v74, 2147483648
    %v88 = vsel %vm86, %v87, %v85
    %v89 = vlaneseq
    %v90 = vshrl.u32 %v89, 7
    %v91 = vsub.s32 2, %v90
    %v92 = vrot.slane %v38, %v91
    %v93 = vmul.f32 %v92, %v62
    %v94 = vmul.f32 %v92, %v63
    %v95 = vadd.f32 %v81, 1e-06
    %v96 = vadd.f32 %v88, 1e-06
    %v97 = vrcp.pop %v95
    %v98 = vmul.f32 %v93, %v97
    %v99 = vrcp.pop %v96
    %v100 = vmul.f32 %v94, %v99
    %v101 = vlaneseq
    %v102 = vshrl.u32 %v101, 7
    %v103 = vsub.s32 3, %v102
    %v104 = vrot.slane %v38, %v103
    %v105 = vadd.f32 %v98, %v104
    %v106 = vadd.f32 %v100, %v104
    %v108 = vlaneseq
    %v109 = vshrl.u32 %v108, 7
    %v110 = vsub.s32 0, %v109
    %v111 = vrot.slane %v37, %v110
    %v114 = vsel %vm52, %v105, 0
    %v117 = vsel %vm52, %v106, 0
    %119 = vmatprep.subr.mxu0 0.0
    %120 = vmatpush1.msra.mxu0 0.0
    %121 = vmatprep.subr.mxu0 0.0
    %122 = vmatpush1.msra.mxu0 0.0
    %123 = vmatprep.subr.mxu0 0.0
    %124 = vmatpush1.msra.mxu0 0.0
    %125 = vmatprep.subr.mxu0 0.0
    %126 = vmatpush1.msra.mxu0 0.0
    %127 = vmatprep.subr.mxu0 0.0
    %128 = vmatpush1.msra.mxu0 0.0
    %129 = vmatprep.subr.mxu0 0.0
    %130 = vmatpush1.msra.mxu0 0.0
    %131 = vmatprep.subr.mxu0 0.0
    %132 = vmatpush1.msra.mxu0 0.0
    %133 = vmatprep.subr.mxu0 0.0
    %134 = vmatpush1.msra.mxu0 0.0
    %135 = vmatprep.subr.mxu0 0.0
    %136 = vmatpush1.msra.mxu0 0.0
    %137 = vmatprep.subr.mxu0 0.0
    %138 = vmatpush1.msra.mxu0 0.0
    %139 = vmatprep.subr.mxu0 0.0
    %140 = vmatpush1.msra.mxu0 0.0
    %141 = vmatprep.subr.mxu0 0.0
    %142 = vmatpush1.msra.mxu0 0.0
    %143 = vmatprep.subr.mxu0 0.0
    %144 = vmatpush1.msra.mxu0 %v36
    %145 = vmatprep.subr.mxu0 0.0
    %146 = vmatpush1.msra.mxu0 %v35
    %147 = vmatprep.subr.mxu0 0.0
    %148 = vmatpush1.msra.mxu0 %v34
    %149 = vmatprep.subr.mxu0 0.0
    %150 = vmatpush1.msra.mxu0 %v33
    %151 = vmatprep.subr.mxu0 0.0
    %152 = vmatpush2.msra.mxu0 0.0
    %153 = vmatprep.subr.mxu0 0.0
    %154 = vmatpush2.msra.mxu0 0.0
    %155 = vmatprep.subr.mxu0 0.0
    %156 = vmatpush2.msra.mxu0 0.0
    %157 = vmatprep.subr.mxu0 0.0
    %158 = vmatpush2.msra.mxu0 0.0
    %159 = vmatprep.subr.mxu0 0.0
    %160 = vmatpush2.msra.mxu0 0.0
    %161 = vmatprep.subr.mxu0 0.0
    %162 = vmatpush2.msra.mxu0 0.0
    %163 = vmatprep.subr.mxu0 0.0
    %164 = vmatpush2.msra.mxu0 0.0
    %165 = vmatprep.subr.mxu0 0.0
    %166 = vmatpush2.msra.mxu0 0.0
    %167 = vmatprep.subr.mxu0 0.0
    %168 = vmatpush2.msra.mxu0 0.0
    %169 = vmatprep.subr.mxu0 0.0
    %170 = vmatpush2.msra.mxu0 0.0
    %171 = vmatprep.subr.mxu0 0.0
    %172 = vmatpush2.msra.mxu0 0.0
    %173 = vmatprep.subr.mxu0 0.0
    %174 = vmatpush2.msra.mxu0 0.0
    %175 = vmatprep.subr.mxu0 0.0
    %176 = vmatpush2.msra.mxu0 0.0
    %177 = vmatprep.subr.mxu0 0.0
    %178 = vmatpush2.msra.mxu0 0.0
    %179 = vmatprep.subr.mxu0 0.0
    %180 = vmatpush2.msra.mxu0 0.0
    %181 = vmatprep.subr.mxu0 0.0
    %182 = vmatpush2.msra.mxu0 0.0
    %183 = vmatprep.mubr.f32.mxu0 0.0
    %184 = vmatmul.mubr.f32.gmra.mxu0 %v114
    %v185 = vpop.f32.mrf.mxu0
    %v186 = vadd.f32 %v111, %v185
    %v187 = vpop.f32.mrf.mxu0
    %188 = vmatprep.mubr.f32.mxu0 0.0
    %189 = vmatmul.mubr.f32.gmra.mxu0 %v117
    %v190 = vpop.f32.mrf.mxu0
    %v191 = vadd.f32 %v111, %v190
    %v192 = vpop.f32.mrf.mxu0
    %193 = vdwg.mxu0
    %v194 = vlaneseq
    %v195 = vshrl.u32 %v194, 7
    %v196 = vsub.s32 0, %v195
    %v197 = vrot.slane %v32, %v196
    %199 = vrot.lane.b32.xlu0 %v186, 96
    %v200 = vpop.permute.xlu0 %199
    %vm201 = vcmask 64512
    %v202 = vsel %vm201, %v186, 0
    %v204 = vsel %vm201, %v200, 0
    %206 = vmatprep.subr.mxu0 0.0
    %207 = vmatpush1.xpose.msra.mxu0 0.0
    %208 = vmatprep.subr.mxu0 0.0
    %209 = vmatpush1.xpose.msra.mxu0 0.0
    %210 = vmatprep.subr.mxu0 0.0
    %211 = vmatpush1.xpose.msra.mxu0 0.0
    %212 = vmatprep.subr.mxu0 0.0
    %213 = vmatpush1.xpose.msra.mxu0 0.0
    %214 = vmatprep.subr.mxu0 0.0
    %215 = vmatpush1.xpose.msra.mxu0 0.0
    %216 = vmatprep.subr.mxu0 0.0
    %217 = vmatpush1.xpose.msra.mxu0 0.0
    %218 = vmatprep.subr.mxu0 0.0
    %219 = vmatpush1.xpose.msra.mxu0 0.0
    %220 = vmatprep.subr.mxu0 0.0
    %221 = vmatpush1.xpose.msra.mxu0 0.0
    %222 = vmatprep.subr.mxu0 0.0
    %223 = vmatpush1.xpose.msra.mxu0 0.0
    %224 = vmatprep.subr.mxu0 0.0
    %225 = vmatpush1.xpose.msra.mxu0 0.0
    %226 = vmatprep.subr.mxu0 0.0
    %227 = vmatpush1.xpose.msra.mxu0 0.0
    %228 = vmatprep.subr.mxu0 0.0
    %229 = vmatpush1.xpose.msra.mxu0 0.0
    %230 = vmatprep.subr.mxu0 0.0
    %231 = vmatpush1.xpose.msra.mxu0 0.0
    %232 = vmatprep.subr.mxu0 0.0
    %233 = vmatpush1.xpose.msra.mxu0 0.0
    %234 = vmatprep.subr.mxu0 0.0
    %235 = vmatpush1.xpose.msra.mxu0 0.0
    %236 = vmatprep.subr.mxu0 0.0
    %237 = vmatpush1.xpose.msra.mxu0 %v204
    %238 = vmatprep.subr.mxu0 0.0
    %239 = vmatpush2.xpose.msra.mxu0 0.0
    %240 = vmatprep.subr.mxu0 0.0
    %241 = vmatpush2.xpose.msra.mxu0 0.0
    %242 = vmatprep.subr.mxu0 0.0
    %243 = vmatpush2.xpose.msra.mxu0 0.0
    %244 = vmatprep.subr.mxu0 0.0
    %245 = vmatpush2.xpose.msra.mxu0 0.0
    %246 = vmatprep.subr.mxu0 0.0
    %247 = vmatpush2.xpose.msra.mxu0 0.0
    %248 = vmatprep.subr.mxu0 0.0
    %249 = vmatpush2.xpose.msra.mxu0 0.0
    %250 = vmatprep.subr.mxu0 0.0
    %251 = vmatpush2.xpose.msra.mxu0 0.0
    %252 = vmatprep.subr.mxu0 0.0
    %253 = vmatpush2.xpose.msra.mxu0 0.0
    %254 = vmatprep.subr.mxu0 0.0
    %255 = vmatpush2.xpose.msra.mxu0 0.0
    %256 = vmatprep.subr.mxu0 0.0
    %257 = vmatpush2.xpose.msra.mxu0 0.0
    %258 = vmatprep.subr.mxu0 0.0
    %259 = vmatpush2.xpose.msra.mxu0 0.0
    %260 = vmatprep.subr.mxu0 0.0
    %261 = vmatpush2.xpose.msra.mxu0 0.0
    %262 = vmatprep.subr.mxu0 0.0
    %263 = vmatpush2.xpose.msra.mxu0 0.0
    %264 = vmatprep.subr.mxu0 0.0
    %265 = vmatpush2.xpose.msra.mxu0 0.0
    %266 = vmatprep.subr.mxu0 0.0
    %267 = vmatpush2.xpose.msra.mxu0 0.0
    %268 = vmatprep.subr.mxu0 0.0
    %269 = vmatpush2.xpose.msra.mxu0 0.0
    %270 = vmatprep.mubr.f32.mxu0 0.0
    %271 = vmatmul.mubr.f32.gmra.mxu0 %v202
    %v272 = vpop.f32.mrf.mxu0
    %v273 = vadd.f32 %v197, %v272
    %v274 = vpop.f32.mrf.mxu0
    %275 = vdwg.mxu0
    %v276 = vsel %vm201, %v273, -inf
    %277 = vmax.xlane.f32.xlu0 %v276
    %v278 = vpop.xlane.xlu0 %277
    %v279 = vsub.f32 %v273, %v278
    %v280 = vmul.f32 %v279, 1.442695
    %v281 = vpow.pop %v280
    %v282 = vsel %vm201, %v281, 0.0
    %283 = vadd.xlane.f32.xlu0 %v282
    %v284 = vpop.xlane.xlu0 %283
    %v285 = vrcp.pop %v284
    %v286 = vmul.f32 %v281, %v285
    %287 = vrot.lane.b32.xlu0 %v186, 64
    %v288 = vpop.permute.xlu0 %287
    %v291 = vsel %vm201, %v286, 0
    %293 = vmatprep.subr.mxu0 0.0
    %294 = vmatpush1.msra.mxu0 0.0
    %295 = vmatprep.subr.mxu0 0.0
    %296 = vmatpush1.msra.mxu0 0.0
    %297 = vmatprep.subr.mxu0 0.0
    %298 = vmatpush1.msra.mxu0 0.0
    %299 = vmatprep.subr.mxu0 0.0
    %300 = vmatpush1.msra.mxu0 0.0
    %301 = vmatprep.subr.mxu0 0.0
    %302 = vmatpush1.msra.mxu0 0.0
    %303 = vmatprep.subr.mxu0 0.0
    %304 = vmatpush1.msra.mxu0 0.0
    %305 = vmatprep.subr.mxu0 0.0
    %306 = vmatpush1.msra.mxu0 0.0
    %307 = vmatprep.subr.mxu0 0.0
    %308 = vmatpush1.msra.mxu0 0.0
    %309 = vmatprep.subr.mxu0 0.0
    %310 = vmatpush1.msra.mxu0 0.0
    %311 = vmatprep.subr.mxu0 0.0
    %312 = vmatpush1.msra.mxu0 0.0
    %313 = vmatprep.subr.mxu0 0.0
    %314 = vmatpush1.msra.mxu0 0.0
    %315 = vmatprep.subr.mxu0 0.0
    %316 = vmatpush1.msra.mxu0 0.0
    %317 = vmatprep.subr.mxu0 0.0
    %318 = vmatpush1.msra.mxu0 0.0
    %319 = vmatprep.subr.mxu0 0.0
    %320 = vmatpush1.msra.mxu0 0.0
    %321 = vmatprep.subr.mxu0 0.0
    %322 = vmatpush1.msra.mxu0 0.0
    %323 = vmatprep.subr.mxu0 0.0
    %324 = vmatpush1.msra.mxu0 %v288
    %325 = vmatprep.subr.mxu0 0.0
    %326 = vmatpush2.msra.mxu0 0.0
    %327 = vmatprep.subr.mxu0 0.0
    %328 = vmatpush2.msra.mxu0 0.0
    %329 = vmatprep.subr.mxu0 0.0
    %330 = vmatpush2.msra.mxu0 0.0
    %331 = vmatprep.subr.mxu0 0.0
    %332 = vmatpush2.msra.mxu0 0.0
    %333 = vmatprep.subr.mxu0 0.0
    %334 = vmatpush2.msra.mxu0 0.0
    %335 = vmatprep.subr.mxu0 0.0
    %336 = vmatpush2.msra.mxu0 0.0
    %337 = vmatprep.subr.mxu0 0.0
    %338 = vmatpush2.msra.mxu0 0.0
    %339 = vmatprep.subr.mxu0 0.0
    %340 = vmatpush2.msra.mxu0 0.0
    %341 = vmatprep.subr.mxu0 0.0
    %342 = vmatpush2.msra.mxu0 0.0
    %343 = vmatprep.subr.mxu0 0.0
    %344 = vmatpush2.msra.mxu0 0.0
    %345 = vmatprep.subr.mxu0 0.0
    %346 = vmatpush2.msra.mxu0 0.0
    %347 = vmatprep.subr.mxu0 0.0
    %348 = vmatpush2.msra.mxu0 0.0
    %349 = vmatprep.subr.mxu0 0.0
    %350 = vmatpush2.msra.mxu0 0.0
    %351 = vmatprep.subr.mxu0 0.0
    %352 = vmatpush2.msra.mxu0 0.0
    %353 = vmatprep.subr.mxu0 0.0
    %354 = vmatpush2.msra.mxu0 0.0
    %355 = vmatprep.subr.mxu0 0.0
    %356 = vmatpush2.msra.mxu0 0.0
    %357 = vmatprep.mubr.f32.mxu0 0.0
    %358 = vmatmul.mubr.f32.gmra.mxu0 %v291
    %v359 = vpop.f32.mrf.mxu0
    %v360 = vadd.f32 0.0, %v359
    %v361 = vpop.f32.mrf.mxu0
    %362 = vdwg.mxu0
    %363 = vrot.lane.b32.xlu0 %v186, 120
    %v364 = vpop.permute.xlu0 %363
    %365 = vrot.lane.b32.xlu0 %v186, 88
    %v366 = vpop.permute.xlu0 %365
    %v367 = vsel %vm201, %v364, 0
    %v369 = vsel %vm201, %v366, 0
    %371 = vmatprep.subr.mxu0 0.0
    %372 = vmatpush1.xpose.msra.mxu0 0.0
    %373 = vmatprep.subr.mxu0 0.0
    %374 = vmatpush1.xpose.msra.mxu0 0.0
    %375 = vmatprep.subr.mxu0 0.0
    %376 = vmatpush1.xpose.msra.mxu0 0.0
    %377 = vmatprep.subr.mxu0 0.0
    %378 = vmatpush1.xpose.msra.mxu0 0.0
    %379 = vmatprep.subr.mxu0 0.0
    %380 = vmatpush1.xpose.msra.mxu0 0.0
    %381 = vmatprep.subr.mxu0 0.0
    %382 = vmatpush1.xpose.msra.mxu0 0.0
    %383 = vmatprep.subr.mxu0 0.0
    %384 = vmatpush1.xpose.msra.mxu0 0.0
    %385 = vmatprep.subr.mxu0 0.0
    %386 = vmatpush1.xpose.msra.mxu0 0.0
    %387 = vmatprep.subr.mxu0 0.0
    %388 = vmatpush1.xpose.msra.mxu0 0.0
    %389 = vmatprep.subr.mxu0 0.0
    %390 = vmatpush1.xpose.msra.mxu0 0.0
    %391 = vmatprep.subr.mxu0 0.0
    %392 = vmatpush1.xpose.msra.mxu0 0.0
    %393 = vmatprep.subr.mxu0 0.0
    %394 = vmatpush1.xpose.msra.mxu0 0.0
    %395 = vmatprep.subr.mxu0 0.0
    %396 = vmatpush1.xpose.msra.mxu0 0.0
    %397 = vmatprep.subr.mxu0 0.0
    %398 = vmatpush1.xpose.msra.mxu0 0.0
    %399 = vmatprep.subr.mxu0 0.0
    %400 = vmatpush1.xpose.msra.mxu0 0.0
    %401 = vmatprep.subr.mxu0 0.0
    %402 = vmatpush1.xpose.msra.mxu0 %v369
    %403 = vmatprep.subr.mxu0 0.0
    %404 = vmatpush2.xpose.msra.mxu0 0.0
    %405 = vmatprep.subr.mxu0 0.0
    %406 = vmatpush2.xpose.msra.mxu0 0.0
    %407 = vmatprep.subr.mxu0 0.0
    %408 = vmatpush2.xpose.msra.mxu0 0.0
    %409 = vmatprep.subr.mxu0 0.0
    %410 = vmatpush2.xpose.msra.mxu0 0.0
    %411 = vmatprep.subr.mxu0 0.0
    %412 = vmatpush2.xpose.msra.mxu0 0.0
    %413 = vmatprep.subr.mxu0 0.0
    %414 = vmatpush2.xpose.msra.mxu0 0.0
    %415 = vmatprep.subr.mxu0 0.0
    %416 = vmatpush2.xpose.msra.mxu0 0.0
    %417 = vmatprep.subr.mxu0 0.0
    %418 = vmatpush2.xpose.msra.mxu0 0.0
    %419 = vmatprep.subr.mxu0 0.0
    %420 = vmatpush2.xpose.msra.mxu0 0.0
    %421 = vmatprep.subr.mxu0 0.0
    %422 = vmatpush2.xpose.msra.mxu0 0.0
    %423 = vmatprep.subr.mxu0 0.0
    %424 = vmatpush2.xpose.msra.mxu0 0.0
    %425 = vmatprep.subr.mxu0 0.0
    %426 = vmatpush2.xpose.msra.mxu0 0.0
    %427 = vmatprep.subr.mxu0 0.0
    %428 = vmatpush2.xpose.msra.mxu0 0.0
    %429 = vmatprep.subr.mxu0 0.0
    %430 = vmatpush2.xpose.msra.mxu0 0.0
    %431 = vmatprep.subr.mxu0 0.0
    %432 = vmatpush2.xpose.msra.mxu0 0.0
    %433 = vmatprep.subr.mxu0 0.0
    %434 = vmatpush2.xpose.msra.mxu0 0.0
    %435 = vmatprep.mubr.f32.mxu0 0.0
    %436 = vmatmul.mubr.f32.gmra.mxu0 %v367
    %v437 = vpop.f32.mrf.mxu0
    %v438 = vadd.f32 %v197, %v437
    %v439 = vpop.f32.mrf.mxu0
    %440 = vdwg.mxu0
    %v441 = vsel %vm201, %v438, -inf
    %442 = vmax.xlane.f32.xlu0 %v441
    %v443 = vpop.xlane.xlu0 %442
    %v444 = vsub.f32 %v438, %v443
    %v445 = vmul.f32 %v444, 1.442695
    %v446 = vpow.pop %v445
    %v447 = vsel %vm201, %v446, 0.0
    %448 = vadd.xlane.f32.xlu0 %v447
    %v449 = vpop.xlane.xlu0 %448
    %v450 = vrcp.pop %v449
    %v451 = vmul.f32 %v446, %v450
    %452 = vrot.lane.b32.xlu0 %v186, 56
    %v453 = vpop.permute.xlu0 %452
    %v456 = vsel %vm201, %v451, 0
    %458 = vmatprep.subr.mxu0 0.0
    %459 = vmatpush1.msra.mxu0 0.0
    %460 = vmatprep.subr.mxu0 0.0
    %461 = vmatpush1.msra.mxu0 0.0
    %462 = vmatprep.subr.mxu0 0.0
    %463 = vmatpush1.msra.mxu0 0.0
    %464 = vmatprep.subr.mxu0 0.0
    %465 = vmatpush1.msra.mxu0 0.0
    %466 = vmatprep.subr.mxu0 0.0
    %467 = vmatpush1.msra.mxu0 0.0
    %468 = vmatprep.subr.mxu0 0.0
    %469 = vmatpush1.msra.mxu0 0.0
    %470 = vmatprep.subr.mxu0 0.0
    %471 = vmatpush1.msra.mxu0 0.0
    %472 = vmatprep.subr.mxu0 0.0
    %473 = vmatpush1.msra.mxu0 0.0
    %474 = vmatprep.subr.mxu0 0.0
    %475 = vmatpush1.msra.mxu0 0.0
    %476 = vmatprep.subr.mxu0 0.0
    %477 = vmatpush1.msra.mxu0 0.0
    %478 = vmatprep.subr.mxu0 0.0
    %479 = vmatpush1.msra.mxu0 0.0
    %480 = vmatprep.subr.mxu0 0.0
    %481 = vmatpush1.msra.mxu0 0.0
    %482 = vmatprep.subr.mxu0 0.0
    %483 = vmatpush1.msra.mxu0 0.0
    %484 = vmatprep.subr.mxu0 0.0
    %485 = vmatpush1.msra.mxu0 0.0
    %486 = vmatprep.subr.mxu0 0.0
    %487 = vmatpush1.msra.mxu0 0.0
    %488 = vmatprep.subr.mxu0 0.0
    %489 = vmatpush1.msra.mxu0 %v453
    %490 = vmatprep.subr.mxu0 0.0
    %491 = vmatpush2.msra.mxu0 0.0
    %492 = vmatprep.subr.mxu0 0.0
    %493 = vmatpush2.msra.mxu0 0.0
    %494 = vmatprep.subr.mxu0 0.0
    %495 = vmatpush2.msra.mxu0 0.0
    %496 = vmatprep.subr.mxu0 0.0
    %497 = vmatpush2.msra.mxu0 0.0
    %498 = vmatprep.subr.mxu0 0.0
    %499 = vmatpush2.msra.mxu0 0.0
    %500 = vmatprep.subr.mxu0 0.0
    %501 = vmatpush2.msra.mxu0 0.0
    %502 = vmatprep.subr.mxu0 0.0
    %503 = vmatpush2.msra.mxu0 0.0
    %504 = vmatprep.subr.mxu0 0.0
    %505 = vmatpush2.msra.mxu0 0.0
    %506 = vmatprep.subr.mxu0 0.0
    %507 = vmatpush2.msra.mxu0 0.0
    %508 = vmatprep.subr.mxu0 0.0
    %509 = vmatpush2.msra.mxu0 0.0
    %510 = vmatprep.subr.mxu0 0.0
    %511 = vmatpush2.msra.mxu0 0.0
    %512 = vmatprep.subr.mxu0 0.0
    %513 = vmatpush2.msra.mxu0 0.0
    %514 = vmatprep.subr.mxu0 0.0
    %515 = vmatpush2.msra.mxu0 0.0
    %516 = vmatprep.subr.mxu0 0.0
    %517 = vmatpush2.msra.mxu0 0.0
    %518 = vmatprep.subr.mxu0 0.0
    %519 = vmatpush2.msra.mxu0 0.0
    %520 = vmatprep.subr.mxu0 0.0
    %521 = vmatpush2.msra.mxu0 0.0
    %522 = vmatprep.mubr.f32.mxu0 0.0
    %523 = vmatmul.mubr.f32.gmra.mxu0 %v456
    %v524 = vpop.f32.mrf.mxu0
    %v525 = vadd.f32 0.0, %v524
    %v526 = vpop.f32.mrf.mxu0
    %527 = vdwg.mxu0
    %529 = vrot.lane.b32.xlu0 %v34, 32
    %v530 = vpop.permute.xlu0 %529
    %v533 = vsel %vm201, %v525, 0
    %535 = vmatprep.subr.mxu0 0.0
    %536 = vmatpush1.msra.mxu0 0.0
    %537 = vmatprep.subr.mxu0 0.0
    %538 = vmatpush1.msra.mxu0 0.0
    %539 = vmatprep.subr.mxu0 0.0
    %540 = vmatpush1.msra.mxu0 0.0
    %541 = vmatprep.subr.mxu0 0.0
    %542 = vmatpush1.msra.mxu0 0.0
    %543 = vmatprep.subr.mxu0 0.0
    %544 = vmatpush1.msra.mxu0 0.0
    %545 = vmatprep.subr.mxu0 0.0
    %546 = vmatpush1.msra.mxu0 0.0
    %547 = vmatprep.subr.mxu0 0.0
    %548 = vmatpush1.msra.mxu0 0.0
    %549 = vmatprep.subr.mxu0 0.0
    %550 = vmatpush1.msra.mxu0 0.0
    %551 = vmatprep.subr.mxu0 0.0
    %552 = vmatpush1.msra.mxu0 0.0
    %553 = vmatprep.subr.mxu0 0.0
    %554 = vmatpush1.msra.mxu0 0.0
    %555 = vmatprep.subr.mxu0 0.0
    %556 = vmatpush1.msra.mxu0 0.0
    %557 = vmatprep.subr.mxu0 0.0
    %558 = vmatpush1.msra.mxu0 0.0
    %559 = vmatprep.subr.mxu0 0.0
    %560 = vmatpush1.msra.mxu0 0.0
    %561 = vmatprep.subr.mxu0 0.0
    %562 = vmatpush1.msra.mxu0 0.0
    %563 = vmatprep.subr.mxu0 0.0
    %564 = vmatpush1.msra.mxu0 0.0
    %565 = vmatprep.subr.mxu0 0.0
    %566 = vmatpush1.msra.mxu0 %v530
    %567 = vmatprep.subr.mxu0 0.0
    %568 = vmatpush2.msra.mxu0 0.0
    %569 = vmatprep.subr.mxu0 0.0
    %570 = vmatpush2.msra.mxu0 0.0
    %571 = vmatprep.subr.mxu0 0.0
    %572 = vmatpush2.msra.mxu0 0.0
    %573 = vmatprep.subr.mxu0 0.0
    %574 = vmatpush2.msra.mxu0 0.0
    %575 = vmatprep.subr.mxu0 0.0
    %576 = vmatpush2.msra.mxu0 0.0
    %577 = vmatprep.subr.mxu0 0.0
    %578 = vmatpush2.msra.mxu0 0.0
    %579 = vmatprep.subr.mxu0 0.0
    %580 = vmatpush2.msra.mxu0 0.0
    %581 = vmatprep.subr.mxu0 0.0
    %582 = vmatpush2.msra.mxu0 0.0
    %583 = vmatprep.subr.mxu0 0.0
    %584 = vmatpush2.msra.mxu0 0.0
    %585 = vmatprep.subr.mxu0 0.0
    %586 = vmatpush2.msra.mxu0 0.0
    %587 = vmatprep.subr.mxu0 0.0
    %588 = vmatpush2.msra.mxu0 0.0
    %589 = vmatprep.subr.mxu0 0.0
    %590 = vmatpush2.msra.mxu0 0.0
    %591 = vmatprep.subr.mxu0 0.0
    %592 = vmatpush2.msra.mxu0 0.0
    %593 = vmatprep.subr.mxu0 0.0
    %594 = vmatpush2.msra.mxu0 0.0
    %595 = vmatprep.subr.mxu0 0.0
    %596 = vmatpush2.msra.mxu0 0.0
    %597 = vmatprep.subr.mxu0 0.0
    %598 = vmatpush2.msra.mxu0 0.0
    %599 = vmatprep.mubr.f32.mxu0 0.0
    %600 = vmatmul.mubr.f32.gmra.mxu0 %v533
    %v601 = vpop.f32.mrf.mxu0
    %v602 = vadd.f32 0.0, %v601
    %v603 = vpop.f32.mrf.mxu0
    %604 = vdwg.mxu0
    %606 = vrot.lane.b32.xlu0 %v33, 32
    %v607 = vpop.permute.xlu0 %606
    %v610 = vsel %vm201, %v360, 0
    %612 = vmatprep.subr.mxu0 0.0
    %613 = vmatpush1.msra.mxu0 0.0
    %614 = vmatprep.subr.mxu0 0.0
    %615 = vmatpush1.msra.mxu0 0.0
    %616 = vmatprep.subr.mxu0 0.0
    %617 = vmatpush1.msra.mxu0 0.0
    %618 = vmatprep.subr.mxu0 0.0
    %619 = vmatpush1.msra.mxu0 0.0
    %620 = vmatprep.subr.mxu0 0.0
    %621 = vmatpush1.msra.mxu0 0.0
    %622 = vmatprep.subr.mxu0 0.0
    %623 = vmatpush1.msra.mxu0 0.0
    %624 = vmatprep.subr.mxu0 0.0
    %625 = vmatpush1.msra.mxu0 0.0
    %626 = vmatprep.subr.mxu0 0.0
    %627 = vmatpush1.msra.mxu0 0.0
    %628 = vmatprep.subr.mxu0 0.0
    %629 = vmatpush1.msra.mxu0 0.0
    %630 = vmatprep.subr.mxu0 0.0
    %631 = vmatpush1.msra.mxu0 0.0
    %632 = vmatprep.subr.mxu0 0.0
    %633 = vmatpush1.msra.mxu0 0.0
    %634 = vmatprep.subr.mxu0 0.0
    %635 = vmatpush1.msra.mxu0 0.0
    %636 = vmatprep.subr.mxu0 0.0
    %637 = vmatpush1.msra.mxu0 0.0
    %638 = vmatprep.subr.mxu0 0.0
    %639 = vmatpush1.msra.mxu0 0.0
    %640 = vmatprep.subr.mxu0 0.0
    %641 = vmatpush1.msra.mxu0 0.0
    %642 = vmatprep.subr.mxu0 0.0
    %643 = vmatpush1.msra.mxu0 %v607
    %644 = vmatprep.subr.mxu0 0.0
    %645 = vmatpush2.msra.mxu0 0.0
    %646 = vmatprep.subr.mxu0 0.0
    %647 = vmatpush2.msra.mxu0 0.0
    %648 = vmatprep.subr.mxu0 0.0
    %649 = vmatpush2.msra.mxu0 0.0
    %650 = vmatprep.subr.mxu0 0.0
    %651 = vmatpush2.msra.mxu0 0.0
    %652 = vmatprep.subr.mxu0 0.0
    %653 = vmatpush2.msra.mxu0 0.0
    %654 = vmatprep.subr.mxu0 0.0
    %655 = vmatpush2.msra.mxu0 0.0
    %656 = vmatprep.subr.mxu0 0.0
    %657 = vmatpush2.msra.mxu0 0.0
    %658 = vmatprep.subr.mxu0 0.0
    %659 = vmatpush2.msra.mxu0 0.0
    %660 = vmatprep.subr.mxu0 0.0
    %661 = vmatpush2.msra.mxu0 0.0
    %662 = vmatprep.subr.mxu0 0.0
    %663 = vmatpush2.msra.mxu0 0.0
    %664 = vmatprep.subr.mxu0 0.0
    %665 = vmatpush2.msra.mxu0 0.0
    %666 = vmatprep.subr.mxu0 0.0
    %667 = vmatpush2.msra.mxu0 0.0
    %668 = vmatprep.subr.mxu0 0.0
    %669 = vmatpush2.msra.mxu0 0.0
    %670 = vmatprep.subr.mxu0 0.0
    %671 = vmatpush2.msra.mxu0 0.0
    %672 = vmatprep.subr.mxu0 0.0
    %673 = vmatpush2.msra.mxu0 0.0
    %674 = vmatprep.subr.mxu0 0.0
    %675 = vmatpush2.msra.mxu0 0.0
    %676 = vmatprep.mubr.f32.mxu0 0.0
    %677 = vmatmul.mubr.f32.gmra.mxu0 %v610
    %v678 = vpop.f32.mrf.mxu0
    %v679 = vadd.f32 %v602, %v678
    %v680 = vpop.f32.mrf.mxu0
    %681 = vdwg.mxu0
    %682 = vrot.lane.b32.xlu0 %v186, 112
    %v683 = vpop.permute.xlu0 %682
    %684 = vrot.lane.b32.xlu0 %v186, 80
    %v685 = vpop.permute.xlu0 %684
    %v686 = vsel %vm201, %v683, 0
    %v688 = vsel %vm201, %v685, 0
    %690 = vmatprep.subr.mxu0 0.0
    %691 = vmatpush1.xpose.msra.mxu0 0.0
    %692 = vmatprep.subr.mxu0 0.0
    %693 = vmatpush1.xpose.msra.mxu0 0.0
    %694 = vmatprep.subr.mxu0 0.0
    %695 = vmatpush1.xpose.msra.mxu0 0.0
    %696 = vmatprep.subr.mxu0 0.0
    %697 = vmatpush1.xpose.msra.mxu0 0.0
    %698 = vmatprep.subr.mxu0 0.0
    %699 = vmatpush1.xpose.msra.mxu0 0.0
    %700 = vmatprep.subr.mxu0 0.0
    %701 = vmatpush1.xpose.msra.mxu0 0.0
    %702 = vmatprep.subr.mxu0 0.0
    %703 = vmatpush1.xpose.msra.mxu0 0.0
    %704 = vmatprep.subr.mxu0 0.0
    %705 = vmatpush1.xpose.msra.mxu0 0.0
    %706 = vmatprep.subr.mxu0 0.0
    %707 = vmatpush1.xpose.msra.mxu0 0.0
    %708 = vmatprep.subr.mxu0 0.0
    %709 = vmatpush1.xpose.msra.mxu0 0.0
    %710 = vmatprep.subr.mxu0 0.0
    %711 = vmatpush1.xpose.msra.mxu0 0.0
    %712 = vmatprep.subr.mxu0 0.0
    %713 = vmatpush1.xpose.msra.mxu0 0.0
    %714 = vmatprep.subr.mxu0 0.0
    %715 = vmatpush1.xpose.msra.mxu0 0.0
    %716 = vmatprep.subr.mxu0 0.0
    %717 = vmatpush1.xpose.msra.mxu0 0.0
    %718 = vmatprep.subr.mxu0 0.0
    %719 = vmatpush1.xpose.msra.mxu0 0.0
    %720 = vmatprep.subr.mxu0 0.0
    %721 = vmatpush1.xpose.msra.mxu0 %v688
    %722 = vmatprep.subr.mxu0 0.0
    %723 = vmatpush2.xpose.msra.mxu0 0.0
    %724 = vmatprep.subr.mxu0 0.0
    %725 = vmatpush2.xpose.msra.mxu0 0.0
    %726 = vmatprep.subr.mxu0 0.0
    %727 = vmatpush2.xpose.msra.mxu0 0.0
    %728 = vmatprep.subr.mxu0 0.0
    %729 = vmatpush2.xpose.msra.mxu0 0.0
    %730 = vmatprep.subr.mxu0 0.0
    %731 = vmatpush2.xpose.msra.mxu0 0.0
    %732 = vmatprep.subr.mxu0 0.0
    %733 = vmatpush2.xpose.msra.mxu0 0.0
    %734 = vmatprep.subr.mxu0 0.0
    %735 = vmatpush2.xpose.msra.mxu0 0.0
    %736 = vmatprep.subr.mxu0 0.0
    %737 = vmatpush2.xpose.msra.mxu0 0.0
    %738 = vmatprep.subr.mxu0 0.0
    %739 = vmatpush2.xpose.msra.mxu0 0.0
    %740 = vmatprep.subr.mxu0 0.0
    %741 = vmatpush2.xpose.msra.mxu0 0.0
    %742 = vmatprep.subr.mxu0 0.0
    %743 = vmatpush2.xpose.msra.mxu0 0.0
    %744 = vmatprep.subr.mxu0 0.0
    %745 = vmatpush2.xpose.msra.mxu0 0.0
    %746 = vmatprep.subr.mxu0 0.0
    %747 = vmatpush2.xpose.msra.mxu0 0.0
    %748 = vmatprep.subr.mxu0 0.0
    %749 = vmatpush2.xpose.msra.mxu0 0.0
    %750 = vmatprep.subr.mxu0 0.0
    %751 = vmatpush2.xpose.msra.mxu0 0.0
    %752 = vmatprep.subr.mxu0 0.0
    %753 = vmatpush2.xpose.msra.mxu0 0.0
    %754 = vmatprep.mubr.f32.mxu0 0.0
    %755 = vmatmul.mubr.f32.gmra.mxu0 %v686
    %v756 = vpop.f32.mrf.mxu0
    %v757 = vadd.f32 %v197, %v756
    %v758 = vpop.f32.mrf.mxu0
    %759 = vdwg.mxu0
    %v760 = vsel %vm201, %v757, -inf
    %761 = vmax.xlane.f32.xlu0 %v760
    %v762 = vpop.xlane.xlu0 %761
    %v763 = vsub.f32 %v757, %v762
    %v764 = vmul.f32 %v763, 1.442695
    %v765 = vpow.pop %v764
    %v766 = vsel %vm201, %v765, 0.0
    %767 = vadd.xlane.f32.xlu0 %v766
    %v768 = vpop.xlane.xlu0 %767
    %v769 = vrcp.pop %v768
    %v770 = vmul.f32 %v765, %v769
    %771 = vrot.lane.b32.xlu0 %v186, 48
    %v772 = vpop.permute.xlu0 %771
    %v775 = vsel %vm201, %v770, 0
    %777 = vmatprep.subr.mxu0 0.0
    %778 = vmatpush1.msra.mxu0 0.0
    %779 = vmatprep.subr.mxu0 0.0
    %780 = vmatpush1.msra.mxu0 0.0
    %781 = vmatprep.subr.mxu0 0.0
    %782 = vmatpush1.msra.mxu0 0.0
    %783 = vmatprep.subr.mxu0 0.0
    %784 = vmatpush1.msra.mxu0 0.0
    %785 = vmatprep.subr.mxu0 0.0
    %786 = vmatpush1.msra.mxu0 0.0
    %787 = vmatprep.subr.mxu0 0.0
    %788 = vmatpush1.msra.mxu0 0.0
    %789 = vmatprep.subr.mxu0 0.0
    %790 = vmatpush1.msra.mxu0 0.0
    %791 = vmatprep.subr.mxu0 0.0
    %792 = vmatpush1.msra.mxu0 0.0
    %793 = vmatprep.subr.mxu0 0.0
    %794 = vmatpush1.msra.mxu0 0.0
    %795 = vmatprep.subr.mxu0 0.0
    %796 = vmatpush1.msra.mxu0 0.0
    %797 = vmatprep.subr.mxu0 0.0
    %798 = vmatpush1.msra.mxu0 0.0
    %799 = vmatprep.subr.mxu0 0.0
    %800 = vmatpush1.msra.mxu0 0.0
    %801 = vmatprep.subr.mxu0 0.0
    %802 = vmatpush1.msra.mxu0 0.0
    %803 = vmatprep.subr.mxu0 0.0
    %804 = vmatpush1.msra.mxu0 0.0
    %805 = vmatprep.subr.mxu0 0.0
    %806 = vmatpush1.msra.mxu0 0.0
    %807 = vmatprep.subr.mxu0 0.0
    %808 = vmatpush1.msra.mxu0 %v772
    %809 = vmatprep.subr.mxu0 0.0
    %810 = vmatpush2.msra.mxu0 0.0
    %811 = vmatprep.subr.mxu0 0.0
    %812 = vmatpush2.msra.mxu0 0.0
    %813 = vmatprep.subr.mxu0 0.0
    %814 = vmatpush2.msra.mxu0 0.0
    %815 = vmatprep.subr.mxu0 0.0
    %816 = vmatpush2.msra.mxu0 0.0
    %817 = vmatprep.subr.mxu0 0.0
    %818 = vmatpush2.msra.mxu0 0.0
    %819 = vmatprep.subr.mxu0 0.0
    %820 = vmatpush2.msra.mxu0 0.0
    %821 = vmatprep.subr.mxu0 0.0
    %822 = vmatpush2.msra.mxu0 0.0
    %823 = vmatprep.subr.mxu0 0.0
    %824 = vmatpush2.msra.mxu0 0.0
    %825 = vmatprep.subr.mxu0 0.0
    %826 = vmatpush2.msra.mxu0 0.0
    %827 = vmatprep.subr.mxu0 0.0
    %828 = vmatpush2.msra.mxu0 0.0
    %829 = vmatprep.subr.mxu0 0.0
    %830 = vmatpush2.msra.mxu0 0.0
    %831 = vmatprep.subr.mxu0 0.0
    %832 = vmatpush2.msra.mxu0 0.0
    %833 = vmatprep.subr.mxu0 0.0
    %834 = vmatpush2.msra.mxu0 0.0
    %835 = vmatprep.subr.mxu0 0.0
    %836 = vmatpush2.msra.mxu0 0.0
    %837 = vmatprep.subr.mxu0 0.0
    %838 = vmatpush2.msra.mxu0 0.0
    %839 = vmatprep.subr.mxu0 0.0
    %840 = vmatpush2.msra.mxu0 0.0
    %841 = vmatprep.mubr.f32.mxu0 0.0
    %842 = vmatmul.mubr.f32.gmra.mxu0 %v775
    %v843 = vpop.f32.mrf.mxu0
    %v844 = vadd.f32 0.0, %v843
    %v845 = vpop.f32.mrf.mxu0
    %846 = vdwg.mxu0
    %848 = vrot.lane.b32.xlu0 %v35, 32
    %v849 = vpop.permute.xlu0 %848
    %v852 = vsel %vm201, %v844, 0
    %854 = vmatprep.subr.mxu0 0.0
    %855 = vmatpush1.msra.mxu0 0.0
    %856 = vmatprep.subr.mxu0 0.0
    %857 = vmatpush1.msra.mxu0 0.0
    %858 = vmatprep.subr.mxu0 0.0
    %859 = vmatpush1.msra.mxu0 0.0
    %860 = vmatprep.subr.mxu0 0.0
    %861 = vmatpush1.msra.mxu0 0.0
    %862 = vmatprep.subr.mxu0 0.0
    %863 = vmatpush1.msra.mxu0 0.0
    %864 = vmatprep.subr.mxu0 0.0
    %865 = vmatpush1.msra.mxu0 0.0
    %866 = vmatprep.subr.mxu0 0.0
    %867 = vmatpush1.msra.mxu0 0.0
    %868 = vmatprep.subr.mxu0 0.0
    %869 = vmatpush1.msra.mxu0 0.0
    %870 = vmatprep.subr.mxu0 0.0
    %871 = vmatpush1.msra.mxu0 0.0
    %872 = vmatprep.subr.mxu0 0.0
    %873 = vmatpush1.msra.mxu0 0.0
    %874 = vmatprep.subr.mxu0 0.0
    %875 = vmatpush1.msra.mxu0 0.0
    %876 = vmatprep.subr.mxu0 0.0
    %877 = vmatpush1.msra.mxu0 0.0
    %878 = vmatprep.subr.mxu0 0.0
    %879 = vmatpush1.msra.mxu0 0.0
    %880 = vmatprep.subr.mxu0 0.0
    %881 = vmatpush1.msra.mxu0 0.0
    %882 = vmatprep.subr.mxu0 0.0
    %883 = vmatpush1.msra.mxu0 0.0
    %884 = vmatprep.subr.mxu0 0.0
    %885 = vmatpush1.msra.mxu0 %v849
    %886 = vmatprep.subr.mxu0 0.0
    %887 = vmatpush2.msra.mxu0 0.0
    %888 = vmatprep.subr.mxu0 0.0
    %889 = vmatpush2.msra.mxu0 0.0
    %890 = vmatprep.subr.mxu0 0.0
    %891 = vmatpush2.msra.mxu0 0.0
    %892 = vmatprep.subr.mxu0 0.0
    %893 = vmatpush2.msra.mxu0 0.0
    %894 = vmatprep.subr.mxu0 0.0
    %895 = vmatpush2.msra.mxu0 0.0
    %896 = vmatprep.subr.mxu0 0.0
    %897 = vmatpush2.msra.mxu0 0.0
    %898 = vmatprep.subr.mxu0 0.0
    %899 = vmatpush2.msra.mxu0 0.0
    %900 = vmatprep.subr.mxu0 0.0
    %901 = vmatpush2.msra.mxu0 0.0
    %902 = vmatprep.subr.mxu0 0.0
    %903 = vmatpush2.msra.mxu0 0.0
    %904 = vmatprep.subr.mxu0 0.0
    %905 = vmatpush2.msra.mxu0 0.0
    %906 = vmatprep.subr.mxu0 0.0
    %907 = vmatpush2.msra.mxu0 0.0
    %908 = vmatprep.subr.mxu0 0.0
    %909 = vmatpush2.msra.mxu0 0.0
    %910 = vmatprep.subr.mxu0 0.0
    %911 = vmatpush2.msra.mxu0 0.0
    %912 = vmatprep.subr.mxu0 0.0
    %913 = vmatpush2.msra.mxu0 0.0
    %914 = vmatprep.subr.mxu0 0.0
    %915 = vmatpush2.msra.mxu0 0.0
    %916 = vmatprep.subr.mxu0 0.0
    %917 = vmatpush2.msra.mxu0 0.0
    %918 = vmatprep.mubr.f32.mxu0 0.0
    %919 = vmatmul.mubr.f32.gmra.mxu0 %v852
    %v920 = vpop.f32.mrf.mxu0
    %v921 = vadd.f32 0.0, %v920
    %v922 = vpop.f32.mrf.mxu0
    %923 = vdwg.mxu0
    %v924 = vadd.f32 %v679, %v921
    %925 = vrot.lane.b32.xlu0 %v186, 104
    %v926 = vpop.permute.xlu0 %925
    %927 = vrot.lane.b32.xlu0 %v186, 72
    %v928 = vpop.permute.xlu0 %927
    %v929 = vsel %vm201, %v926, 0
    %v931 = vsel %vm201, %v928, 0
    %933 = vmatprep.subr.mxu0 0.0
    %934 = vmatpush1.xpose.msra.mxu0 0.0
    %935 = vmatprep.subr.mxu0 0.0
    %936 = vmatpush1.xpose.msra.mxu0 0.0
    %937 = vmatprep.subr.mxu0 0.0
    %938 = vmatpush1.xpose.msra.mxu0 0.0
    %939 = vmatprep.subr.mxu0 0.0
    %940 = vmatpush1.xpose.msra.mxu0 0.0
    %941 = vmatprep.subr.mxu0 0.0
    %942 = vmatpush1.xpose.msra.mxu0 0.0
    %943 = vmatprep.subr.mxu0 0.0
    %944 = vmatpush1.xpose.msra.mxu0 0.0
    %945 = vmatprep.subr.mxu0 0.0
    %946 = vmatpush1.xpose.msra.mxu0 0.0
    %947 = vmatprep.subr.mxu0 0.0
    %948 = vmatpush1.xpose.msra.mxu0 0.0
    %949 = vmatprep.subr.mxu0 0.0
    %950 = vmatpush1.xpose.msra.mxu0 0.0
    %951 = vmatprep.subr.mxu0 0.0
    %952 = vmatpush1.xpose.msra.mxu0 0.0
    %953 = vmatprep.subr.mxu0 0.0
    %954 = vmatpush1.xpose.msra.mxu0 0.0
    %955 = vmatprep.subr.mxu0 0.0
    %956 = vmatpush1.xpose.msra.mxu0 0.0
    %957 = vmatprep.subr.mxu0 0.0
    %958 = vmatpush1.xpose.msra.mxu0 0.0
    %959 = vmatprep.subr.mxu0 0.0
    %960 = vmatpush1.xpose.msra.mxu0 0.0
    %961 = vmatprep.subr.mxu0 0.0
    %962 = vmatpush1.xpose.msra.mxu0 0.0
    %963 = vmatprep.subr.mxu0 0.0
    %964 = vmatpush1.xpose.msra.mxu0 %v931
    %965 = vmatprep.subr.mxu0 0.0
    %966 = vmatpush2.xpose.msra.mxu0 0.0
    %967 = vmatprep.subr.mxu0 0.0
    %968 = vmatpush2.xpose.msra.mxu0 0.0
    %969 = vmatprep.subr.mxu0 0.0
    %970 = vmatpush2.xpose.msra.mxu0 0.0
    %971 = vmatprep.subr.mxu0 0.0
    %972 = vmatpush2.xpose.msra.mxu0 0.0
    %973 = vmatprep.subr.mxu0 0.0
    %974 = vmatpush2.xpose.msra.mxu0 0.0
    %975 = vmatprep.subr.mxu0 0.0
    %976 = vmatpush2.xpose.msra.mxu0 0.0
    %977 = vmatprep.subr.mxu0 0.0
    %978 = vmatpush2.xpose.msra.mxu0 0.0
    %979 = vmatprep.subr.mxu0 0.0
    %980 = vmatpush2.xpose.msra.mxu0 0.0
    %981 = vmatprep.subr.mxu0 0.0
    %982 = vmatpush2.xpose.msra.mxu0 0.0
    %983 = vmatprep.subr.mxu0 0.0
    %984 = vmatpush2.xpose.msra.mxu0 0.0
    %985 = vmatprep.subr.mxu0 0.0
    %986 = vmatpush2.xpose.msra.mxu0 0.0
    %987 = vmatprep.subr.mxu0 0.0
    %988 = vmatpush2.xpose.msra.mxu0 0.0
    %989 = vmatprep.subr.mxu0 0.0
    %990 = vmatpush2.xpose.msra.mxu0 0.0
    %991 = vmatprep.subr.mxu0 0.0
    %992 = vmatpush2.xpose.msra.mxu0 0.0
    %993 = vmatprep.subr.mxu0 0.0
    %994 = vmatpush2.xpose.msra.mxu0 0.0
    %995 = vmatprep.subr.mxu0 0.0
    %996 = vmatpush2.xpose.msra.mxu0 0.0
    %997 = vmatprep.mubr.f32.mxu0 0.0
    %998 = vmatmul.mubr.f32.gmra.mxu0 %v929
    %v999 = vpop.f32.mrf.mxu0
    %v1000 = vadd.f32 %v197, %v999
    %v1001 = vpop.f32.mrf.mxu0
    %1002 = vdwg.mxu0
    %v1003 = vsel %vm201, %v1000, -inf
    %1004 = vmax.xlane.f32.xlu0 %v1003
    %v1005 = vpop.xlane.xlu0 %1004
    %v1006 = vsub.f32 %v1000, %v1005
    %v1007 = vmul.f32 %v1006, 1.442695
    %v1008 = vpow.pop %v1007
    %v1009 = vsel %vm201, %v1008, 0.0
    %1010 = vadd.xlane.f32.xlu0 %v1009
    %v1011 = vpop.xlane.xlu0 %1010
    %v1012 = vrcp.pop %v1011
    %v1013 = vmul.f32 %v1008, %v1012
    %1014 = vrot.lane.b32.xlu0 %v186, 40
    %v1015 = vpop.permute.xlu0 %1014
    %v1018 = vsel %vm201, %v1013, 0
    %1020 = vmatprep.subr.mxu0 0.0
    %1021 = vmatpush1.msra.mxu0 0.0
    %1022 = vmatprep.subr.mxu0 0.0
    %1023 = vmatpush1.msra.mxu0 0.0
    %1024 = vmatprep.subr.mxu0 0.0
    %1025 = vmatpush1.msra.mxu0 0.0
    %1026 = vmatprep.subr.mxu0 0.0
    %1027 = vmatpush1.msra.mxu0 0.0
    %1028 = vmatprep.subr.mxu0 0.0
    %1029 = vmatpush1.msra.mxu0 0.0
    %1030 = vmatprep.subr.mxu0 0.0
    %1031 = vmatpush1.msra.mxu0 0.0
    %1032 = vmatprep.subr.mxu0 0.0
    %1033 = vmatpush1.msra.mxu0 0.0
    %1034 = vmatprep.subr.mxu0 0.0
    %1035 = vmatpush1.msra.mxu0 0.0
    %1036 = vmatprep.subr.mxu0 0.0
    %1037 = vmatpush1.msra.mxu0 0.0
    %1038 = vmatprep.subr.mxu0 0.0
    %1039 = vmatpush1.msra.mxu0 0.0
    %1040 = vmatprep.subr.mxu0 0.0
    %1041 = vmatpush1.msra.mxu0 0.0
    %1042 = vmatprep.subr.mxu0 0.0
    %1043 = vmatpush1.msra.mxu0 0.0
    %1044 = vmatprep.subr.mxu0 0.0
    %1045 = vmatpush1.msra.mxu0 0.0
    %1046 = vmatprep.subr.mxu0 0.0
    %1047 = vmatpush1.msra.mxu0 0.0
    %1048 = vmatprep.subr.mxu0 0.0
    %1049 = vmatpush1.msra.mxu0 0.0
    %1050 = vmatprep.subr.mxu0 0.0
    %1051 = vmatpush1.msra.mxu0 %v1015
    %1052 = vmatprep.subr.mxu0 0.0
    %1053 = vmatpush2.msra.mxu0 0.0
    %1054 = vmatprep.subr.mxu0 0.0
    %1055 = vmatpush2.msra.mxu0 0.0
    %1056 = vmatprep.subr.mxu0 0.0
    %1057 = vmatpush2.msra.mxu0 0.0
    %1058 = vmatprep.subr.mxu0 0.0
    %1059 = vmatpush2.msra.mxu0 0.0
    %1060 = vmatprep.subr.mxu0 0.0
    %1061 = vmatpush2.msra.mxu0 0.0
    %1062 = vmatprep.subr.mxu0 0.0
    %1063 = vmatpush2.msra.mxu0 0.0
    %1064 = vmatprep.subr.mxu0 0.0
    %1065 = vmatpush2.msra.mxu0 0.0
    %1066 = vmatprep.subr.mxu0 0.0
    %1067 = vmatpush2.msra.mxu0 0.0
    %1068 = vmatprep.subr.mxu0 0.0
    %1069 = vmatpush2.msra.mxu0 0.0
    %1070 = vmatprep.subr.mxu0 0.0
    %1071 = vmatpush2.msra.mxu0 0.0
    %1072 = vmatprep.subr.mxu0 0.0
    %1073 = vmatpush2.msra.mxu0 0.0
    %1074 = vmatprep.subr.mxu0 0.0
    %1075 = vmatpush2.msra.mxu0 0.0
    %1076 = vmatprep.subr.mxu0 0.0
    %1077 = vmatpush2.msra.mxu0 0.0
    %1078 = vmatprep.subr.mxu0 0.0
    %1079 = vmatpush2.msra.mxu0 0.0
    %1080 = vmatprep.subr.mxu0 0.0
    %1081 = vmatpush2.msra.mxu0 0.0
    %1082 = vmatprep.subr.mxu0 0.0
    %1083 = vmatpush2.msra.mxu0 0.0
    %1084 = vmatprep.mubr.f32.mxu0 0.0
    %1085 = vmatmul.mubr.f32.gmra.mxu0 %v1018
    %v1086 = vpop.f32.mrf.mxu0
    %v1087 = vadd.f32 0.0, %v1086
    %v1088 = vpop.f32.mrf.mxu0
    %1089 = vdwg.mxu0
    %1091 = vrot.lane.b32.xlu0 %v36, 32
    %v1092 = vpop.permute.xlu0 %1091
    %v1095 = vsel %vm201, %v1087, 0
    %1097 = vmatprep.subr.mxu0 0.0
    %1098 = vmatpush1.msra.mxu0 0.0
    %1099 = vmatprep.subr.mxu0 0.0
    %1100 = vmatpush1.msra.mxu0 0.0
    %1101 = vmatprep.subr.mxu0 0.0
    %1102 = vmatpush1.msra.mxu0 0.0
    %1103 = vmatprep.subr.mxu0 0.0
    %1104 = vmatpush1.msra.mxu0 0.0
    %1105 = vmatprep.subr.mxu0 0.0
    %1106 = vmatpush1.msra.mxu0 0.0
    %1107 = vmatprep.subr.mxu0 0.0
    %1108 = vmatpush1.msra.mxu0 0.0
    %1109 = vmatprep.subr.mxu0 0.0
    %1110 = vmatpush1.msra.mxu0 0.0
    %1111 = vmatprep.subr.mxu0 0.0
    %1112 = vmatpush1.msra.mxu0 0.0
    %1113 = vmatprep.subr.mxu0 0.0
    %1114 = vmatpush1.msra.mxu0 0.0
    %1115 = vmatprep.subr.mxu0 0.0
    %1116 = vmatpush1.msra.mxu0 0.0
    %1117 = vmatprep.subr.mxu0 0.0
    %1118 = vmatpush1.msra.mxu0 0.0
    %1119 = vmatprep.subr.mxu0 0.0
    %1120 = vmatpush1.msra.mxu0 0.0
    %1121 = vmatprep.subr.mxu0 0.0
    %1122 = vmatpush1.msra.mxu0 0.0
    %1123 = vmatprep.subr.mxu0 0.0
    %1124 = vmatpush1.msra.mxu0 0.0
    %1125 = vmatprep.subr.mxu0 0.0
    %1126 = vmatpush1.msra.mxu0 0.0
    %1127 = vmatprep.subr.mxu0 0.0
    %1128 = vmatpush1.msra.mxu0 %v1092
    %1129 = vmatprep.subr.mxu0 0.0
    %1130 = vmatpush2.msra.mxu0 0.0
    %1131 = vmatprep.subr.mxu0 0.0
    %1132 = vmatpush2.msra.mxu0 0.0
    %1133 = vmatprep.subr.mxu0 0.0
    %1134 = vmatpush2.msra.mxu0 0.0
    %1135 = vmatprep.subr.mxu0 0.0
    %1136 = vmatpush2.msra.mxu0 0.0
    %1137 = vmatprep.subr.mxu0 0.0
    %1138 = vmatpush2.msra.mxu0 0.0
    %1139 = vmatprep.subr.mxu0 0.0
    %1140 = vmatpush2.msra.mxu0 0.0
    %1141 = vmatprep.subr.mxu0 0.0
    %1142 = vmatpush2.msra.mxu0 0.0
    %1143 = vmatprep.subr.mxu0 0.0
    %1144 = vmatpush2.msra.mxu0 0.0
    %1145 = vmatprep.subr.mxu0 0.0
    %1146 = vmatpush2.msra.mxu0 0.0
    %1147 = vmatprep.subr.mxu0 0.0
    %1148 = vmatpush2.msra.mxu0 0.0
    %1149 = vmatprep.subr.mxu0 0.0
    %1150 = vmatpush2.msra.mxu0 0.0
    %1151 = vmatprep.subr.mxu0 0.0
    %1152 = vmatpush2.msra.mxu0 0.0
    %1153 = vmatprep.subr.mxu0 0.0
    %1154 = vmatpush2.msra.mxu0 0.0
    %1155 = vmatprep.subr.mxu0 0.0
    %1156 = vmatpush2.msra.mxu0 0.0
    %1157 = vmatprep.subr.mxu0 0.0
    %1158 = vmatpush2.msra.mxu0 0.0
    %1159 = vmatprep.subr.mxu0 0.0
    %1160 = vmatpush2.msra.mxu0 0.0
    %1161 = vmatprep.mubr.f32.mxu0 0.0
    %1162 = vmatmul.mubr.f32.gmra.mxu0 %v1095
    %v1163 = vpop.f32.mrf.mxu0
    %v1164 = vadd.f32 0.0, %v1163
    %v1165 = vpop.f32.mrf.mxu0
    %1166 = vdwg.mxu0
    %v1167 = vadd.f32 %v924, %v1164
    %v1168 = vlaneseq
    %v1169 = vshrl.u32 %v1168, 7
    %v1170 = vsub.s32 1, %v1169
    %v1171 = vrot.slane %v32, %v1170
    %1173 = vrot.lane.b32.xlu0 %v191, 96
    %v1174 = vpop.permute.xlu0 %1173
    %v1175 = vsel %vm201, %v191, 0
    %v1177 = vsel %vm201, %v1174, 0
    %1179 = vmatprep.subr.mxu0 0.0
    %1180 = vmatpush1.xpose.msra.mxu0 0.0
    %1181 = vmatprep.subr.mxu0 0.0
    %1182 = vmatpush1.xpose.msra.mxu0 0.0
    %1183 = vmatprep.subr.mxu0 0.0
    %1184 = vmatpush1.xpose.msra.mxu0 0.0
    %1185 = vmatprep.subr.mxu0 0.0
    %1186 = vmatpush1.xpose.msra.mxu0 0.0
    %1187 = vmatprep.subr.mxu0 0.0
    %1188 = vmatpush1.xpose.msra.mxu0 0.0
    %1189 = vmatprep.subr.mxu0 0.0
    %1190 = vmatpush1.xpose.msra.mxu0 0.0
    %1191 = vmatprep.subr.mxu0 0.0
    %1192 = vmatpush1.xpose.msra.mxu0 0.0
    %1193 = vmatprep.subr.mxu0 0.0
    %1194 = vmatpush1.xpose.msra.mxu0 0.0
    %1195 = vmatprep.subr.mxu0 0.0
    %1196 = vmatpush1.xpose.msra.mxu0 0.0
    %1197 = vmatprep.subr.mxu0 0.0
    %1198 = vmatpush1.xpose.msra.mxu0 0.0
    %1199 = vmatprep.subr.mxu0 0.0
    %1200 = vmatpush1.xpose.msra.mxu0 0.0
    %1201 = vmatprep.subr.mxu0 0.0
    %1202 = vmatpush1.xpose.msra.mxu0 0.0
    %1203 = vmatprep.subr.mxu0 0.0
    %1204 = vmatpush1.xpose.msra.mxu0 0.0
    %1205 = vmatprep.subr.mxu0 0.0
    %1206 = vmatpush1.xpose.msra.mxu0 0.0
    %1207 = vmatprep.subr.mxu0 0.0
    %1208 = vmatpush1.xpose.msra.mxu0 0.0
    %1209 = vmatprep.subr.mxu0 0.0
    %1210 = vmatpush1.xpose.msra.mxu0 %v1177
    %1211 = vmatprep.subr.mxu0 0.0
    %1212 = vmatpush2.xpose.msra.mxu0 0.0
    %1213 = vmatprep.subr.mxu0 0.0
    %1214 = vmatpush2.xpose.msra.mxu0 0.0
    %1215 = vmatprep.subr.mxu0 0.0
    %1216 = vmatpush2.xpose.msra.mxu0 0.0
    %1217 = vmatprep.subr.mxu0 0.0
    %1218 = vmatpush2.xpose.msra.mxu0 0.0
    %1219 = vmatprep.subr.mxu0 0.0
    %1220 = vmatpush2.xpose.msra.mxu0 0.0
    %1221 = vmatprep.subr.mxu0 0.0
    %1222 = vmatpush2.xpose.msra.mxu0 0.0
    %1223 = vmatprep.subr.mxu0 0.0
    %1224 = vmatpush2.xpose.msra.mxu0 0.0
    %1225 = vmatprep.subr.mxu0 0.0
    %1226 = vmatpush2.xpose.msra.mxu0 0.0
    %1227 = vmatprep.subr.mxu0 0.0
    %1228 = vmatpush2.xpose.msra.mxu0 0.0
    %1229 = vmatprep.subr.mxu0 0.0
    %1230 = vmatpush2.xpose.msra.mxu0 0.0
    %1231 = vmatprep.subr.mxu0 0.0
    %1232 = vmatpush2.xpose.msra.mxu0 0.0
    %1233 = vmatprep.subr.mxu0 0.0
    %1234 = vmatpush2.xpose.msra.mxu0 0.0
    %1235 = vmatprep.subr.mxu0 0.0
    %1236 = vmatpush2.xpose.msra.mxu0 0.0
    %1237 = vmatprep.subr.mxu0 0.0
    %1238 = vmatpush2.xpose.msra.mxu0 0.0
    %1239 = vmatprep.subr.mxu0 0.0
    %1240 = vmatpush2.xpose.msra.mxu0 0.0
    %1241 = vmatprep.subr.mxu0 0.0
    %1242 = vmatpush2.xpose.msra.mxu0 0.0
    %1243 = vmatprep.mubr.f32.mxu0 0.0
    %1244 = vmatmul.mubr.f32.gmra.mxu0 %v1175
    %v1245 = vpop.f32.mrf.mxu0
    %v1246 = vadd.f32 %v1171, %v1245
    %v1247 = vpop.f32.mrf.mxu0
    %1248 = vdwg.mxu0
    %v1249 = vsel %vm201, %v1246, -inf
    %1250 = vmax.xlane.f32.xlu0 %v1249
    %v1251 = vpop.xlane.xlu0 %1250
    %v1252 = vsub.f32 %v1246, %v1251
    %v1253 = vmul.f32 %v1252, 1.442695
    %v1254 = vpow.pop %v1253
    %v1255 = vsel %vm201, %v1254, 0.0
    %1256 = vadd.xlane.f32.xlu0 %v1255
    %v1257 = vpop.xlane.xlu0 %1256
    %v1258 = vrcp.pop %v1257
    %v1259 = vmul.f32 %v1254, %v1258
    %1260 = vrot.lane.b32.xlu0 %v191, 64
    %v1261 = vpop.permute.xlu0 %1260
    %v1264 = vsel %vm201, %v1259, 0
    %1266 = vmatprep.subr.mxu0 0.0
    %1267 = vmatpush1.msra.mxu0 0.0
    %1268 = vmatprep.subr.mxu0 0.0
    %1269 = vmatpush1.msra.mxu0 0.0
    %1270 = vmatprep.subr.mxu0 0.0
    %1271 = vmatpush1.msra.mxu0 0.0
    %1272 = vmatprep.subr.mxu0 0.0
    %1273 = vmatpush1.msra.mxu0 0.0
    %1274 = vmatprep.subr.mxu0 0.0
    %1275 = vmatpush1.msra.mxu0 0.0
    %1276 = vmatprep.subr.mxu0 0.0
    %1277 = vmatpush1.msra.mxu0 0.0
    %1278 = vmatprep.subr.mxu0 0.0
    %1279 = vmatpush1.msra.mxu0 0.0
    %1280 = vmatprep.subr.mxu0 0.0
    %1281 = vmatpush1.msra.mxu0 0.0
    %1282 = vmatprep.subr.mxu0 0.0
    %1283 = vmatpush1.msra.mxu0 0.0
    %1284 = vmatprep.subr.mxu0 0.0
    %1285 = vmatpush1.msra.mxu0 0.0
    %1286 = vmatprep.subr.mxu0 0.0
    %1287 = vmatpush1.msra.mxu0 0.0
    %1288 = vmatprep.subr.mxu0 0.0
    %1289 = vmatpush1.msra.mxu0 0.0
    %1290 = vmatprep.subr.mxu0 0.0
    %1291 = vmatpush1.msra.mxu0 0.0
    %1292 = vmatprep.subr.mxu0 0.0
    %1293 = vmatpush1.msra.mxu0 0.0
    %1294 = vmatprep.subr.mxu0 0.0
    %1295 = vmatpush1.msra.mxu0 0.0
    %1296 = vmatprep.subr.mxu0 0.0
    %1297 = vmatpush1.msra.mxu0 %v1261
    %1298 = vmatprep.subr.mxu0 0.0
    %1299 = vmatpush2.msra.mxu0 0.0
    %1300 = vmatprep.subr.mxu0 0.0
    %1301 = vmatpush2.msra.mxu0 0.0
    %1302 = vmatprep.subr.mxu0 0.0
    %1303 = vmatpush2.msra.mxu0 0.0
    %1304 = vmatprep.subr.mxu0 0.0
    %1305 = vmatpush2.msra.mxu0 0.0
    %1306 = vmatprep.subr.mxu0 0.0
    %1307 = vmatpush2.msra.mxu0 0.0
    %1308 = vmatprep.subr.mxu0 0.0
    %1309 = vmatpush2.msra.mxu0 0.0
    %1310 = vmatprep.subr.mxu0 0.0
    %1311 = vmatpush2.msra.mxu0 0.0
    %1312 = vmatprep.subr.mxu0 0.0
    %1313 = vmatpush2.msra.mxu0 0.0
    %1314 = vmatprep.subr.mxu0 0.0
    %1315 = vmatpush2.msra.mxu0 0.0
    %1316 = vmatprep.subr.mxu0 0.0
    %1317 = vmatpush2.msra.mxu0 0.0
    %1318 = vmatprep.subr.mxu0 0.0
    %1319 = vmatpush2.msra.mxu0 0.0
    %1320 = vmatprep.subr.mxu0 0.0
    %1321 = vmatpush2.msra.mxu0 0.0
    %1322 = vmatprep.subr.mxu0 0.0
    %1323 = vmatpush2.msra.mxu0 0.0
    %1324 = vmatprep.subr.mxu0 0.0
    %1325 = vmatpush2.msra.mxu0 0.0
    %1326 = vmatprep.subr.mxu0 0.0
    %1327 = vmatpush2.msra.mxu0 0.0
    %1328 = vmatprep.subr.mxu0 0.0
    %1329 = vmatpush2.msra.mxu0 0.0
    %1330 = vmatprep.mubr.f32.mxu0 0.0
    %1331 = vmatmul.mubr.f32.gmra.mxu0 %v1264
    %v1332 = vpop.f32.mrf.mxu0
    %v1333 = vadd.f32 0.0, %v1332
    %v1334 = vpop.f32.mrf.mxu0
    %1335 = vdwg.mxu0
    %1336 = vrot.lane.b32.xlu0 %v191, 120
    %v1337 = vpop.permute.xlu0 %1336
    %1338 = vrot.lane.b32.xlu0 %v191, 88
    %v1339 = vpop.permute.xlu0 %1338
    %v1340 = vsel %vm201, %v1337, 0
    %v1342 = vsel %vm201, %v1339, 0
    %1344 = vmatprep.subr.mxu0 0.0
    %1345 = vmatpush1.xpose.msra.mxu0 0.0
    %1346 = vmatprep.subr.mxu0 0.0
    %1347 = vmatpush1.xpose.msra.mxu0 0.0
    %1348 = vmatprep.subr.mxu0 0.0
    %1349 = vmatpush1.xpose.msra.mxu0 0.0
    %1350 = vmatprep.subr.mxu0 0.0
    %1351 = vmatpush1.xpose.msra.mxu0 0.0
    %1352 = vmatprep.subr.mxu0 0.0
    %1353 = vmatpush1.xpose.msra.mxu0 0.0
    %1354 = vmatprep.subr.mxu0 0.0
    %1355 = vmatpush1.xpose.msra.mxu0 0.0
    %1356 = vmatprep.subr.mxu0 0.0
    %1357 = vmatpush1.xpose.msra.mxu0 0.0
    %1358 = vmatprep.subr.mxu0 0.0
    %1359 = vmatpush1.xpose.msra.mxu0 0.0
    %1360 = vmatprep.subr.mxu0 0.0
    %1361 = vmatpush1.xpose.msra.mxu0 0.0
    %1362 = vmatprep.subr.mxu0 0.0
    %1363 = vmatpush1.xpose.msra.mxu0 0.0
    %1364 = vmatprep.subr.mxu0 0.0
    %1365 = vmatpush1.xpose.msra.mxu0 0.0
    %1366 = vmatprep.subr.mxu0 0.0
    %1367 = vmatpush1.xpose.msra.mxu0 0.0
    %1368 = vmatprep.subr.mxu0 0.0
    %1369 = vmatpush1.xpose.msra.mxu0 0.0
    %1370 = vmatprep.subr.mxu0 0.0
    %1371 = vmatpush1.xpose.msra.mxu0 0.0
    %1372 = vmatprep.subr.mxu0 0.0
    %1373 = vmatpush1.xpose.msra.mxu0 0.0
    %1374 = vmatprep.subr.mxu0 0.0
    %1375 = vmatpush1.xpose.msra.mxu0 %v1342
    %1376 = vmatprep.subr.mxu0 0.0
    %1377 = vmatpush2.xpose.msra.mxu0 0.0
    %1378 = vmatprep.subr.mxu0 0.0
    %1379 = vmatpush2.xpose.msra.mxu0 0.0
    %1380 = vmatprep.subr.mxu0 0.0
    %1381 = vmatpush2.xpose.msra.mxu0 0.0
    %1382 = vmatprep.subr.mxu0 0.0
    %1383 = vmatpush2.xpose.msra.mxu0 0.0
    %1384 = vmatprep.subr.mxu0 0.0
    %1385 = vmatpush2.xpose.msra.mxu0 0.0
    %1386 = vmatprep.subr.mxu0 0.0
    %1387 = vmatpush2.xpose.msra.mxu0 0.0
    %1388 = vmatprep.subr.mxu0 0.0
    %1389 = vmatpush2.xpose.msra.mxu0 0.0
    %1390 = vmatprep.subr.mxu0 0.0
    %1391 = vmatpush2.xpose.msra.mxu0 0.0
    %1392 = vmatprep.subr.mxu0 0.0
    %1393 = vmatpush2.xpose.msra.mxu0 0.0
    %1394 = vmatprep.subr.mxu0 0.0
    %1395 = vmatpush2.xpose.msra.mxu0 0.0
    %1396 = vmatprep.subr.mxu0 0.0
    %1397 = vmatpush2.xpose.msra.mxu0 0.0
    %1398 = vmatprep.subr.mxu0 0.0
    %1399 = vmatpush2.xpose.msra.mxu0 0.0
    %1400 = vmatprep.subr.mxu0 0.0
    %1401 = vmatpush2.xpose.msra.mxu0 0.0
    %1402 = vmatprep.subr.mxu0 0.0
    %1403 = vmatpush2.xpose.msra.mxu0 0.0
    %1404 = vmatprep.subr.mxu0 0.0
    %1405 = vmatpush2.xpose.msra.mxu0 0.0
    %1406 = vmatprep.subr.mxu0 0.0
    %1407 = vmatpush2.xpose.msra.mxu0 0.0
    %1408 = vmatprep.mubr.f32.mxu0 0.0
    %1409 = vmatmul.mubr.f32.gmra.mxu0 %v1340
    %v1410 = vpop.f32.mrf.mxu0
    %v1411 = vadd.f32 %v1171, %v1410
    %v1412 = vpop.f32.mrf.mxu0
    %1413 = vdwg.mxu0
    %v1414 = vsel %vm201, %v1411, -inf
    %1415 = vmax.xlane.f32.xlu0 %v1414
    %v1416 = vpop.xlane.xlu0 %1415
    %v1417 = vsub.f32 %v1411, %v1416
    %v1418 = vmul.f32 %v1417, 1.442695
    %v1419 = vpow.pop %v1418
    %v1420 = vsel %vm201, %v1419, 0.0
    %1421 = vadd.xlane.f32.xlu0 %v1420
    %v1422 = vpop.xlane.xlu0 %1421
    %v1423 = vrcp.pop %v1422
    %v1424 = vmul.f32 %v1419, %v1423
    %1425 = vrot.lane.b32.xlu0 %v191, 56
    %v1426 = vpop.permute.xlu0 %1425
    %v1429 = vsel %vm201, %v1424, 0
    %1431 = vmatprep.subr.mxu0 0.0
    %1432 = vmatpush1.msra.mxu0 0.0
    %1433 = vmatprep.subr.mxu0 0.0
    %1434 = vmatpush1.msra.mxu0 0.0
    %1435 = vmatprep.subr.mxu0 0.0
    %1436 = vmatpush1.msra.mxu0 0.0
    %1437 = vmatprep.subr.mxu0 0.0
    %1438 = vmatpush1.msra.mxu0 0.0
    %1439 = vmatprep.subr.mxu0 0.0
    %1440 = vmatpush1.msra.mxu0 0.0
    %1441 = vmatprep.subr.mxu0 0.0
    %1442 = vmatpush1.msra.mxu0 0.0
    %1443 = vmatprep.subr.mxu0 0.0
    %1444 = vmatpush1.msra.mxu0 0.0
    %1445 = vmatprep.subr.mxu0 0.0
    %1446 = vmatpush1.msra.mxu0 0.0
    %1447 = vmatprep.subr.mxu0 0.0
    %1448 = vmatpush1.msra.mxu0 0.0
    %1449 = vmatprep.subr.mxu0 0.0
    %1450 = vmatpush1.msra.mxu0 0.0
    %1451 = vmatprep.subr.mxu0 0.0
    %1452 = vmatpush1.msra.mxu0 0.0
    %1453 = vmatprep.subr.mxu0 0.0
    %1454 = vmatpush1.msra.mxu0 0.0
    %1455 = vmatprep.subr.mxu0 0.0
    %1456 = vmatpush1.msra.mxu0 0.0
    %1457 = vmatprep.subr.mxu0 0.0
    %1458 = vmatpush1.msra.mxu0 0.0
    %1459 = vmatprep.subr.mxu0 0.0
    %1460 = vmatpush1.msra.mxu0 0.0
    %1461 = vmatprep.subr.mxu0 0.0
    %1462 = vmatpush1.msra.mxu0 %v1426
    %1463 = vmatprep.subr.mxu0 0.0
    %1464 = vmatpush2.msra.mxu0 0.0
    %1465 = vmatprep.subr.mxu0 0.0
    %1466 = vmatpush2.msra.mxu0 0.0
    %1467 = vmatprep.subr.mxu0 0.0
    %1468 = vmatpush2.msra.mxu0 0.0
    %1469 = vmatprep.subr.mxu0 0.0
    %1470 = vmatpush2.msra.mxu0 0.0
    %1471 = vmatprep.subr.mxu0 0.0
    %1472 = vmatpush2.msra.mxu0 0.0
    %1473 = vmatprep.subr.mxu0 0.0
    %1474 = vmatpush2.msra.mxu0 0.0
    %1475 = vmatprep.subr.mxu0 0.0
    %1476 = vmatpush2.msra.mxu0 0.0
    %1477 = vmatprep.subr.mxu0 0.0
    %1478 = vmatpush2.msra.mxu0 0.0
    %1479 = vmatprep.subr.mxu0 0.0
    %1480 = vmatpush2.msra.mxu0 0.0
    %1481 = vmatprep.subr.mxu0 0.0
    %1482 = vmatpush2.msra.mxu0 0.0
    %1483 = vmatprep.subr.mxu0 0.0
    %1484 = vmatpush2.msra.mxu0 0.0
    %1485 = vmatprep.subr.mxu0 0.0
    %1486 = vmatpush2.msra.mxu0 0.0
    %1487 = vmatprep.subr.mxu0 0.0
    %1488 = vmatpush2.msra.mxu0 0.0
    %1489 = vmatprep.subr.mxu0 0.0
    %1490 = vmatpush2.msra.mxu0 0.0
    %1491 = vmatprep.subr.mxu0 0.0
    %1492 = vmatpush2.msra.mxu0 0.0
    %1493 = vmatprep.subr.mxu0 0.0
    %1494 = vmatpush2.msra.mxu0 0.0
    %1495 = vmatprep.mubr.f32.mxu0 0.0
    %1496 = vmatmul.mubr.f32.gmra.mxu0 %v1429
    %v1497 = vpop.f32.mrf.mxu0
    %v1498 = vadd.f32 0.0, %v1497
    %v1499 = vpop.f32.mrf.mxu0
    %1500 = vdwg.mxu0
    %v1502 = vsel %vm201, %v1498, 0
    %1504 = vmatprep.subr.mxu0 0.0
    %1505 = vmatpush1.msra.mxu0 0.0
    %1506 = vmatprep.subr.mxu0 0.0
    %1507 = vmatpush1.msra.mxu0 0.0
    %1508 = vmatprep.subr.mxu0 0.0
    %1509 = vmatpush1.msra.mxu0 0.0
    %1510 = vmatprep.subr.mxu0 0.0
    %1511 = vmatpush1.msra.mxu0 0.0
    %1512 = vmatprep.subr.mxu0 0.0
    %1513 = vmatpush1.msra.mxu0 0.0
    %1514 = vmatprep.subr.mxu0 0.0
    %1515 = vmatpush1.msra.mxu0 0.0
    %1516 = vmatprep.subr.mxu0 0.0
    %1517 = vmatpush1.msra.mxu0 0.0
    %1518 = vmatprep.subr.mxu0 0.0
    %1519 = vmatpush1.msra.mxu0 0.0
    %1520 = vmatprep.subr.mxu0 0.0
    %1521 = vmatpush1.msra.mxu0 0.0
    %1522 = vmatprep.subr.mxu0 0.0
    %1523 = vmatpush1.msra.mxu0 0.0
    %1524 = vmatprep.subr.mxu0 0.0
    %1525 = vmatpush1.msra.mxu0 0.0
    %1526 = vmatprep.subr.mxu0 0.0
    %1527 = vmatpush1.msra.mxu0 0.0
    %1528 = vmatprep.subr.mxu0 0.0
    %1529 = vmatpush1.msra.mxu0 0.0
    %1530 = vmatprep.subr.mxu0 0.0
    %1531 = vmatpush1.msra.mxu0 0.0
    %1532 = vmatprep.subr.mxu0 0.0
    %1533 = vmatpush1.msra.mxu0 0.0
    %1534 = vmatprep.subr.mxu0 0.0
    %1535 = vmatpush1.msra.mxu0 %v530
    %1536 = vmatprep.subr.mxu0 0.0
    %1537 = vmatpush2.msra.mxu0 0.0
    %1538 = vmatprep.subr.mxu0 0.0
    %1539 = vmatpush2.msra.mxu0 0.0
    %1540 = vmatprep.subr.mxu0 0.0
    %1541 = vmatpush2.msra.mxu0 0.0
    %1542 = vmatprep.subr.mxu0 0.0
    %1543 = vmatpush2.msra.mxu0 0.0
    %1544 = vmatprep.subr.mxu0 0.0
    %1545 = vmatpush2.msra.mxu0 0.0
    %1546 = vmatprep.subr.mxu0 0.0
    %1547 = vmatpush2.msra.mxu0 0.0
    %1548 = vmatprep.subr.mxu0 0.0
    %1549 = vmatpush2.msra.mxu0 0.0
    %1550 = vmatprep.subr.mxu0 0.0
    %1551 = vmatpush2.msra.mxu0 0.0
    %1552 = vmatprep.subr.mxu0 0.0
    %1553 = vmatpush2.msra.mxu0 0.0
    %1554 = vmatprep.subr.mxu0 0.0
    %1555 = vmatpush2.msra.mxu0 0.0
    %1556 = vmatprep.subr.mxu0 0.0
    %1557 = vmatpush2.msra.mxu0 0.0
    %1558 = vmatprep.subr.mxu0 0.0
    %1559 = vmatpush2.msra.mxu0 0.0
    %1560 = vmatprep.subr.mxu0 0.0
    %1561 = vmatpush2.msra.mxu0 0.0
    %1562 = vmatprep.subr.mxu0 0.0
    %1563 = vmatpush2.msra.mxu0 0.0
    %1564 = vmatprep.subr.mxu0 0.0
    %1565 = vmatpush2.msra.mxu0 0.0
    %1566 = vmatprep.subr.mxu0 0.0
    %1567 = vmatpush2.msra.mxu0 0.0
    %1568 = vmatprep.mubr.f32.mxu0 0.0
    %1569 = vmatmul.mubr.f32.gmra.mxu0 %v1502
    %v1570 = vpop.f32.mrf.mxu0
    %v1571 = vadd.f32 0.0, %v1570
    %v1572 = vpop.f32.mrf.mxu0
    %1573 = vdwg.mxu0
    %v1575 = vsel %vm201, %v1333, 0
    %1577 = vmatprep.subr.mxu0 0.0
    %1578 = vmatpush1.msra.mxu0 0.0
    %1579 = vmatprep.subr.mxu0 0.0
    %1580 = vmatpush1.msra.mxu0 0.0
    %1581 = vmatprep.subr.mxu0 0.0
    %1582 = vmatpush1.msra.mxu0 0.0
    %1583 = vmatprep.subr.mxu0 0.0
    %1584 = vmatpush1.msra.mxu0 0.0
    %1585 = vmatprep.subr.mxu0 0.0
    %1586 = vmatpush1.msra.mxu0 0.0
    %1587 = vmatprep.subr.mxu0 0.0
    %1588 = vmatpush1.msra.mxu0 0.0
    %1589 = vmatprep.subr.mxu0 0.0
    %1590 = vmatpush1.msra.mxu0 0.0
    %1591 = vmatprep.subr.mxu0 0.0
    %1592 = vmatpush1.msra.mxu0 0.0
    %1593 = vmatprep.subr.mxu0 0.0
    %1594 = vmatpush1.msra.mxu0 0.0
    %1595 = vmatprep.subr.mxu0 0.0
    %1596 = vmatpush1.msra.mxu0 0.0
    %1597 = vmatprep.subr.mxu0 0.0
    %1598 = vmatpush1.msra.mxu0 0.0
    %1599 = vmatprep.subr.mxu0 0.0
    %1600 = vmatpush1.msra.mxu0 0.0
    %1601 = vmatprep.subr.mxu0 0.0
    %1602 = vmatpush1.msra.mxu0 0.0
    %1603 = vmatprep.subr.mxu0 0.0
    %1604 = vmatpush1.msra.mxu0 0.0
    %1605 = vmatprep.subr.mxu0 0.0
    %1606 = vmatpush1.msra.mxu0 0.0
    %1607 = vmatprep.subr.mxu0 0.0
    %1608 = vmatpush1.msra.mxu0 %v607
    %1609 = vmatprep.subr.mxu0 0.0
    %1610 = vmatpush2.msra.mxu0 0.0
    %1611 = vmatprep.subr.mxu0 0.0
    %1612 = vmatpush2.msra.mxu0 0.0
    %1613 = vmatprep.subr.mxu0 0.0
    %1614 = vmatpush2.msra.mxu0 0.0
    %1615 = vmatprep.subr.mxu0 0.0
    %1616 = vmatpush2.msra.mxu0 0.0
    %1617 = vmatprep.subr.mxu0 0.0
    %1618 = vmatpush2.msra.mxu0 0.0
    %1619 = vmatprep.subr.mxu0 0.0
    %1620 = vmatpush2.msra.mxu0 0.0
    %1621 = vmatprep.subr.mxu0 0.0
    %1622 = vmatpush2.msra.mxu0 0.0
    %1623 = vmatprep.subr.mxu0 0.0
    %1624 = vmatpush2.msra.mxu0 0.0
    %1625 = vmatprep.subr.mxu0 0.0
    %1626 = vmatpush2.msra.mxu0 0.0
    %1627 = vmatprep.subr.mxu0 0.0
    %1628 = vmatpush2.msra.mxu0 0.0
    %1629 = vmatprep.subr.mxu0 0.0
    %1630 = vmatpush2.msra.mxu0 0.0
    %1631 = vmatprep.subr.mxu0 0.0
    %1632 = vmatpush2.msra.mxu0 0.0
    %1633 = vmatprep.subr.mxu0 0.0
    %1634 = vmatpush2.msra.mxu0 0.0
    %1635 = vmatprep.subr.mxu0 0.0
    %1636 = vmatpush2.msra.mxu0 0.0
    %1637 = vmatprep.subr.mxu0 0.0
    %1638 = vmatpush2.msra.mxu0 0.0
    %1639 = vmatprep.subr.mxu0 0.0
    %1640 = vmatpush2.msra.mxu0 0.0
    %1641 = vmatprep.mubr.f32.mxu0 0.0
    %1642 = vmatmul.mubr.f32.gmra.mxu0 %v1575
    %v1643 = vpop.f32.mrf.mxu0
    %v1644 = vadd.f32 %v1571, %v1643
    %v1645 = vpop.f32.mrf.mxu0
    %1646 = vdwg.mxu0
    %1647 = vrot.lane.b32.xlu0 %v191, 112
    %v1648 = vpop.permute.xlu0 %1647
    %1649 = vrot.lane.b32.xlu0 %v191, 80
    %v1650 = vpop.permute.xlu0 %1649
    %v1651 = vsel %vm201, %v1648, 0
    %v1653 = vsel %vm201, %v1650, 0
    %1655 = vmatprep.subr.mxu0 0.0
    %1656 = vmatpush1.xpose.msra.mxu0 0.0
    %1657 = vmatprep.subr.mxu0 0.0
    %1658 = vmatpush1.xpose.msra.mxu0 0.0
    %1659 = vmatprep.subr.mxu0 0.0
    %1660 = vmatpush1.xpose.msra.mxu0 0.0
    %1661 = vmatprep.subr.mxu0 0.0
    %1662 = vmatpush1.xpose.msra.mxu0 0.0
    %1663 = vmatprep.subr.mxu0 0.0
    %1664 = vmatpush1.xpose.msra.mxu0 0.0
    %1665 = vmatprep.subr.mxu0 0.0
    %1666 = vmatpush1.xpose.msra.mxu0 0.0
    %1667 = vmatprep.subr.mxu0 0.0
    %1668 = vmatpush1.xpose.msra.mxu0 0.0
    %1669 = vmatprep.subr.mxu0 0.0
    %1670 = vmatpush1.xpose.msra.mxu0 0.0
    %1671 = vmatprep.subr.mxu0 0.0
    %1672 = vmatpush1.xpose.msra.mxu0 0.0
    %1673 = vmatprep.subr.mxu0 0.0
    %1674 = vmatpush1.xpose.msra.mxu0 0.0
    %1675 = vmatprep.subr.mxu0 0.0
    %1676 = vmatpush1.xpose.msra.mxu0 0.0
    %1677 = vmatprep.subr.mxu0 0.0
    %1678 = vmatpush1.xpose.msra.mxu0 0.0
    %1679 = vmatprep.subr.mxu0 0.0
    %1680 = vmatpush1.xpose.msra.mxu0 0.0
    %1681 = vmatprep.subr.mxu0 0.0
    %1682 = vmatpush1.xpose.msra.mxu0 0.0
    %1683 = vmatprep.subr.mxu0 0.0
    %1684 = vmatpush1.xpose.msra.mxu0 0.0
    %1685 = vmatprep.subr.mxu0 0.0
    %1686 = vmatpush1.xpose.msra.mxu0 %v1653
    %1687 = vmatprep.subr.mxu0 0.0
    %1688 = vmatpush2.xpose.msra.mxu0 0.0
    %1689 = vmatprep.subr.mxu0 0.0
    %1690 = vmatpush2.xpose.msra.mxu0 0.0
    %1691 = vmatprep.subr.mxu0 0.0
    %1692 = vmatpush2.xpose.msra.mxu0 0.0
    %1693 = vmatprep.subr.mxu0 0.0
    %1694 = vmatpush2.xpose.msra.mxu0 0.0
    %1695 = vmatprep.subr.mxu0 0.0
    %1696 = vmatpush2.xpose.msra.mxu0 0.0
    %1697 = vmatprep.subr.mxu0 0.0
    %1698 = vmatpush2.xpose.msra.mxu0 0.0
    %1699 = vmatprep.subr.mxu0 0.0
    %1700 = vmatpush2.xpose.msra.mxu0 0.0
    %1701 = vmatprep.subr.mxu0 0.0
    %1702 = vmatpush2.xpose.msra.mxu0 0.0
    %1703 = vmatprep.subr.mxu0 0.0
    %1704 = vmatpush2.xpose.msra.mxu0 0.0
    %1705 = vmatprep.subr.mxu0 0.0
    %1706 = vmatpush2.xpose.msra.mxu0 0.0
    %1707 = vmatprep.subr.mxu0 0.0
    %1708 = vmatpush2.xpose.msra.mxu0 0.0
    %1709 = vmatprep.subr.mxu0 0.0
    %1710 = vmatpush2.xpose.msra.mxu0 0.0
    %1711 = vmatprep.subr.mxu0 0.0
    %1712 = vmatpush2.xpose.msra.mxu0 0.0
    %1713 = vmatprep.subr.mxu0 0.0
    %1714 = vmatpush2.xpose.msra.mxu0 0.0
    %1715 = vmatprep.subr.mxu0 0.0
    %1716 = vmatpush2.xpose.msra.mxu0 0.0
    %1717 = vmatprep.subr.mxu0 0.0
    %1718 = vmatpush2.xpose.msra.mxu0 0.0
    %1719 = vmatprep.mubr.f32.mxu0 0.0
    %1720 = vmatmul.mubr.f32.gmra.mxu0 %v1651
    %v1721 = vpop.f32.mrf.mxu0
    %v1722 = vadd.f32 %v1171, %v1721
    %v1723 = vpop.f32.mrf.mxu0
    %1724 = vdwg.mxu0
    %v1725 = vsel %vm201, %v1722, -inf
    %1726 = vmax.xlane.f32.xlu0 %v1725
    %v1727 = vpop.xlane.xlu0 %1726
    %v1728 = vsub.f32 %v1722, %v1727
    %v1729 = vmul.f32 %v1728, 1.442695
    %v1730 = vpow.pop %v1729
    %v1731 = vsel %vm201, %v1730, 0.0
    %1732 = vadd.xlane.f32.xlu0 %v1731
    %v1733 = vpop.xlane.xlu0 %1732
    %v1734 = vrcp.pop %v1733
    %v1735 = vmul.f32 %v1730, %v1734
    %1736 = vrot.lane.b32.xlu0 %v191, 48
    %v1737 = vpop.permute.xlu0 %1736
    %v1740 = vsel %vm201, %v1735, 0
    %1742 = vmatprep.subr.mxu0 0.0
    %1743 = vmatpush1.msra.mxu0 0.0
    %1744 = vmatprep.subr.mxu0 0.0
    %1745 = vmatpush1.msra.mxu0 0.0
    %1746 = vmatprep.subr.mxu0 0.0
    %1747 = vmatpush1.msra.mxu0 0.0
    %1748 = vmatprep.subr.mxu0 0.0
    %1749 = vmatpush1.msra.mxu0 0.0
    %1750 = vmatprep.subr.mxu0 0.0
    %1751 = vmatpush1.msra.mxu0 0.0
    %1752 = vmatprep.subr.mxu0 0.0
    %1753 = vmatpush1.msra.mxu0 0.0
    %1754 = vmatprep.subr.mxu0 0.0
    %1755 = vmatpush1.msra.mxu0 0.0
    %1756 = vmatprep.subr.mxu0 0.0
    %1757 = vmatpush1.msra.mxu0 0.0
    %1758 = vmatprep.subr.mxu0 0.0
    %1759 = vmatpush1.msra.mxu0 0.0
    %1760 = vmatprep.subr.mxu0 0.0
    %1761 = vmatpush1.msra.mxu0 0.0
    %1762 = vmatprep.subr.mxu0 0.0
    %1763 = vmatpush1.msra.mxu0 0.0
    %1764 = vmatprep.subr.mxu0 0.0
    %1765 = vmatpush1.msra.mxu0 0.0
    %1766 = vmatprep.subr.mxu0 0.0
    %1767 = vmatpush1.msra.mxu0 0.0
    %1768 = vmatprep.subr.mxu0 0.0
    %1769 = vmatpush1.msra.mxu0 0.0
    %1770 = vmatprep.subr.mxu0 0.0
    %1771 = vmatpush1.msra.mxu0 0.0
    %1772 = vmatprep.subr.mxu0 0.0
    %1773 = vmatpush1.msra.mxu0 %v1737
    %1774 = vmatprep.subr.mxu0 0.0
    %1775 = vmatpush2.msra.mxu0 0.0
    %1776 = vmatprep.subr.mxu0 0.0
    %1777 = vmatpush2.msra.mxu0 0.0
    %1778 = vmatprep.subr.mxu0 0.0
    %1779 = vmatpush2.msra.mxu0 0.0
    %1780 = vmatprep.subr.mxu0 0.0
    %1781 = vmatpush2.msra.mxu0 0.0
    %1782 = vmatprep.subr.mxu0 0.0
    %1783 = vmatpush2.msra.mxu0 0.0
    %1784 = vmatprep.subr.mxu0 0.0
    %1785 = vmatpush2.msra.mxu0 0.0
    %1786 = vmatprep.subr.mxu0 0.0
    %1787 = vmatpush2.msra.mxu0 0.0
    %1788 = vmatprep.subr.mxu0 0.0
    %1789 = vmatpush2.msra.mxu0 0.0
    %1790 = vmatprep.subr.mxu0 0.0
    %1791 = vmatpush2.msra.mxu0 0.0
    %1792 = vmatprep.subr.mxu0 0.0
    %1793 = vmatpush2.msra.mxu0 0.0
    %1794 = vmatprep.subr.mxu0 0.0
    %1795 = vmatpush2.msra.mxu0 0.0
    %1796 = vmatprep.subr.mxu0 0.0
    %1797 = vmatpush2.msra.mxu0 0.0
    %1798 = vmatprep.subr.mxu0 0.0
    %1799 = vmatpush2.msra.mxu0 0.0
    %1800 = vmatprep.subr.mxu0 0.0
    %1801 = vmatpush2.msra.mxu0 0.0
    %1802 = vmatprep.subr.mxu0 0.0
    %1803 = vmatpush2.msra.mxu0 0.0
    %1804 = vmatprep.subr.mxu0 0.0
    %1805 = vmatpush2.msra.mxu0 0.0
    %1806 = vmatprep.mubr.f32.mxu0 0.0
    %1807 = vmatmul.mubr.f32.gmra.mxu0 %v1740
    %v1808 = vpop.f32.mrf.mxu0
    %v1809 = vadd.f32 0.0, %v1808
    %v1810 = vpop.f32.mrf.mxu0
    %1811 = vdwg.mxu0
    %v1813 = vsel %vm201, %v1809, 0
    %1815 = vmatprep.subr.mxu0 0.0
    %1816 = vmatpush1.msra.mxu0 0.0
    %1817 = vmatprep.subr.mxu0 0.0
    %1818 = vmatpush1.msra.mxu0 0.0
    %1819 = vmatprep.subr.mxu0 0.0
    %1820 = vmatpush1.msra.mxu0 0.0
    %1821 = vmatprep.subr.mxu0 0.0
    %1822 = vmatpush1.msra.mxu0 0.0
    %1823 = vmatprep.subr.mxu0 0.0
    %1824 = vmatpush1.msra.mxu0 0.0
    %1825 = vmatprep.subr.mxu0 0.0
    %1826 = vmatpush1.msra.mxu0 0.0
    %1827 = vmatprep.subr.mxu0 0.0
    %1828 = vmatpush1.msra.mxu0 0.0
    %1829 = vmatprep.subr.mxu0 0.0
    %1830 = vmatpush1.msra.mxu0 0.0
    %1831 = vmatprep.subr.mxu0 0.0
    %1832 = vmatpush1.msra.mxu0 0.0
    %1833 = vmatprep.subr.mxu0 0.0
    %1834 = vmatpush1.msra.mxu0 0.0
    %1835 = vmatprep.subr.mxu0 0.0
    %1836 = vmatpush1.msra.mxu0 0.0
    %1837 = vmatprep.subr.mxu0 0.0
    %1838 = vmatpush1.msra.mxu0 0.0
    %1839 = vmatprep.subr.mxu0 0.0
    %1840 = vmatpush1.msra.mxu0 0.0
    %1841 = vmatprep.subr.mxu0 0.0
    %1842 = vmatpush1.msra.mxu0 0.0
    %1843 = vmatprep.subr.mxu0 0.0
    %1844 = vmatpush1.msra.mxu0 0.0
    %1845 = vmatprep.subr.mxu0 0.0
    %1846 = vmatpush1.msra.mxu0 %v849
    %1847 = vmatprep.subr.mxu0 0.0
    %1848 = vmatpush2.msra.mxu0 0.0
    %1849 = vmatprep.subr.mxu0 0.0
    %1850 = vmatpush2.msra.mxu0 0.0
    %1851 = vmatprep.subr.mxu0 0.0
    %1852 = vmatpush2.msra.mxu0 0.0
    %1853 = vmatprep.subr.mxu0 0.0
    %1854 = vmatpush2.msra.mxu0 0.0
    %1855 = vmatprep.subr.mxu0 0.0
    %1856 = vmatpush2.msra.mxu0 0.0
    %1857 = vmatprep.subr.mxu0 0.0
    %1858 = vmatpush2.msra.mxu0 0.0
    %1859 = vmatprep.subr.mxu0 0.0
    %1860 = vmatpush2.msra.mxu0 0.0
    %1861 = vmatprep.subr.mxu0 0.0
    %1862 = vmatpush2.msra.mxu0 0.0
    %1863 = vmatprep.subr.mxu0 0.0
    %1864 = vmatpush2.msra.mxu0 0.0
    %1865 = vmatprep.subr.mxu0 0.0
    %1866 = vmatpush2.msra.mxu0 0.0
    %1867 = vmatprep.subr.mxu0 0.0
    %1868 = vmatpush2.msra.mxu0 0.0
    %1869 = vmatprep.subr.mxu0 0.0
    %1870 = vmatpush2.msra.mxu0 0.0
    %1871 = vmatprep.subr.mxu0 0.0
    %1872 = vmatpush2.msra.mxu0 0.0
    %1873 = vmatprep.subr.mxu0 0.0
    %1874 = vmatpush2.msra.mxu0 0.0
    %1875 = vmatprep.subr.mxu0 0.0
    %1876 = vmatpush2.msra.mxu0 0.0
    %1877 = vmatprep.subr.mxu0 0.0
    %1878 = vmatpush2.msra.mxu0 0.0
    %1879 = vmatprep.mubr.f32.mxu0 0.0
    %1880 = vmatmul.mubr.f32.gmra.mxu0 %v1813
    %v1881 = vpop.f32.mrf.mxu0
    %v1882 = vadd.f32 0.0, %v1881
    %v1883 = vpop.f32.mrf.mxu0
    %1884 = vdwg.mxu0
    %v1885 = vadd.f32 %v1644, %v1882
    %1886 = vrot.lane.b32.xlu0 %v191, 104
    %v1887 = vpop.permute.xlu0 %1886
    %1888 = vrot.lane.b32.xlu0 %v191, 72
    %v1889 = vpop.permute.xlu0 %1888
    %v1890 = vsel %vm201, %v1887, 0
    %v1892 = vsel %vm201, %v1889, 0
    %1894 = vmatprep.subr.mxu0 0.0
    %1895 = vmatpush1.xpose.msra.mxu0 0.0
    %1896 = vmatprep.subr.mxu0 0.0
    %1897 = vmatpush1.xpose.msra.mxu0 0.0
    %1898 = vmatprep.subr.mxu0 0.0
    %1899 = vmatpush1.xpose.msra.mxu0 0.0
    %1900 = vmatprep.subr.mxu0 0.0
    %1901 = vmatpush1.xpose.msra.mxu0 0.0
    %1902 = vmatprep.subr.mxu0 0.0
    %1903 = vmatpush1.xpose.msra.mxu0 0.0
    %1904 = vmatprep.subr.mxu0 0.0
    %1905 = vmatpush1.xpose.msra.mxu0 0.0
    %1906 = vmatprep.subr.mxu0 0.0
    %1907 = vmatpush1.xpose.msra.mxu0 0.0
    %1908 = vmatprep.subr.mxu0 0.0
    %1909 = vmatpush1.xpose.msra.mxu0 0.0
    %1910 = vmatprep.subr.mxu0 0.0
    %1911 = vmatpush1.xpose.msra.mxu0 0.0
    %1912 = vmatprep.subr.mxu0 0.0
    %1913 = vmatpush1.xpose.msra.mxu0 0.0
    %1914 = vmatprep.subr.mxu0 0.0
    %1915 = vmatpush1.xpose.msra.mxu0 0.0
    %1916 = vmatprep.subr.mxu0 0.0
    %1917 = vmatpush1.xpose.msra.mxu0 0.0
    %1918 = vmatprep.subr.mxu0 0.0
    %1919 = vmatpush1.xpose.msra.mxu0 0.0
    %1920 = vmatprep.subr.mxu0 0.0
    %1921 = vmatpush1.xpose.msra.mxu0 0.0
    %1922 = vmatprep.subr.mxu0 0.0
    %1923 = vmatpush1.xpose.msra.mxu0 0.0
    %1924 = vmatprep.subr.mxu0 0.0
    %1925 = vmatpush1.xpose.msra.mxu0 %v1892
    %1926 = vmatprep.subr.mxu0 0.0
    %1927 = vmatpush2.xpose.msra.mxu0 0.0
    %1928 = vmatprep.subr.mxu0 0.0
    %1929 = vmatpush2.xpose.msra.mxu0 0.0
    %1930 = vmatprep.subr.mxu0 0.0
    %1931 = vmatpush2.xpose.msra.mxu0 0.0
    %1932 = vmatprep.subr.mxu0 0.0
    %1933 = vmatpush2.xpose.msra.mxu0 0.0
    %1934 = vmatprep.subr.mxu0 0.0
    %1935 = vmatpush2.xpose.msra.mxu0 0.0
    %1936 = vmatprep.subr.mxu0 0.0
    %1937 = vmatpush2.xpose.msra.mxu0 0.0
    %1938 = vmatprep.subr.mxu0 0.0
    %1939 = vmatpush2.xpose.msra.mxu0 0.0
    %1940 = vmatprep.subr.mxu0 0.0
    %1941 = vmatpush2.xpose.msra.mxu0 0.0
    %1942 = vmatprep.subr.mxu0 0.0
    %1943 = vmatpush2.xpose.msra.mxu0 0.0
    %1944 = vmatprep.subr.mxu0 0.0
    %1945 = vmatpush2.xpose.msra.mxu0 0.0
    %1946 = vmatprep.subr.mxu0 0.0
    %1947 = vmatpush2.xpose.msra.mxu0 0.0
    %1948 = vmatprep.subr.mxu0 0.0
    %1949 = vmatpush2.xpose.msra.mxu0 0.0
    %1950 = vmatprep.subr.mxu0 0.0
    %1951 = vmatpush2.xpose.msra.mxu0 0.0
    %1952 = vmatprep.subr.mxu0 0.0
    %1953 = vmatpush2.xpose.msra.mxu0 0.0
    %1954 = vmatprep.subr.mxu0 0.0
    %1955 = vmatpush2.xpose.msra.mxu0 0.0
    %1956 = vmatprep.subr.mxu0 0.0
    %1957 = vmatpush2.xpose.msra.mxu0 0.0
    %1958 = vmatprep.mubr.f32.mxu0 0.0
    %1959 = vmatmul.mubr.f32.gmra.mxu0 %v1890
    %v1960 = vpop.f32.mrf.mxu0
    %v1961 = vadd.f32 %v1171, %v1960
    %v1962 = vpop.f32.mrf.mxu0
    %1963 = vdwg.mxu0
    %v1964 = vsel %vm201, %v1961, -inf
    %1965 = vmax.xlane.f32.xlu0 %v1964
    %v1966 = vpop.xlane.xlu0 %1965
    %v1967 = vsub.f32 %v1961, %v1966
    %v1968 = vmul.f32 %v1967, 1.442695
    %v1969 = vpow.pop %v1968
    %v1970 = vsel %vm201, %v1969, 0.0
    %1971 = vadd.xlane.f32.xlu0 %v1970
    %v1972 = vpop.xlane.xlu0 %1971
    %v1973 = vrcp.pop %v1972
    %v1974 = vmul.f32 %v1969, %v1973
    %1975 = vrot.lane.b32.xlu0 %v191, 40
    %v1976 = vpop.permute.xlu0 %1975
    %v1979 = vsel %vm201, %v1974, 0
    %1981 = vmatprep.subr.mxu0 0.0
    %1982 = vmatpush1.msra.mxu0 0.0
    %1983 = vmatprep.subr.mxu0 0.0
    %1984 = vmatpush1.msra.mxu0 0.0
    %1985 = vmatprep.subr.mxu0 0.0
    %1986 = vmatpush1.msra.mxu0 0.0
    %1987 = vmatprep.subr.mxu0 0.0
    %1988 = vmatpush1.msra.mxu0 0.0
    %1989 = vmatprep.subr.mxu0 0.0
    %1990 = vmatpush1.msra.mxu0 0.0
    %1991 = vmatprep.subr.mxu0 0.0
    %1992 = vmatpush1.msra.mxu0 0.0
    %1993 = vmatprep.subr.mxu0 0.0
    %1994 = vmatpush1.msra.mxu0 0.0
    %1995 = vmatprep.subr.mxu0 0.0
    %1996 = vmatpush1.msra.mxu0 0.0
    %1997 = vmatprep.subr.mxu0 0.0
    %1998 = vmatpush1.msra.mxu0 0.0
    %1999 = vmatprep.subr.mxu0 0.0
    %2000 = vmatpush1.msra.mxu0 0.0
    %2001 = vmatprep.subr.mxu0 0.0
    %2002 = vmatpush1.msra.mxu0 0.0
    %2003 = vmatprep.subr.mxu0 0.0
    %2004 = vmatpush1.msra.mxu0 0.0
    %2005 = vmatprep.subr.mxu0 0.0
    %2006 = vmatpush1.msra.mxu0 0.0
    %2007 = vmatprep.subr.mxu0 0.0
    %2008 = vmatpush1.msra.mxu0 0.0
    %2009 = vmatprep.subr.mxu0 0.0
    %2010 = vmatpush1.msra.mxu0 0.0
    %2011 = vmatprep.subr.mxu0 0.0
    %2012 = vmatpush1.msra.mxu0 %v1976
    %2013 = vmatprep.subr.mxu0 0.0
    %2014 = vmatpush2.msra.mxu0 0.0
    %2015 = vmatprep.subr.mxu0 0.0
    %2016 = vmatpush2.msra.mxu0 0.0
    %2017 = vmatprep.subr.mxu0 0.0
    %2018 = vmatpush2.msra.mxu0 0.0
    %2019 = vmatprep.subr.mxu0 0.0
    %2020 = vmatpush2.msra.mxu0 0.0
    %2021 = vmatprep.subr.mxu0 0.0
    %2022 = vmatpush2.msra.mxu0 0.0
    %2023 = vmatprep.subr.mxu0 0.0
    %2024 = vmatpush2.msra.mxu0 0.0
    %2025 = vmatprep.subr.mxu0 0.0
    %2026 = vmatpush2.msra.mxu0 0.0
    %2027 = vmatprep.subr.mxu0 0.0
    %2028 = vmatpush2.msra.mxu0 0.0
    %2029 = vmatprep.subr.mxu0 0.0
    %2030 = vmatpush2.msra.mxu0 0.0
    %2031 = vmatprep.subr.mxu0 0.0
    %2032 = vmatpush2.msra.mxu0 0.0
    %2033 = vmatprep.subr.mxu0 0.0
    %2034 = vmatpush2.msra.mxu0 0.0
    %2035 = vmatprep.subr.mxu0 0.0
    %2036 = vmatpush2.msra.mxu0 0.0
    %2037 = vmatprep.subr.mxu0 0.0
    %2038 = vmatpush2.msra.mxu0 0.0
    %2039 = vmatprep.subr.mxu0 0.0
    %2040 = vmatpush2.msra.mxu0 0.0
    %2041 = vmatprep.subr.mxu0 0.0
    %2042 = vmatpush2.msra.mxu0 0.0
    %2043 = vmatprep.subr.mxu0 0.0
    %2044 = vmatpush2.msra.mxu0 0.0
    %2045 = vmatprep.mubr.f32.mxu0 0.0
    %2046 = vmatmul.mubr.f32.gmra.mxu0 %v1979
    %v2047 = vpop.f32.mrf.mxu0
    %v2048 = vadd.f32 0.0, %v2047
    %v2049 = vpop.f32.mrf.mxu0
    %2050 = vdwg.mxu0
    %v2052 = vsel %vm201, %v2048, 0
    %2054 = vmatprep.subr.mxu0 0.0
    %2055 = vmatpush1.msra.mxu0 0.0
    %2056 = vmatprep.subr.mxu0 0.0
    %2057 = vmatpush1.msra.mxu0 0.0
    %2058 = vmatprep.subr.mxu0 0.0
    %2059 = vmatpush1.msra.mxu0 0.0
    %2060 = vmatprep.subr.mxu0 0.0
    %2061 = vmatpush1.msra.mxu0 0.0
    %2062 = vmatprep.subr.mxu0 0.0
    %2063 = vmatpush1.msra.mxu0 0.0
    %2064 = vmatprep.subr.mxu0 0.0
    %2065 = vmatpush1.msra.mxu0 0.0
    %2066 = vmatprep.subr.mxu0 0.0
    %2067 = vmatpush1.msra.mxu0 0.0
    %2068 = vmatprep.subr.mxu0 0.0
    %2069 = vmatpush1.msra.mxu0 0.0
    %2070 = vmatprep.subr.mxu0 0.0
    %2071 = vmatpush1.msra.mxu0 0.0
    %2072 = vmatprep.subr.mxu0 0.0
    %2073 = vmatpush1.msra.mxu0 0.0
    %2074 = vmatprep.subr.mxu0 0.0
    %2075 = vmatpush1.msra.mxu0 0.0
    %2076 = vmatprep.subr.mxu0 0.0
    %2077 = vmatpush1.msra.mxu0 0.0
    %2078 = vmatprep.subr.mxu0 0.0
    %2079 = vmatpush1.msra.mxu0 0.0
    %2080 = vmatprep.subr.mxu0 0.0
    %2081 = vmatpush1.msra.mxu0 0.0
    %2082 = vmatprep.subr.mxu0 0.0
    %2083 = vmatpush1.msra.mxu0 0.0
    %2084 = vmatprep.subr.mxu0 0.0
    %2085 = vmatpush1.msra.mxu0 %v1092
    %2086 = vmatprep.subr.mxu0 0.0
    %2087 = vmatpush2.msra.mxu0 0.0
    %2088 = vmatprep.subr.mxu0 0.0
    %2089 = vmatpush2.msra.mxu0 0.0
    %2090 = vmatprep.subr.mxu0 0.0
    %2091 = vmatpush2.msra.mxu0 0.0
    %2092 = vmatprep.subr.mxu0 0.0
    %2093 = vmatpush2.msra.mxu0 0.0
    %2094 = vmatprep.subr.mxu0 0.0
    %2095 = vmatpush2.msra.mxu0 0.0
    %2096 = vmatprep.subr.mxu0 0.0
    %2097 = vmatpush2.msra.mxu0 0.0
    %2098 = vmatprep.subr.mxu0 0.0
    %2099 = vmatpush2.msra.mxu0 0.0
    %2100 = vmatprep.subr.mxu0 0.0
    %2101 = vmatpush2.msra.mxu0 0.0
    %2102 = vmatprep.subr.mxu0 0.0
    %2103 = vmatpush2.msra.mxu0 0.0
    %2104 = vmatprep.subr.mxu0 0.0
    %2105 = vmatpush2.msra.mxu0 0.0
    %2106 = vmatprep.subr.mxu0 0.0
    %2107 = vmatpush2.msra.mxu0 0.0
    %2108 = vmatprep.subr.mxu0 0.0
    %2109 = vmatpush2.msra.mxu0 0.0
    %2110 = vmatprep.subr.mxu0 0.0
    %2111 = vmatpush2.msra.mxu0 0.0
    %2112 = vmatprep.subr.mxu0 0.0
    %2113 = vmatpush2.msra.mxu0 0.0
    %2114 = vmatprep.subr.mxu0 0.0
    %2115 = vmatpush2.msra.mxu0 0.0
    %2116 = vmatprep.subr.mxu0 0.0
    %2117 = vmatpush2.msra.mxu0 0.0
    %2118 = vmatprep.mubr.f32.mxu0 0.0
    %2119 = vmatmul.mubr.f32.gmra.mxu0 %v2052
    %v2120 = vpop.f32.mrf.mxu0
    %v2121 = vadd.f32 0.0, %v2120
    %v2122 = vpop.f32.mrf.mxu0
    %2123 = vdwg.mxu0
    %v2124 = vadd.f32 %v1885, %v2121
    %v2125 = vadd.f32 %v30, %v1167
    %v2126 = vadd.f32 %v31, %v2124
    %v2127 = vlaneseq
    %v2128 = vshrl.u32 %v2127, 7
    %v2129 = vsub.s32 0, %v2128
    %v2130 = vrot.slane %v38, %v2129
    %v2131 = vadd.f32 %v2125, %v2130
    %v2132 = vadd.f32 %v2126, %v2130
    %v2133 = vsel %vm52, %v2131, 0.0
    %2134 = vadd.xlane.f32.xlu0 %v2133
    %v2135 = vpop.xlane.xlu0 %2134
    %v2136 = vsel %vm52, %v2132, 0.0
    %2137 = vadd.xlane.f32.xlu0 %v2136
    %v2138 = vpop.xlane.xlu0 %2137
    %v2139 = vmul.f32 %v2135, %v59
    %v2140 = vmul.f32 %v2138, %v59
    %v2141 = vsub.f32 %v2131, %v2139
    %v2142 = vsub.f32 %v2132, %v2140
    %v2143 = vmul.f32 %v2141, %v2141
    %v2144 = vmul.f32 %v2142, %v2142
    %v2145 = vsel %vm52, %v2143, 0.0
    %2146 = vadd.xlane.f32.xlu0 %v2145
    %v2147 = vpop.xlane.xlu0 %2146
    %v2148 = vsel %vm52, %v2144, 0.0
    %2149 = vadd.xlane.f32.xlu0 %v2148
    %v2150 = vpop.xlane.xlu0 %2149
    %v2151 = vmul.f32 %v2147, %v72
    %v2152 = vmul.f32 %v2150, %v72
    %v2153 = vrsqrt.pop %v2151
    %v2154 = vmul.f32 %v2151, %v2153
    %vm2155 = vcmp.eq.f32.partialorder %v2151, inf
    %v2156 = vsel %vm2155, %v2151, %v2154
    %vm2157 = vcmp.eq.f32.partialorder %v2151, 0.0
    %v2158 = vand.u32 %v2151, 2147483648
    %v2159 = vsel %vm2157, %v2158, %v2156
    %v2160 = vrsqrt.pop %v2152
    %v2161 = vmul.f32 %v2152, %v2160
    %vm2162 = vcmp.eq.f32.partialorder %v2152, inf
    %v2163 = vsel %vm2162, %v2152, %v2161
    %vm2164 = vcmp.eq.f32.partialorder %v2152, 0.0
    %v2165 = vand.u32 %v2152, 2147483648
    %v2166 = vsel %vm2164, %v2165, %v2163
    %v2167 = vlaneseq
    %v2168 = vshrl.u32 %v2167, 7
    %v2169 = vsub.s32 4, %v2168
    %v2170 = vrot.slane %v38, %v2169
    %v2171 = vmul.f32 %v2170, %v2141
    %v2172 = vmul.f32 %v2170, %v2142
    %v2173 = vadd.f32 %v2159, 1e-06
    %v2174 = vadd.f32 %v2166, 1e-06
    %v2175 = vrcp.pop %v2173
    %v2176 = vmul.f32 %v2171, %v2175
    %v2177 = vrcp.pop %v2174
    %v2178 = vmul.f32 %v2172, %v2177
    %v2179 = vlaneseq
    %v2180 = vshrl.u32 %v2179, 7
    %v2181 = vsub.s32 5, %v2180
    %v2182 = vrot.slane %v38, %v2181
    %v2183 = vadd.f32 %v2176, %v2182
    %v2184 = vadd.f32 %v2178, %v2182
    %v2186 = vlaneseq
    %v2187 = vshrl.u32 %v2186, 7
    %v2188 = vsub.s32 0, %v2187
    %v2189 = vrot.slane %v43, %v2188
    %v2192 = vsel %vm52, %v2183, 0
    %v2195 = vsel %vm52, %v2184, 0
    %2197 = vmatprep.subr.mxu0 0.0
    %2198 = vmatpush1.msra.mxu0 0.0
    %2199 = vmatprep.subr.mxu0 0.0
    %2200 = vmatpush1.msra.mxu0 0.0
    %2201 = vmatprep.subr.mxu0 0.0
    %2202 = vmatpush1.msra.mxu0 0.0
    %2203 = vmatprep.subr.mxu0 0.0
    %2204 = vmatpush1.msra.mxu0 0.0
    %2205 = vmatprep.subr.mxu0 0.0
    %2206 = vmatpush1.msra.mxu0 0.0
    %2207 = vmatprep.subr.mxu0 0.0
    %2208 = vmatpush1.msra.mxu0 0.0
    %2209 = vmatprep.subr.mxu0 0.0
    %2210 = vmatpush1.msra.mxu0 0.0
    %2211 = vmatprep.subr.mxu0 0.0
    %2212 = vmatpush1.msra.mxu0 0.0
    %2213 = vmatprep.subr.mxu0 0.0
    %2214 = vmatpush1.msra.mxu0 0.0
    %2215 = vmatprep.subr.mxu0 0.0
    %2216 = vmatpush1.msra.mxu0 0.0
    %2217 = vmatprep.subr.mxu0 0.0
    %2218 = vmatpush1.msra.mxu0 0.0
    %2219 = vmatprep.subr.mxu0 0.0
    %2220 = vmatpush1.msra.mxu0 0.0
    %2221 = vmatprep.subr.mxu0 0.0
    %2222 = vmatpush1.msra.mxu0 %v42
    %2223 = vmatprep.subr.mxu0 0.0
    %2224 = vmatpush1.msra.mxu0 %v41
    %2225 = vmatprep.subr.mxu0 0.0
    %2226 = vmatpush1.msra.mxu0 %v40
    %2227 = vmatprep.subr.mxu0 0.0
    %2228 = vmatpush1.msra.mxu0 %v39
    %2229 = vmatprep.subr.mxu0 0.0
    %2230 = vmatpush2.msra.mxu0 0.0
    %2231 = vmatprep.subr.mxu0 0.0
    %2232 = vmatpush2.msra.mxu0 0.0
    %2233 = vmatprep.subr.mxu0 0.0
    %2234 = vmatpush2.msra.mxu0 0.0
    %2235 = vmatprep.subr.mxu0 0.0
    %2236 = vmatpush2.msra.mxu0 0.0
    %2237 = vmatprep.subr.mxu0 0.0
    %2238 = vmatpush2.msra.mxu0 0.0
    %2239 = vmatprep.subr.mxu0 0.0
    %2240 = vmatpush2.msra.mxu0 0.0
    %2241 = vmatprep.subr.mxu0 0.0
    %2242 = vmatpush2.msra.mxu0 0.0
    %2243 = vmatprep.subr.mxu0 0.0
    %2244 = vmatpush2.msra.mxu0 0.0
    %2245 = vmatprep.subr.mxu0 0.0
    %2246 = vmatpush2.msra.mxu0 0.0
    %2247 = vmatprep.subr.mxu0 0.0
    %2248 = vmatpush2.msra.mxu0 0.0
    %2249 = vmatprep.subr.mxu0 0.0
    %2250 = vmatpush2.msra.mxu0 0.0
    %2251 = vmatprep.subr.mxu0 0.0
    %2252 = vmatpush2.msra.mxu0 0.0
    %2253 = vmatprep.subr.mxu0 0.0
    %2254 = vmatpush2.msra.mxu0 0.0
    %2255 = vmatprep.subr.mxu0 0.0
    %2256 = vmatpush2.msra.mxu0 0.0
    %2257 = vmatprep.subr.mxu0 0.0
    %2258 = vmatpush2.msra.mxu0 0.0
    %2259 = vmatprep.subr.mxu0 0.0
    %2260 = vmatpush2.msra.mxu0 0.0
    %2261 = vmatprep.mubr.f32.mxu0 0.0
    %2262 = vmatmul.mubr.f32.gmra.mxu0 %v2192
    %v2263 = vpop.f32.mrf.mxu0
    %v2264 = vadd.f32 %v2189, %v2263
    %v2265 = vpop.f32.mrf.mxu0
    %2266 = vmatprep.mubr.f32.mxu0 0.0
    %2267 = vmatmul.mubr.f32.gmra.mxu0 %v2195
    %v2268 = vpop.f32.mrf.mxu0
    %v2269 = vadd.f32 %v2189, %v2268
    %v2270 = vpop.f32.mrf.mxu0
    %2271 = vdwg.mxu0
    %v2272 = vmax.f32 %v2264, 0.0
    %v2273 = vmax.f32 %v2269, 0.0
    %vm2274 = vcmask 523264
    %v2276 = vsel %vm2274, %v2272, 0
    %v2279 = vsel %vm2274, %v2273, 0
    %2281 = vmatprep.subr.mxu0 0.0
    %2282 = vmatpush1.msra.mxu0 0.0
    %2283 = vmatprep.subr.mxu0 0.0
    %2284 = vmatpush1.msra.mxu0 0.0
    %2285 = vmatprep.subr.mxu0 0.0
    %2286 = vmatpush1.msra.mxu0 0.0
    %2287 = vmatprep.subr.mxu0 0.0
    %2288 = vmatpush1.msra.mxu0 0.0
    %2289 = vmatprep.subr.mxu0 0.0
    %2290 = vmatpush1.msra.mxu0 0.0
    %2291 = vmatprep.subr.mxu0 0.0
    %2292 = vmatpush1.msra.mxu0 0.0
    %2293 = vmatprep.subr.mxu0 0.0
    %2294 = vmatpush1.msra.mxu0 0.0
    %2295 = vmatprep.subr.mxu0 0.0
    %2296 = vmatpush1.msra.mxu0 0.0
    %2297 = vmatprep.subr.mxu0 0.0
    %2298 = vmatpush1.msra.mxu0 %v51
    %2299 = vmatprep.subr.mxu0 0.0
    %2300 = vmatpush1.msra.mxu0 %v50
    %2301 = vmatprep.subr.mxu0 0.0
    %2302 = vmatpush1.msra.mxu0 %v49
    %2303 = vmatprep.subr.mxu0 0.0
    %2304 = vmatpush1.msra.mxu0 %v48
    %2305 = vmatprep.subr.mxu0 0.0
    %2306 = vmatpush1.msra.mxu0 %v47
    %2307 = vmatprep.subr.mxu0 0.0
    %2308 = vmatpush1.msra.mxu0 %v46
    %2309 = vmatprep.subr.mxu0 0.0
    %2310 = vmatpush1.msra.mxu0 %v45
    %2311 = vmatprep.subr.mxu0 0.0
    %2312 = vmatpush1.msra.mxu0 %v44
    %2313 = vmatprep.subr.mxu0 0.0
    %2314 = vmatpush2.msra.mxu0 0.0
    %2315 = vmatprep.subr.mxu0 0.0
    %2316 = vmatpush2.msra.mxu0 0.0
    %2317 = vmatprep.subr.mxu0 0.0
    %2318 = vmatpush2.msra.mxu0 0.0
    %2319 = vmatprep.subr.mxu0 0.0
    %2320 = vmatpush2.msra.mxu0 0.0
    %2321 = vmatprep.subr.mxu0 0.0
    %2322 = vmatpush2.msra.mxu0 0.0
    %2323 = vmatprep.subr.mxu0 0.0
    %2324 = vmatpush2.msra.mxu0 0.0
    %2325 = vmatprep.subr.mxu0 0.0
    %2326 = vmatpush2.msra.mxu0 0.0
    %2327 = vmatprep.subr.mxu0 0.0
    %2328 = vmatpush2.msra.mxu0 0.0
    %2329 = vmatprep.subr.mxu0 0.0
    %2330 = vmatpush2.msra.mxu0 0.0
    %2331 = vmatprep.subr.mxu0 0.0
    %2332 = vmatpush2.msra.mxu0 0.0
    %2333 = vmatprep.subr.mxu0 0.0
    %2334 = vmatpush2.msra.mxu0 0.0
    %2335 = vmatprep.subr.mxu0 0.0
    %2336 = vmatpush2.msra.mxu0 0.0
    %2337 = vmatprep.subr.mxu0 0.0
    %2338 = vmatpush2.msra.mxu0 0.0
    %2339 = vmatprep.subr.mxu0 0.0
    %2340 = vmatpush2.msra.mxu0 0.0
    %2341 = vmatprep.subr.mxu0 0.0
    %2342 = vmatpush2.msra.mxu0 0.0
    %2343 = vmatprep.subr.mxu0 0.0
    %2344 = vmatpush2.msra.mxu0 0.0
    %2345 = vmatprep.mubr.f32.mxu0 0.0
    %2346 = vmatmul.mubr.f32.gmra.mxu0 %v2276
    %v2347 = vpop.f32.mrf.mxu0
    %v2348 = vadd.f32 0.0, %v2347
    %v2349 = vpop.f32.mrf.mxu0
    %2350 = vmatprep.mubr.f32.mxu0 0.0
    %2351 = vmatmul.mubr.f32.gmra.mxu0 %v2279
    %v2352 = vpop.f32.mrf.mxu0
    %v2353 = vadd.f32 0.0, %v2352
    %v2354 = vpop.f32.mrf.mxu0
    %2355 = vdwg.mxu0
    %v2356 = vadd.f32 %v2131, %v2348
    %v2357 = vadd.f32 %v2132, %v2353
    %v2358 = vlaneseq
    %v2359 = vshrl.u32 %v2358, 7
    %v2360 = vsub.s32 1, %v2359
    %v2361 = vrot.slane %v38, %v2360
    %v2362 = vadd.f32 %v2356, %v2361
    %v2363 = vadd.f32 %v2357, %v2361
    %v2364 = vsel %vm52, %v2362, 0.0
    %2365 = vadd.xlane.f32.xlu0 %v2364
    %v2366 = vpop.xlane.xlu0 %2365
    %v2367 = vsel %vm52, %v2363, 0.0
    %2368 = vadd.xlane.f32.xlu0 %v2367
    %v2369 = vpop.xlane.xlu0 %2368
    %v2370 = vmul.f32 %v2366, %v59
    %v2371 = vmul.f32 %v2369, %v59
    %v2372 = vsub.f32 %v2362, %v2370
    %v2373 = vsub.f32 %v2363, %v2371
    %v2374 = vmul.f32 %v2372, %v2372
    %v2375 = vmul.f32 %v2373, %v2373
    %v2376 = vsel %vm52, %v2374, 0.0
    %2377 = vadd.xlane.f32.xlu0 %v2376
    %v2378 = vpop.xlane.xlu0 %2377
    %v2379 = vsel %vm52, %v2375, 0.0
    %2380 = vadd.xlane.f32.xlu0 %v2379
    %v2381 = vpop.xlane.xlu0 %2380
    %v2382 = vmul.f32 %v2378, %v72
    %v2383 = vmul.f32 %v2381, %v72
    %v2384 = vrsqrt.pop %v2382
    %v2385 = vmul.f32 %v2382, %v2384
    %vm2386 = vcmp.eq.f32.partialorder %v2382, inf
    %v2387 = vsel %vm2386, %v2382, %v2385
    %vm2388 = vcmp.eq.f32.partialorder %v2382, 0.0
    %v2389 = vand.u32 %v2382, 2147483648
    %v2390 = vsel %vm2388, %v2389, %v2387
    %v2391 = vrsqrt.pop %v2383
    %v2392 = vmul.f32 %v2383, %v2391
    %vm2393 = vcmp.eq.f32.partialorder %v2383, inf
    %v2394 = vsel %vm2393, %v2383, %v2392
    %vm2395 = vcmp.eq.f32.partialorder %v2383, 0.0
    %v2396 = vand.u32 %v2383, 2147483648
    %v2397 = vsel %vm2395, %v2396, %v2394
    %v2398 = vmul.f32 %v92, %v2372
    %v2399 = vmul.f32 %v92, %v2373
    %v2400 = vadd.f32 %v2390, 1e-06
    %v2401 = vadd.f32 %v2397, 1e-06
    %v2402 = vrcp.pop %v2400
    %v2403 = vmul.f32 %v2398, %v2402
    %v2404 = vrcp.pop %v2401
    %v2405 = vmul.f32 %v2399, %v2404
    %v2406 = vadd.f32 %v2403, %v104
    %v2407 = vadd.f32 %v2405, %v104
    %v2409 = vsel %vm52, %v2406, 0
    %v2412 = vsel %vm52, %v2407, 0
    %2414 = vmatprep.subr.mxu0 0.0
    %2415 = vmatpush1.msra.mxu0 0.0
    %2416 = vmatprep.subr.mxu0 0.0
    %2417 = vmatpush1.msra.mxu0 0.0
    %2418 = vmatprep.subr.mxu0 0.0
    %2419 = vmatpush1.msra.mxu0 0.0
    %2420 = vmatprep.subr.mxu0 0.0
    %2421 = vmatpush1.msra.mxu0 0.0
    %2422 = vmatprep.subr.mxu0 0.0
    %2423 = vmatpush1.msra.mxu0 0.0
    %2424 = vmatprep.subr.mxu0 0.0
    %2425 = vmatpush1.msra.mxu0 0.0
    %2426 = vmatprep.subr.mxu0 0.0
    %2427 = vmatpush1.msra.mxu0 0.0
    %2428 = vmatprep.subr.mxu0 0.0
    %2429 = vmatpush1.msra.mxu0 0.0
    %2430 = vmatprep.subr.mxu0 0.0
    %2431 = vmatpush1.msra.mxu0 0.0
    %2432 = vmatprep.subr.mxu0 0.0
    %2433 = vmatpush1.msra.mxu0 0.0
    %2434 = vmatprep.subr.mxu0 0.0
    %2435 = vmatpush1.msra.mxu0 0.0
    %2436 = vmatprep.subr.mxu0 0.0
    %2437 = vmatpush1.msra.mxu0 0.0
    %2438 = vmatprep.subr.mxu0 0.0
    %2439 = vmatpush1.msra.mxu0 %v36
    %2440 = vmatprep.subr.mxu0 0.0
    %2441 = vmatpush1.msra.mxu0 %v35
    %2442 = vmatprep.subr.mxu0 0.0
    %2443 = vmatpush1.msra.mxu0 %v34
    %2444 = vmatprep.subr.mxu0 0.0
    %2445 = vmatpush1.msra.mxu0 %v33
    %2446 = vmatprep.subr.mxu0 0.0
    %2447 = vmatpush2.msra.mxu0 0.0
    %2448 = vmatprep.subr.mxu0 0.0
    %2449 = vmatpush2.msra.mxu0 0.0
    %2450 = vmatprep.subr.mxu0 0.0
    %2451 = vmatpush2.msra.mxu0 0.0
    %2452 = vmatprep.subr.mxu0 0.0
    %2453 = vmatpush2.msra.mxu0 0.0
    %2454 = vmatprep.subr.mxu0 0.0
    %2455 = vmatpush2.msra.mxu0 0.0
    %2456 = vmatprep.subr.mxu0 0.0
    %2457 = vmatpush2.msra.mxu0 0.0
    %2458 = vmatprep.subr.mxu0 0.0
    %2459 = vmatpush2.msra.mxu0 0.0
    %2460 = vmatprep.subr.mxu0 0.0
    %2461 = vmatpush2.msra.mxu0 0.0
    %2462 = vmatprep.subr.mxu0 0.0
    %2463 = vmatpush2.msra.mxu0 0.0
    %2464 = vmatprep.subr.mxu0 0.0
    %2465 = vmatpush2.msra.mxu0 0.0
    %2466 = vmatprep.subr.mxu0 0.0
    %2467 = vmatpush2.msra.mxu0 0.0
    %2468 = vmatprep.subr.mxu0 0.0
    %2469 = vmatpush2.msra.mxu0 0.0
    %2470 = vmatprep.subr.mxu0 0.0
    %2471 = vmatpush2.msra.mxu0 0.0
    %2472 = vmatprep.subr.mxu0 0.0
    %2473 = vmatpush2.msra.mxu0 0.0
    %2474 = vmatprep.subr.mxu0 0.0
    %2475 = vmatpush2.msra.mxu0 0.0
    %2476 = vmatprep.subr.mxu0 0.0
    %2477 = vmatpush2.msra.mxu0 0.0
    %2478 = vmatprep.mubr.f32.mxu0 0.0
    %2479 = vmatmul.mubr.f32.gmra.mxu0 %v2409
    %v2480 = vpop.f32.mrf.mxu0
    %v2481 = vadd.f32 %v111, %v2480
    %v2482 = vpop.f32.mrf.mxu0
    %2483 = vmatprep.mubr.f32.mxu0 0.0
    %2484 = vmatmul.mubr.f32.gmra.mxu0 %v2412
    %v2485 = vpop.f32.mrf.mxu0
    %v2486 = vadd.f32 %v111, %v2485
    %v2487 = vpop.f32.mrf.mxu0
    %2488 = vdwg.mxu0
    %2490 = vrot.lane.b32.xlu0 %v2481, 96
    %v2491 = vpop.permute.xlu0 %2490
    %v2492 = vsel %vm201, %v2481, 0
    %v2494 = vsel %vm201, %v2491, 0
    %2496 = vmatprep.subr.mxu0 0.0
    %2497 = vmatpush1.xpose.msra.mxu0 0.0
    %2498 = vmatprep.subr.mxu0 0.0
    %2499 = vmatpush1.xpose.msra.mxu0 0.0
    %2500 = vmatprep.subr.mxu0 0.0
    %2501 = vmatpush1.xpose.msra.mxu0 0.0
    %2502 = vmatprep.subr.mxu0 0.0
    %2503 = vmatpush1.xpose.msra.mxu0 0.0
    %2504 = vmatprep.subr.mxu0 0.0
    %2505 = vmatpush1.xpose.msra.mxu0 0.0
    %2506 = vmatprep.subr.mxu0 0.0
    %2507 = vmatpush1.xpose.msra.mxu0 0.0
    %2508 = vmatprep.subr.mxu0 0.0
    %2509 = vmatpush1.xpose.msra.mxu0 0.0
    %2510 = vmatprep.subr.mxu0 0.0
    %2511 = vmatpush1.xpose.msra.mxu0 0.0
    %2512 = vmatprep.subr.mxu0 0.0
    %2513 = vmatpush1.xpose.msra.mxu0 0.0
    %2514 = vmatprep.subr.mxu0 0.0
    %2515 = vmatpush1.xpose.msra.mxu0 0.0
    %2516 = vmatprep.subr.mxu0 0.0
    %2517 = vmatpush1.xpose.msra.mxu0 0.0
    %2518 = vmatprep.subr.mxu0 0.0
    %2519 = vmatpush1.xpose.msra.mxu0 0.0
    %2520 = vmatprep.subr.mxu0 0.0
    %2521 = vmatpush1.xpose.msra.mxu0 0.0
    %2522 = vmatprep.subr.mxu0 0.0
    %2523 = vmatpush1.xpose.msra.mxu0 0.0
    %2524 = vmatprep.subr.mxu0 0.0
    %2525 = vmatpush1.xpose.msra.mxu0 0.0
    %2526 = vmatprep.subr.mxu0 0.0
    %2527 = vmatpush1.xpose.msra.mxu0 %v2494
    %2528 = vmatprep.subr.mxu0 0.0
    %2529 = vmatpush2.xpose.msra.mxu0 0.0
    %2530 = vmatprep.subr.mxu0 0.0
    %2531 = vmatpush2.xpose.msra.mxu0 0.0
    %2532 = vmatprep.subr.mxu0 0.0
    %2533 = vmatpush2.xpose.msra.mxu0 0.0
    %2534 = vmatprep.subr.mxu0 0.0
    %2535 = vmatpush2.xpose.msra.mxu0 0.0
    %2536 = vmatprep.subr.mxu0 0.0
    %2537 = vmatpush2.xpose.msra.mxu0 0.0
    %2538 = vmatprep.subr.mxu0 0.0
    %2539 = vmatpush2.xpose.msra.mxu0 0.0
    %2540 = vmatprep.subr.mxu0 0.0
    %2541 = vmatpush2.xpose.msra.mxu0 0.0
    %2542 = vmatprep.subr.mxu0 0.0
    %2543 = vmatpush2.xpose.msra.mxu0 0.0
    %2544 = vmatprep.subr.mxu0 0.0
    %2545 = vmatpush2.xpose.msra.mxu0 0.0
    %2546 = vmatprep.subr.mxu0 0.0
    %2547 = vmatpush2.xpose.msra.mxu0 0.0
    %2548 = vmatprep.subr.mxu0 0.0
    %2549 = vmatpush2.xpose.msra.mxu0 0.0
    %2550 = vmatprep.subr.mxu0 0.0
    %2551 = vmatpush2.xpose.msra.mxu0 0.0
    %2552 = vmatprep.subr.mxu0 0.0
    %2553 = vmatpush2.xpose.msra.mxu0 0.0
    %2554 = vmatprep.subr.mxu0 0.0
    %2555 = vmatpush2.xpose.msra.mxu0 0.0
    %2556 = vmatprep.subr.mxu0 0.0
    %2557 = vmatpush2.xpose.msra.mxu0 0.0
    %2558 = vmatprep.subr.mxu0 0.0
    %2559 = vmatpush2.xpose.msra.mxu0 0.0
    %2560 = vmatprep.mubr.f32.mxu0 0.0
    %2561 = vmatmul.mubr.f32.gmra.mxu0 %v2492
    %v2562 = vpop.f32.mrf.mxu0
    %v2563 = vadd.f32 %v197, %v2562
    %v2564 = vpop.f32.mrf.mxu0
    %2565 = vdwg.mxu0
    %v2566 = vsel %vm201, %v2563, -inf
    %2567 = vmax.xlane.f32.xlu0 %v2566
    %v2568 = vpop.xlane.xlu0 %2567
    %v2569 = vsub.f32 %v2563, %v2568
    %v2570 = vmul.f32 %v2569, 1.442695
    %v2571 = vpow.pop %v2570
    %v2572 = vsel %vm201, %v2571, 0.0
    %2573 = vadd.xlane.f32.xlu0 %v2572
    %v2574 = vpop.xlane.xlu0 %2573
    %v2575 = vrcp.pop %v2574
    %v2576 = vmul.f32 %v2571, %v2575
    %2577 = vrot.lane.b32.xlu0 %v2481, 64
    %v2578 = vpop.permute.xlu0 %2577
    %v2581 = vsel %vm201, %v2576, 0
    %2583 = vmatprep.subr.mxu0 0.0
    %2584 = vmatpush1.msra.mxu0 0.0
    %2585 = vmatprep.subr.mxu0 0.0
    %2586 = vmatpush1.msra.mxu0 0.0
    %2587 = vmatprep.subr.mxu0 0.0
    %2588 = vmatpush1.msra.mxu0 0.0
    %2589 = vmatprep.subr.mxu0 0.0
    %2590 = vmatpush1.msra.mxu0 0.0
    %2591 = vmatprep.subr.mxu0 0.0
    %2592 = vmatpush1.msra.mxu0 0.0
    %2593 = vmatprep.subr.mxu0 0.0
    %2594 = vmatpush1.msra.mxu0 0.0
    %2595 = vmatprep.subr.mxu0 0.0
    %2596 = vmatpush1.msra.mxu0 0.0
    %2597 = vmatprep.subr.mxu0 0.0
    %2598 = vmatpush1.msra.mxu0 0.0
    %2599 = vmatprep.subr.mxu0 0.0
    %2600 = vmatpush1.msra.mxu0 0.0
    %2601 = vmatprep.subr.mxu0 0.0
    %2602 = vmatpush1.msra.mxu0 0.0
    %2603 = vmatprep.subr.mxu0 0.0
    %2604 = vmatpush1.msra.mxu0 0.0
    %2605 = vmatprep.subr.mxu0 0.0
    %2606 = vmatpush1.msra.mxu0 0.0
    %2607 = vmatprep.subr.mxu0 0.0
    %2608 = vmatpush1.msra.mxu0 0.0
    %2609 = vmatprep.subr.mxu0 0.0
    %2610 = vmatpush1.msra.mxu0 0.0
    %2611 = vmatprep.subr.mxu0 0.0
    %2612 = vmatpush1.msra.mxu0 0.0
    %2613 = vmatprep.subr.mxu0 0.0
    %2614 = vmatpush1.msra.mxu0 %v2578
    %2615 = vmatprep.subr.mxu0 0.0
    %2616 = vmatpush2.msra.mxu0 0.0
    %2617 = vmatprep.subr.mxu0 0.0
    %2618 = vmatpush2.msra.mxu0 0.0
    %2619 = vmatprep.subr.mxu0 0.0
    %2620 = vmatpush2.msra.mxu0 0.0
    %2621 = vmatprep.subr.mxu0 0.0
    %2622 = vmatpush2.msra.mxu0 0.0
    %2623 = vmatprep.subr.mxu0 0.0
    %2624 = vmatpush2.msra.mxu0 0.0
    %2625 = vmatprep.subr.mxu0 0.0
    %2626 = vmatpush2.msra.mxu0 0.0
    %2627 = vmatprep.subr.mxu0 0.0
    %2628 = vmatpush2.msra.mxu0 0.0
    %2629 = vmatprep.subr.mxu0 0.0
    %2630 = vmatpush2.msra.mxu0 0.0
    %2631 = vmatprep.subr.mxu0 0.0
    %2632 = vmatpush2.msra.mxu0 0.0
    %2633 = vmatprep.subr.mxu0 0.0
    %2634 = vmatpush2.msra.mxu0 0.0
    %2635 = vmatprep.subr.mxu0 0.0
    %2636 = vmatpush2.msra.mxu0 0.0
    %2637 = vmatprep.subr.mxu0 0.0
    %2638 = vmatpush2.msra.mxu0 0.0
    %2639 = vmatprep.subr.mxu0 0.0
    %2640 = vmatpush2.msra.mxu0 0.0
    %2641 = vmatprep.subr.mxu0 0.0
    %2642 = vmatpush2.msra.mxu0 0.0
    %2643 = vmatprep.subr.mxu0 0.0
    %2644 = vmatpush2.msra.mxu0 0.0
    %2645 = vmatprep.subr.mxu0 0.0
    %2646 = vmatpush2.msra.mxu0 0.0
    %2647 = vmatprep.mubr.f32.mxu0 0.0
    %2648 = vmatmul.mubr.f32.gmra.mxu0 %v2581
    %v2649 = vpop.f32.mrf.mxu0
    %v2650 = vadd.f32 0.0, %v2649
    %v2651 = vpop.f32.mrf.mxu0
    %2652 = vdwg.mxu0
    %2653 = vrot.lane.b32.xlu0 %v2481, 120
    %v2654 = vpop.permute.xlu0 %2653
    %2655 = vrot.lane.b32.xlu0 %v2481, 88
    %v2656 = vpop.permute.xlu0 %2655
    %v2657 = vsel %vm201, %v2654, 0
    %v2659 = vsel %vm201, %v2656, 0
    %2661 = vmatprep.subr.mxu0 0.0
    %2662 = vmatpush1.xpose.msra.mxu0 0.0
    %2663 = vmatprep.subr.mxu0 0.0
    %2664 = vmatpush1.xpose.msra.mxu0 0.0
    %2665 = vmatprep.subr.mxu0 0.0
    %2666 = vmatpush1.xpose.msra.mxu0 0.0
    %2667 = vmatprep.subr.mxu0 0.0
    %2668 = vmatpush1.xpose.msra.mxu0 0.0
    %2669 = vmatprep.subr.mxu0 0.0
    %2670 = vmatpush1.xpose.msra.mxu0 0.0
    %2671 = vmatprep.subr.mxu0 0.0
    %2672 = vmatpush1.xpose.msra.mxu0 0.0
    %2673 = vmatprep.subr.mxu0 0.0
    %2674 = vmatpush1.xpose.msra.mxu0 0.0
    %2675 = vmatprep.subr.mxu0 0.0
    %2676 = vmatpush1.xpose.msra.mxu0 0.0
    %2677 = vmatprep.subr.mxu0 0.0
    %2678 = vmatpush1.xpose.msra.mxu0 0.0
    %2679 = vmatprep.subr.mxu0 0.0
    %2680 = vmatpush1.xpose.msra.mxu0 0.0
    %2681 = vmatprep.subr.mxu0 0.0
    %2682 = vmatpush1.xpose.msra.mxu0 0.0
    %2683 = vmatprep.subr.mxu0 0.0
    %2684 = vmatpush1.xpose.msra.mxu0 0.0
    %2685 = vmatprep.subr.mxu0 0.0
    %2686 = vmatpush1.xpose.msra.mxu0 0.0
    %2687 = vmatprep.subr.mxu0 0.0
    %2688 = vmatpush1.xpose.msra.mxu0 0.0
    %2689 = vmatprep.subr.mxu0 0.0
    %2690 = vmatpush1.xpose.msra.mxu0 0.0
    %2691 = vmatprep.subr.mxu0 0.0
    %2692 = vmatpush1.xpose.msra.mxu0 %v2659
    %2693 = vmatprep.subr.mxu0 0.0
    %2694 = vmatpush2.xpose.msra.mxu0 0.0
    %2695 = vmatprep.subr.mxu0 0.0
    %2696 = vmatpush2.xpose.msra.mxu0 0.0
    %2697 = vmatprep.subr.mxu0 0.0
    %2698 = vmatpush2.xpose.msra.mxu0 0.0
    %2699 = vmatprep.subr.mxu0 0.0
    %2700 = vmatpush2.xpose.msra.mxu0 0.0
    %2701 = vmatprep.subr.mxu0 0.0
    %2702 = vmatpush2.xpose.msra.mxu0 0.0
    %2703 = vmatprep.subr.mxu0 0.0
    %2704 = vmatpush2.xpose.msra.mxu0 0.0
    %2705 = vmatprep.subr.mxu0 0.0
    %2706 = vmatpush2.xpose.msra.mxu0 0.0
    %2707 = vmatprep.subr.mxu0 0.0
    %2708 = vmatpush2.xpose.msra.mxu0 0.0
    %2709 = vmatprep.subr.mxu0 0.0
    %2710 = vmatpush2.xpose.msra.mxu0 0.0
    %2711 = vmatprep.subr.mxu0 0.0
    %2712 = vmatpush2.xpose.msra.mxu0 0.0
    %2713 = vmatprep.subr.mxu0 0.0
    %2714 = vmatpush2.xpose.msra.mxu0 0.0
    %2715 = vmatprep.subr.mxu0 0.0
    %2716 = vmatpush2.xpose.msra.mxu0 0.0
    %2717 = vmatprep.subr.mxu0 0.0
    %2718 = vmatpush2.xpose.msra.mxu0 0.0
    %2719 = vmatprep.subr.mxu0 0.0
    %2720 = vmatpush2.xpose.msra.mxu0 0.0
    %2721 = vmatprep.subr.mxu0 0.0
    %2722 = vmatpush2.xpose.msra.mxu0 0.0
    %2723 = vmatprep.subr.mxu0 0.0
    %2724 = vmatpush2.xpose.msra.mxu0 0.0
    %2725 = vmatprep.mubr.f32.mxu0 0.0
    %2726 = vmatmul.mubr.f32.gmra.mxu0 %v2657
    %v2727 = vpop.f32.mrf.mxu0
    %v2728 = vadd.f32 %v197, %v2727
    %v2729 = vpop.f32.mrf.mxu0
    %2730 = vdwg.mxu0
    %v2731 = vsel %vm201, %v2728, -inf
    %2732 = vmax.xlane.f32.xlu0 %v2731
    %v2733 = vpop.xlane.xlu0 %2732
    %v2734 = vsub.f32 %v2728, %v2733
    %v2735 = vmul.f32 %v2734, 1.442695
    %v2736 = vpow.pop %v2735
    %v2737 = vsel %vm201, %v2736, 0.0
    %2738 = vadd.xlane.f32.xlu0 %v2737
    %v2739 = vpop.xlane.xlu0 %2738
    %v2740 = vrcp.pop %v2739
    %v2741 = vmul.f32 %v2736, %v2740
    %2742 = vrot.lane.b32.xlu0 %v2481, 56
    %v2743 = vpop.permute.xlu0 %2742
    %v2746 = vsel %vm201, %v2741, 0
    %2748 = vmatprep.subr.mxu0 0.0
    %2749 = vmatpush1.msra.mxu0 0.0
    %2750 = vmatprep.subr.mxu0 0.0
    %2751 = vmatpush1.msra.mxu0 0.0
    %2752 = vmatprep.subr.mxu0 0.0
    %2753 = vmatpush1.msra.mxu0 0.0
    %2754 = vmatprep.subr.mxu0 0.0
    %2755 = vmatpush1.msra.mxu0 0.0
    %2756 = vmatprep.subr.mxu0 0.0
    %2757 = vmatpush1.msra.mxu0 0.0
    %2758 = vmatprep.subr.mxu0 0.0
    %2759 = vmatpush1.msra.mxu0 0.0
    %2760 = vmatprep.subr.mxu0 0.0
    %2761 = vmatpush1.msra.mxu0 0.0
    %2762 = vmatprep.subr.mxu0 0.0
    %2763 = vmatpush1.msra.mxu0 0.0
    %2764 = vmatprep.subr.mxu0 0.0
    %2765 = vmatpush1.msra.mxu0 0.0
    %2766 = vmatprep.subr.mxu0 0.0
    %2767 = vmatpush1.msra.mxu0 0.0
    %2768 = vmatprep.subr.mxu0 0.0
    %2769 = vmatpush1.msra.mxu0 0.0
    %2770 = vmatprep.subr.mxu0 0.0
    %2771 = vmatpush1.msra.mxu0 0.0
    %2772 = vmatprep.subr.mxu0 0.0
    %2773 = vmatpush1.msra.mxu0 0.0
    %2774 = vmatprep.subr.mxu0 0.0
    %2775 = vmatpush1.msra.mxu0 0.0
    %2776 = vmatprep.subr.mxu0 0.0
    %2777 = vmatpush1.msra.mxu0 0.0
    %2778 = vmatprep.subr.mxu0 0.0
    %2779 = vmatpush1.msra.mxu0 %v2743
    %2780 = vmatprep.subr.mxu0 0.0
    %2781 = vmatpush2.msra.mxu0 0.0
    %2782 = vmatprep.subr.mxu0 0.0
    %2783 = vmatpush2.msra.mxu0 0.0
    %2784 = vmatprep.subr.mxu0 0.0
    %2785 = vmatpush2.msra.mxu0 0.0
    %2786 = vmatprep.subr.mxu0 0.0
    %2787 = vmatpush2.msra.mxu0 0.0
    %2788 = vmatprep.subr.mxu0 0.0
    %2789 = vmatpush2.msra.mxu0 0.0
    %2790 = vmatprep.subr.mxu0 0.0
    %2791 = vmatpush2.msra.mxu0 0.0
    %2792 = vmatprep.subr.mxu0 0.0
    %2793 = vmatpush2.msra.mxu0 0.0
    %2794 = vmatprep.subr.mxu0 0.0
    %2795 = vmatpush2.msra.mxu0 0.0
    %2796 = vmatprep.subr.mxu0 0.0
    %2797 = vmatpush2.msra.mxu0 0.0
    %2798 = vmatprep.subr.mxu0 0.0
    %2799 = vmatpush2.msra.mxu0 0.0
    %2800 = vmatprep.subr.mxu0 0.0
    %2801 = vmatpush2.msra.mxu0 0.0
    %2802 = vmatprep.subr.mxu0 0.0
    %2803 = vmatpush2.msra.mxu0 0.0
    %2804 = vmatprep.subr.mxu0 0.0
    %2805 = vmatpush2.msra.mxu0 0.0
    %2806 = vmatprep.subr.mxu0 0.0
    %2807 = vmatpush2.msra.mxu0 0.0
    %2808 = vmatprep.subr.mxu0 0.0
    %2809 = vmatpush2.msra.mxu0 0.0
    %2810 = vmatprep.subr.mxu0 0.0
    %2811 = vmatpush2.msra.mxu0 0.0
    %2812 = vmatprep.mubr.f32.mxu0 0.0
    %2813 = vmatmul.mubr.f32.gmra.mxu0 %v2746
    %v2814 = vpop.f32.mrf.mxu0
    %v2815 = vadd.f32 0.0, %v2814
    %v2816 = vpop.f32.mrf.mxu0
    %2817 = vdwg.mxu0
    %v2819 = vsel %vm201, %v2815, 0
    %2821 = vmatprep.subr.mxu0 0.0
    %2822 = vmatpush1.msra.mxu0 0.0
    %2823 = vmatprep.subr.mxu0 0.0
    %2824 = vmatpush1.msra.mxu0 0.0
    %2825 = vmatprep.subr.mxu0 0.0
    %2826 = vmatpush1.msra.mxu0 0.0
    %2827 = vmatprep.subr.mxu0 0.0
    %2828 = vmatpush1.msra.mxu0 0.0
    %2829 = vmatprep.subr.mxu0 0.0
    %2830 = vmatpush1.msra.mxu0 0.0
    %2831 = vmatprep.subr.mxu0 0.0
    %2832 = vmatpush1.msra.mxu0 0.0
    %2833 = vmatprep.subr.mxu0 0.0
    %2834 = vmatpush1.msra.mxu0 0.0
    %2835 = vmatprep.subr.mxu0 0.0
    %2836 = vmatpush1.msra.mxu0 0.0
    %2837 = vmatprep.subr.mxu0 0.0
    %2838 = vmatpush1.msra.mxu0 0.0
    %2839 = vmatprep.subr.mxu0 0.0
    %2840 = vmatpush1.msra.mxu0 0.0
    %2841 = vmatprep.subr.mxu0 0.0
    %2842 = vmatpush1.msra.mxu0 0.0
    %2843 = vmatprep.subr.mxu0 0.0
    %2844 = vmatpush1.msra.mxu0 0.0
    %2845 = vmatprep.subr.mxu0 0.0
    %2846 = vmatpush1.msra.mxu0 0.0
    %2847 = vmatprep.subr.mxu0 0.0
    %2848 = vmatpush1.msra.mxu0 0.0
    %2849 = vmatprep.subr.mxu0 0.0
    %2850 = vmatpush1.msra.mxu0 0.0
    %2851 = vmatprep.subr.mxu0 0.0
    %2852 = vmatpush1.msra.mxu0 %v530
    %2853 = vmatprep.subr.mxu0 0.0
    %2854 = vmatpush2.msra.mxu0 0.0
    %2855 = vmatprep.subr.mxu0 0.0
    %2856 = vmatpush2.msra.mxu0 0.0
    %2857 = vmatprep.subr.mxu0 0.0
    %2858 = vmatpush2.msra.mxu0 0.0
    %2859 = vmatprep.subr.mxu0 0.0
    %2860 = vmatpush2.msra.mxu0 0.0
    %2861 = vmatprep.subr.mxu0 0.0
    %2862 = vmatpush2.msra.mxu0 0.0
    %2863 = vmatprep.subr.mxu0 0.0
    %2864 = vmatpush2.msra.mxu0 0.0
    %2865 = vmatprep.subr.mxu0 0.0
    %2866 = vmatpush2.msra.mxu0 0.0
    %2867 = vmatprep.subr.mxu0 0.0
    %2868 = vmatpush2.msra.mxu0 0.0
    %2869 = vmatprep.subr.mxu0 0.0
    %2870 = vmatpush2.msra.mxu0 0.0
    %2871 = vmatprep.subr.mxu0 0.0
    %2872 = vmatpush2.msra.mxu0 0.0
    %2873 = vmatprep.subr.mxu0 0.0
    %2874 = vmatpush2.msra.mxu0 0.0
    %2875 = vmatprep.subr.mxu0 0.0
    %2876 = vmatpush2.msra.mxu0 0.0
    %2877 = vmatprep.subr.mxu0 0.0
    %2878 = vmatpush2.msra.mxu0 0.0
    %2879 = vmatprep.subr.mxu0 0.0
    %2880 = vmatpush2.msra.mxu0 0.0
    %2881 = vmatprep.subr.mxu0 0.0
    %2882 = vmatpush2.msra.mxu0 0.0
    %2883 = vmatprep.subr.mxu0 0.0
    %2884 = vmatpush2.msra.mxu0 0.0
    %2885 = vmatprep.mubr.f32.mxu0 0.0
    %2886 = vmatmul.mubr.f32.gmra.mxu0 %v2819
    %v2887 = vpop.f32.mrf.mxu0
    %v2888 = vadd.f32 0.0, %v2887
    %v2889 = vpop.f32.mrf.mxu0
    %2890 = vdwg.mxu0
    %v2892 = vsel %vm201, %v2650, 0
    %2894 = vmatprep.subr.mxu0 0.0
    %2895 = vmatpush1.msra.mxu0 0.0
    %2896 = vmatprep.subr.mxu0 0.0
    %2897 = vmatpush1.msra.mxu0 0.0
    %2898 = vmatprep.subr.mxu0 0.0
    %2899 = vmatpush1.msra.mxu0 0.0
    %2900 = vmatprep.subr.mxu0 0.0
    %2901 = vmatpush1.msra.mxu0 0.0
    %2902 = vmatprep.subr.mxu0 0.0
    %2903 = vmatpush1.msra.mxu0 0.0
    %2904 = vmatprep.subr.mxu0 0.0
    %2905 = vmatpush1.msra.mxu0 0.0
    %2906 = vmatprep.subr.mxu0 0.0
    %2907 = vmatpush1.msra.mxu0 0.0
    %2908 = vmatprep.subr.mxu0 0.0
    %2909 = vmatpush1.msra.mxu0 0.0
    %2910 = vmatprep.subr.mxu0 0.0
    %2911 = vmatpush1.msra.mxu0 0.0
    %2912 = vmatprep.subr.mxu0 0.0
    %2913 = vmatpush1.msra.mxu0 0.0
    %2914 = vmatprep.subr.mxu0 0.0
    %2915 = vmatpush1.msra.mxu0 0.0
    %2916 = vmatprep.subr.mxu0 0.0
    %2917 = vmatpush1.msra.mxu0 0.0
    %2918 = vmatprep.subr.mxu0 0.0
    %2919 = vmatpush1.msra.mxu0 0.0
    %2920 = vmatprep.subr.mxu0 0.0
    %2921 = vmatpush1.msra.mxu0 0.0
    %2922 = vmatprep.subr.mxu0 0.0
    %2923 = vmatpush1.msra.mxu0 0.0
    %2924 = vmatprep.subr.mxu0 0.0
    %2925 = vmatpush1.msra.mxu0 %v607
    %2926 = vmatprep.subr.mxu0 0.0
    %2927 = vmatpush2.msra.mxu0 0.0
    %2928 = vmatprep.subr.mxu0 0.0
    %2929 = vmatpush2.msra.mxu0 0.0
    %2930 = vmatprep.subr.mxu0 0.0
    %2931 = vmatpush2.msra.mxu0 0.0
    %2932 = vmatprep.subr.mxu0 0.0
    %2933 = vmatpush2.msra.mxu0 0.0
    %2934 = vmatprep.subr.mxu0 0.0
    %2935 = vmatpush2.msra.mxu0 0.0
    %2936 = vmatprep.subr.mxu0 0.0
    %2937 = vmatpush2.msra.mxu0 0.0
    %2938 = vmatprep.subr.mxu0 0.0
    %2939 = vmatpush2.msra.mxu0 0.0
    %2940 = vmatprep.subr.mxu0 0.0
    %2941 = vmatpush2.msra.mxu0 0.0
    %2942 = vmatprep.subr.mxu0 0.0
    %2943 = vmatpush2.msra.mxu0 0.0
    %2944 = vmatprep.subr.mxu0 0.0
    %2945 = vmatpush2.msra.mxu0 0.0
    %2946 = vmatprep.subr.mxu0 0.0
    %2947 = vmatpush2.msra.mxu0 0.0
    %2948 = vmatprep.subr.mxu0 0.0
    %2949 = vmatpush2.msra.mxu0 0.0
    %2950 = vmatprep.subr.mxu0 0.0
    %2951 = vmatpush2.msra.mxu0 0.0
    %2952 = vmatprep.subr.mxu0 0.0
    %2953 = vmatpush2.msra.mxu0 0.0
    %2954 = vmatprep.subr.mxu0 0.0
    %2955 = vmatpush2.msra.mxu0 0.0
    %2956 = vmatprep.subr.mxu0 0.0
    %2957 = vmatpush2.msra.mxu0 0.0
    %2958 = vmatprep.mubr.f32.mxu0 0.0
    %2959 = vmatmul.mubr.f32.gmra.mxu0 %v2892
    %v2960 = vpop.f32.mrf.mxu0
    %v2961 = vadd.f32 %v2888, %v2960
    %v2962 = vpop.f32.mrf.mxu0
    %2963 = vdwg.mxu0
    %2964 = vrot.lane.b32.xlu0 %v2481, 112
    %v2965 = vpop.permute.xlu0 %2964
    %2966 = vrot.lane.b32.xlu0 %v2481, 80
    %v2967 = vpop.permute.xlu0 %2966
    %v2968 = vsel %vm201, %v2965, 0
    %v2970 = vsel %vm201, %v2967, 0
    %2972 = vmatprep.subr.mxu0 0.0
    %2973 = vmatpush1.xpose.msra.mxu0 0.0
    %2974 = vmatprep.subr.mxu0 0.0
    %2975 = vmatpush1.xpose.msra.mxu0 0.0
    %2976 = vmatprep.subr.mxu0 0.0
    %2977 = vmatpush1.xpose.msra.mxu0 0.0
    %2978 = vmatprep.subr.mxu0 0.0
    %2979 = vmatpush1.xpose.msra.mxu0 0.0
    %2980 = vmatprep.subr.mxu0 0.0
    %2981 = vmatpush1.xpose.msra.mxu0 0.0
    %2982 = vmatprep.subr.mxu0 0.0
    %2983 = vmatpush1.xpose.msra.mxu0 0.0
    %2984 = vmatprep.subr.mxu0 0.0
    %2985 = vmatpush1.xpose.msra.mxu0 0.0
    %2986 = vmatprep.subr.mxu0 0.0
    %2987 = vmatpush1.xpose.msra.mxu0 0.0
    %2988 = vmatprep.subr.mxu0 0.0
    %2989 = vmatpush1.xpose.msra.mxu0 0.0
    %2990 = vmatprep.subr.mxu0 0.0
    %2991 = vmatpush1.xpose.msra.mxu0 0.0
    %2992 = vmatprep.subr.mxu0 0.0
    %2993 = vmatpush1.xpose.msra.mxu0 0.0
    %2994 = vmatprep.subr.mxu0 0.0
    %2995 = vmatpush1.xpose.msra.mxu0 0.0
    %2996 = vmatprep.subr.mxu0 0.0
    %2997 = vmatpush1.xpose.msra.mxu0 0.0
    %2998 = vmatprep.subr.mxu0 0.0
    %2999 = vmatpush1.xpose.msra.mxu0 0.0
    %3000 = vmatprep.subr.mxu0 0.0
    %3001 = vmatpush1.xpose.msra.mxu0 0.0
    %3002 = vmatprep.subr.mxu0 0.0
    %3003 = vmatpush1.xpose.msra.mxu0 %v2970
    %3004 = vmatprep.subr.mxu0 0.0
    %3005 = vmatpush2.xpose.msra.mxu0 0.0
    %3006 = vmatprep.subr.mxu0 0.0
    %3007 = vmatpush2.xpose.msra.mxu0 0.0
    %3008 = vmatprep.subr.mxu0 0.0
    %3009 = vmatpush2.xpose.msra.mxu0 0.0
    %3010 = vmatprep.subr.mxu0 0.0
    %3011 = vmatpush2.xpose.msra.mxu0 0.0
    %3012 = vmatprep.subr.mxu0 0.0
    %3013 = vmatpush2.xpose.msra.mxu0 0.0
    %3014 = vmatprep.subr.mxu0 0.0
    %3015 = vmatpush2.xpose.msra.mxu0 0.0
    %3016 = vmatprep.subr.mxu0 0.0
    %3017 = vmatpush2.xpose.msra.mxu0 0.0
    %3018 = vmatprep.subr.mxu0 0.0
    %3019 = vmatpush2.xpose.msra.mxu0 0.0
    %3020 = vmatprep.subr.mxu0 0.0
    %3021 = vmatpush2.xpose.msra.mxu0 0.0
    %3022 = vmatprep.subr.mxu0 0.0
    %3023 = vmatpush2.xpose.msra.mxu0 0.0
    %3024 = vmatprep.subr.mxu0 0.0
    %3025 = vmatpush2.xpose.msra.mxu0 0.0
    %3026 = vmatprep.subr.mxu0 0.0
    %3027 = vmatpush2.xpose.msra.mxu0 0.0
    %3028 = vmatprep.subr.mxu0 0.0
    %3029 = vmatpush2.xpose.msra.mxu0 0.0
    %3030 = vmatprep.subr.mxu0 0.0
    %3031 = vmatpush2.xpose.msra.mxu0 0.0
    %3032 = vmatprep.subr.mxu0 0.0
    %3033 = vmatpush2.xpose.msra.mxu0 0.0
    %3034 = vmatprep.subr.mxu0 0.0
    %3035 = vmatpush2.xpose.msra.mxu0 0.0
    %3036 = vmatprep.mubr.f32.mxu0 0.0
    %3037 = vmatmul.mubr.f32.gmra.mxu0 %v2968
    %v3038 = vpop.f32.mrf.mxu0
    %v3039 = vadd.f32 %v197, %v3038
    %v3040 = vpop.f32.mrf.mxu0
    %3041 = vdwg.mxu0
    %v3042 = vsel %vm201, %v3039, -inf
    %3043 = vmax.xlane.f32.xlu0 %v3042
    %v3044 = vpop.xlane.xlu0 %3043
    %v3045 = vsub.f32 %v3039, %v3044
    %v3046 = vmul.f32 %v3045, 1.442695
    %v3047 = vpow.pop %v3046
    %v3048 = vsel %vm201, %v3047, 0.0
    %3049 = vadd.xlane.f32.xlu0 %v3048
    %v3050 = vpop.xlane.xlu0 %3049
    %v3051 = vrcp.pop %v3050
    %v3052 = vmul.f32 %v3047, %v3051
    %3053 = vrot.lane.b32.xlu0 %v2481, 48
    %v3054 = vpop.permute.xlu0 %3053
    %v3057 = vsel %vm201, %v3052, 0
    %3059 = vmatprep.subr.mxu0 0.0
    %3060 = vmatpush1.msra.mxu0 0.0
    %3061 = vmatprep.subr.mxu0 0.0
    %3062 = vmatpush1.msra.mxu0 0.0
    %3063 = vmatprep.subr.mxu0 0.0
    %3064 = vmatpush1.msra.mxu0 0.0
    %3065 = vmatprep.subr.mxu0 0.0
    %3066 = vmatpush1.msra.mxu0 0.0
    %3067 = vmatprep.subr.mxu0 0.0
    %3068 = vmatpush1.msra.mxu0 0.0
    %3069 = vmatprep.subr.mxu0 0.0
    %3070 = vmatpush1.msra.mxu0 0.0
    %3071 = vmatprep.subr.mxu0 0.0
    %3072 = vmatpush1.msra.mxu0 0.0
    %3073 = vmatprep.subr.mxu0 0.0
    %3074 = vmatpush1.msra.mxu0 0.0
    %3075 = vmatprep.subr.mxu0 0.0
    %3076 = vmatpush1.msra.mxu0 0.0
    %3077 = vmatprep.subr.mxu0 0.0
    %3078 = vmatpush1.msra.mxu0 0.0
    %3079 = vmatprep.subr.mxu0 0.0
    %3080 = vmatpush1.msra.mxu0 0.0
    %3081 = vmatprep.subr.mxu0 0.0
    %3082 = vmatpush1.msra.mxu0 0.0
    %3083 = vmatprep.subr.mxu0 0.0
    %3084 = vmatpush1.msra.mxu0 0.0
    %3085 = vmatprep.subr.mxu0 0.0
    %3086 = vmatpush1.msra.mxu0 0.0
    %3087 = vmatprep.subr.mxu0 0.0
    %3088 = vmatpush1.msra.mxu0 0.0
    %3089 = vmatprep.subr.mxu0 0.0
    %3090 = vmatpush1.msra.mxu0 %v3054
    %3091 = vmatprep.subr.mxu0 0.0
    %3092 = vmatpush2.msra.mxu0 0.0
    %3093 = vmatprep.subr.mxu0 0.0
    %3094 = vmatpush2.msra.mxu0 0.0
    %3095 = vmatprep.subr.mxu0 0.0
    %3096 = vmatpush2.msra.mxu0 0.0
    %3097 = vmatprep.subr.mxu0 0.0
    %3098 = vmatpush2.msra.mxu0 0.0
    %3099 = vmatprep.subr.mxu0 0.0
    %3100 = vmatpush2.msra.mxu0 0.0
    %3101 = vmatprep.subr.mxu0 0.0
    %3102 = vmatpush2.msra.mxu0 0.0
    %3103 = vmatprep.subr.mxu0 0.0
    %3104 = vmatpush2.msra.mxu0 0.0
    %3105 = vmatprep.subr.mxu0 0.0
    %3106 = vmatpush2.msra.mxu0 0.0
    %3107 = vmatprep.subr.mxu0 0.0
    %3108 = vmatpush2.msra.mxu0 0.0
    %3109 = vmatprep.subr.mxu0 0.0
    %3110 = vmatpush2.msra.mxu0 0.0
    %3111 = vmatprep.subr.mxu0 0.0
    %3112 = vmatpush2.msra.mxu0 0.0
    %3113 = vmatprep.subr.mxu0 0.0
    %3114 = vmatpush2.msra.mxu0 0.0
    %3115 = vmatprep.subr.mxu0 0.0
    %3116 = vmatpush2.msra.mxu0 0.0
    %3117 = vmatprep.subr.mxu0 0.0
    %3118 = vmatpush2.msra.mxu0 0.0
    %3119 = vmatprep.subr.mxu0 0.0
    %3120 = vmatpush2.msra.mxu0 0.0
    %3121 = vmatprep.subr.mxu0 0.0
    %3122 = vmatpush2.msra.mxu0 0.0
    %3123 = vmatprep.mubr.f32.mxu0 0.0
    %3124 = vmatmul.mubr.f32.gmra.mxu0 %v3057
    %v3125 = vpop.f32.mrf.mxu0
    %v3126 = vadd.f32 0.0, %v3125
    %v3127 = vpop.f32.mrf.mxu0
    %3128 = vdwg.mxu0
    %v3130 = vsel %vm201, %v3126, 0
    %3132 = vmatprep.subr.mxu0 0.0
    %3133 = vmatpush1.msra.mxu0 0.0
    %3134 = vmatprep.subr.mxu0 0.0
    %3135 = vmatpush1.msra.mxu0 0.0
    %3136 = vmatprep.subr.mxu0 0.0
    %3137 = vmatpush1.msra.mxu0 0.0
    %3138 = vmatprep.subr.mxu0 0.0
    %3139 = vmatpush1.msra.mxu0 0.0
    %3140 = vmatprep.subr.mxu0 0.0
    %3141 = vmatpush1.msra.mxu0 0.0
    %3142 = vmatprep.subr.mxu0 0.0
    %3143 = vmatpush1.msra.mxu0 0.0
    %3144 = vmatprep.subr.mxu0 0.0
    %3145 = vmatpush1.msra.mxu0 0.0
    %3146 = vmatprep.subr.mxu0 0.0
    %3147 = vmatpush1.msra.mxu0 0.0
    %3148 = vmatprep.subr.mxu0 0.0
    %3149 = vmatpush1.msra.mxu0 0.0
    %3150 = vmatprep.subr.mxu0 0.0
    %3151 = vmatpush1.msra.mxu0 0.0
    %3152 = vmatprep.subr.mxu0 0.0
    %3153 = vmatpush1.msra.mxu0 0.0
    %3154 = vmatprep.subr.mxu0 0.0
    %3155 = vmatpush1.msra.mxu0 0.0
    %3156 = vmatprep.subr.mxu0 0.0
    %3157 = vmatpush1.msra.mxu0 0.0
    %3158 = vmatprep.subr.mxu0 0.0
    %3159 = vmatpush1.msra.mxu0 0.0
    %3160 = vmatprep.subr.mxu0 0.0
    %3161 = vmatpush1.msra.mxu0 0.0
    %3162 = vmatprep.subr.mxu0 0.0
    %3163 = vmatpush1.msra.mxu0 %v849
    %3164 = vmatprep.subr.mxu0 0.0
    %3165 = vmatpush2.msra.mxu0 0.0
    %3166 = vmatprep.subr.mxu0 0.0
    %3167 = vmatpush2.msra.mxu0 0.0
    %3168 = vmatprep.subr.mxu0 0.0
    %3169 = vmatpush2.msra.mxu0 0.0
    %3170 = vmatprep.subr.mxu0 0.0
    %3171 = vmatpush2.msra.mxu0 0.0
    %3172 = vmatprep.subr.mxu0 0.0
    %3173 = vmatpush2.msra.mxu0 0.0
    %3174 = vmatprep.subr.mxu0 0.0
    %3175 = vmatpush2.msra.mxu0 0.0
    %3176 = vmatprep.subr.mxu0 0.0
    %3177 = vmatpush2.msra.mxu0 0.0
    %3178 = vmatprep.subr.mxu0 0.0
    %3179 = vmatpush2.msra.mxu0 0.0
    %3180 = vmatprep.subr.mxu0 0.0
    %3181 = vmatpush2.msra.mxu0 0.0
    %3182 = vmatprep.subr.mxu0 0.0
    %3183 = vmatpush2.msra.mxu0 0.0
    %3184 = vmatprep.subr.mxu0 0.0
    %3185 = vmatpush2.msra.mxu0 0.0
    %3186 = vmatprep.subr.mxu0 0.0
    %3187 = vmatpush2.msra.mxu0 0.0
    %3188 = vmatprep.subr.mxu0 0.0
    %3189 = vmatpush2.msra.mxu0 0.0
    %3190 = vmatprep.subr.mxu0 0.0
    %3191 = vmatpush2.msra.mxu0 0.0
    %3192 = vmatprep.subr.mxu0 0.0
    %3193 = vmatpush2.msra.mxu0 0.0
    %3194 = vmatprep.subr.mxu0 0.0
    %3195 = vmatpush2.msra.mxu0 0.0
    %3196 = vmatprep.mubr.f32.mxu0 0.0
    %3197 = vmatmul.mubr.f32.gmra.mxu0 %v3130
    %v3198 = vpop.f32.mrf.mxu0
    %v3199 = vadd.f32 0.0, %v3198
    %v3200 = vpop.f32.mrf.mxu0
    %3201 = vdwg.mxu0
    %v3202 = vadd.f32 %v2961, %v3199
    %3203 = vrot.lane.b32.xlu0 %v2481, 104
    %v3204 = vpop.permute.xlu0 %3203
    %3205 = vrot.lane.b32.xlu0 %v2481, 72
    %v3206 = vpop.permute.xlu0 %3205
    %v3207 = vsel %vm201, %v3204, 0
    %v3209 = vsel %vm201, %v3206, 0
    %3211 = vmatprep.subr.mxu0 0.0
    %3212 = vmatpush1.xpose.msra.mxu0 0.0
    %3213 = vmatprep.subr.mxu0 0.0
    %3214 = vmatpush1.xpose.msra.mxu0 0.0
    %3215 = vmatprep.subr.mxu0 0.0
    %3216 = vmatpush1.xpose.msra.mxu0 0.0
    %3217 = vmatprep.subr.mxu0 0.0
    %3218 = vmatpush1.xpose.msra.mxu0 0.0
    %3219 = vmatprep.subr.mxu0 0.0
    %3220 = vmatpush1.xpose.msra.mxu0 0.0
    %3221 = vmatprep.subr.mxu0 0.0
    %3222 = vmatpush1.xpose.msra.mxu0 0.0
    %3223 = vmatprep.subr.mxu0 0.0
    %3224 = vmatpush1.xpose.msra.mxu0 0.0
    %3225 = vmatprep.subr.mxu0 0.0
    %3226 = vmatpush1.xpose.msra.mxu0 0.0
    %3227 = vmatprep.subr.mxu0 0.0
    %3228 = vmatpush1.xpose.msra.mxu0 0.0
    %3229 = vmatprep.subr.mxu0 0.0
    %3230 = vmatpush1.xpose.msra.mxu0 0.0
    %3231 = vmatprep.subr.mxu0 0.0
    %3232 = vmatpush1.xpose.msra.mxu0 0.0
    %3233 = vmatprep.subr.mxu0 0.0
    %3234 = vmatpush1.xpose.msra.mxu0 0.0
    %3235 = vmatprep.subr.mxu0 0.0
    %3236 = vmatpush1.xpose.msra.mxu0 0.0
    %3237 = vmatprep.subr.mxu0 0.0
    %3238 = vmatpush1.xpose.msra.mxu0 0.0
    %3239 = vmatprep.subr.mxu0 0.0
    %3240 = vmatpush1.xpose.msra.mxu0 0.0
    %3241 = vmatprep.subr.mxu0 0.0
    %3242 = vmatpush1.xpose.msra.mxu0 %v3209
    %3243 = vmatprep.subr.mxu0 0.0
    %3244 = vmatpush2.xpose.msra.mxu0 0.0
    %3245 = vmatprep.subr.mxu0 0.0
    %3246 = vmatpush2.xpose.msra.mxu0 0.0
    %3247 = vmatprep.subr.mxu0 0.0
    %3248 = vmatpush2.xpose.msra.mxu0 0.0
    %3249 = vmatprep.subr.mxu0 0.0
    %3250 = vmatpush2.xpose.msra.mxu0 0.0
    %3251 = vmatprep.subr.mxu0 0.0
    %3252 = vmatpush2.xpose.msra.mxu0 0.0
    %3253 = vmatprep.subr.mxu0 0.0
    %3254 = vmatpush2.xpose.msra.mxu0 0.0
    %3255 = vmatprep.subr.mxu0 0.0
    %3256 = vmatpush2.xpose.msra.mxu0 0.0
    %3257 = vmatprep.subr.mxu0 0.0
    %3258 = vmatpush2.xpose.msra.mxu0 0.0
    %3259 = vmatprep.subr.mxu0 0.0
    %3260 = vmatpush2.xpose.msra.mxu0 0.0
    %3261 = vmatprep.subr.mxu0 0.0
    %3262 = vmatpush2.xpose.msra.mxu0 0.0
    %3263 = vmatprep.subr.mxu0 0.0
    %3264 = vmatpush2.xpose.msra.mxu0 0.0
    %3265 = vmatprep.subr.mxu0 0.0
    %3266 = vmatpush2.xpose.msra.mxu0 0.0
    %3267 = vmatprep.subr.mxu0 0.0
    %3268 = vmatpush2.xpose.msra.mxu0 0.0
    %3269 = vmatprep.subr.mxu0 0.0
    %3270 = vmatpush2.xpose.msra.mxu0 0.0
    %3271 = vmatprep.subr.mxu0 0.0
    %3272 = vmatpush2.xpose.msra.mxu0 0.0
    %3273 = vmatprep.subr.mxu0 0.0
    %3274 = vmatpush2.xpose.msra.mxu0 0.0
    %3275 = vmatprep.mubr.f32.mxu0 0.0
    %3276 = vmatmul.mubr.f32.gmra.mxu0 %v3207
    %v3277 = vpop.f32.mrf.mxu0
    %v3278 = vadd.f32 %v197, %v3277
    %v3279 = vpop.f32.mrf.mxu0
    %3280 = vdwg.mxu0
    %v3281 = vsel %vm201, %v3278, -inf
    %3282 = vmax.xlane.f32.xlu0 %v3281
    %v3283 = vpop.xlane.xlu0 %3282
    %v3284 = vsub.f32 %v3278, %v3283
    %v3285 = vmul.f32 %v3284, 1.442695
    %v3286 = vpow.pop %v3285
    %v3287 = vsel %vm201, %v3286, 0.0
    %3288 = vadd.xlane.f32.xlu0 %v3287
    %v3289 = vpop.xlane.xlu0 %3288
    %v3290 = vrcp.pop %v3289
    %v3291 = vmul.f32 %v3286, %v3290
    %3292 = vrot.lane.b32.xlu0 %v2481, 40
    %v3293 = vpop.permute.xlu0 %3292
    %v3296 = vsel %vm201, %v3291, 0
    %3298 = vmatprep.subr.mxu0 0.0
    %3299 = vmatpush1.msra.mxu0 0.0
    %3300 = vmatprep.subr.mxu0 0.0
    %3301 = vmatpush1.msra.mxu0 0.0
    %3302 = vmatprep.subr.mxu0 0.0
    %3303 = vmatpush1.msra.mxu0 0.0
    %3304 = vmatprep.subr.mxu0 0.0
    %3305 = vmatpush1.msra.mxu0 0.0
    %3306 = vmatprep.subr.mxu0 0.0
    %3307 = vmatpush1.msra.mxu0 0.0
    %3308 = vmatprep.subr.mxu0 0.0
    %3309 = vmatpush1.msra.mxu0 0.0
    %3310 = vmatprep.subr.mxu0 0.0
    %3311 = vmatpush1.msra.mxu0 0.0
    %3312 = vmatprep.subr.mxu0 0.0
    %3313 = vmatpush1.msra.mxu0 0.0
    %3314 = vmatprep.subr.mxu0 0.0
    %3315 = vmatpush1.msra.mxu0 0.0
    %3316 = vmatprep.subr.mxu0 0.0
    %3317 = vmatpush1.msra.mxu0 0.0
    %3318 = vmatprep.subr.mxu0 0.0
    %3319 = vmatpush1.msra.mxu0 0.0
    %3320 = vmatprep.subr.mxu0 0.0
    %3321 = vmatpush1.msra.mxu0 0.0
    %3322 = vmatprep.subr.mxu0 0.0
    %3323 = vmatpush1.msra.mxu0 0.0
    %3324 = vmatprep.subr.mxu0 0.0
    %3325 = vmatpush1.msra.mxu0 0.0
    %3326 = vmatprep.subr.mxu0 0.0
    %3327 = vmatpush1.msra.mxu0 0.0
    %3328 = vmatprep.subr.mxu0 0.0
    %3329 = vmatpush1.msra.mxu0 %v3293
    %3330 = vmatprep.subr.mxu0 0.0
    %3331 = vmatpush2.msra.mxu0 0.0
    %3332 = vmatprep.subr.mxu0 0.0
    %3333 = vmatpush2.msra.mxu0 0.0
    %3334 = vmatprep.subr.mxu0 0.0
    %3335 = vmatpush2.msra.mxu0 0.0
    %3336 = vmatprep.subr.mxu0 0.0
    %3337 = vmatpush2.msra.mxu0 0.0
    %3338 = vmatprep.subr.mxu0 0.0
    %3339 = vmatpush2.msra.mxu0 0.0
    %3340 = vmatprep.subr.mxu0 0.0
    %3341 = vmatpush2.msra.mxu0 0.0
    %3342 = vmatprep.subr.mxu0 0.0
    %3343 = vmatpush2.msra.mxu0 0.0
    %3344 = vmatprep.subr.mxu0 0.0
    %3345 = vmatpush2.msra.mxu0 0.0
    %3346 = vmatprep.subr.mxu0 0.0
    %3347 = vmatpush2.msra.mxu0 0.0
    %3348 = vmatprep.subr.mxu0 0.0
    %3349 = vmatpush2.msra.mxu0 0.0
    %3350 = vmatprep.subr.mxu0 0.0
    %3351 = vmatpush2.msra.mxu0 0.0
    %3352 = vmatprep.subr.mxu0 0.0
    %3353 = vmatpush2.msra.mxu0 0.0
    %3354 = vmatprep.subr.mxu0 0.0
    %3355 = vmatpush2.msra.mxu0 0.0
    %3356 = vmatprep.subr.mxu0 0.0
    %3357 = vmatpush2.msra.mxu0 0.0
    %3358 = vmatprep.subr.mxu0 0.0
    %3359 = vmatpush2.msra.mxu0 0.0
    %3360 = vmatprep.subr.mxu0 0.0
    %3361 = vmatpush2.msra.mxu0 0.0
    %3362 = vmatprep.mubr.f32.mxu0 0.0
    %3363 = vmatmul.mubr.f32.gmra.mxu0 %v3296
    %v3364 = vpop.f32.mrf.mxu0
    %v3365 = vadd.f32 0.0, %v3364
    %v3366 = vpop.f32.mrf.mxu0
    %3367 = vdwg.mxu0
    %v3369 = vsel %vm201, %v3365, 0
    %3371 = vmatprep.subr.mxu0 0.0
    %3372 = vmatpush1.msra.mxu0 0.0
    %3373 = vmatprep.subr.mxu0 0.0
    %3374 = vmatpush1.msra.mxu0 0.0
    %3375 = vmatprep.subr.mxu0 0.0
    %3376 = vmatpush1.msra.mxu0 0.0
    %3377 = vmatprep.subr.mxu0 0.0
    %3378 = vmatpush1.msra.mxu0 0.0
    %3379 = vmatprep.subr.mxu0 0.0
    %3380 = vmatpush1.msra.mxu0 0.0
    %3381 = vmatprep.subr.mxu0 0.0
    %3382 = vmatpush1.msra.mxu0 0.0
    %3383 = vmatprep.subr.mxu0 0.0
    %3384 = vmatpush1.msra.mxu0 0.0
    %3385 = vmatprep.subr.mxu0 0.0
    %3386 = vmatpush1.msra.mxu0 0.0
    %3387 = vmatprep.subr.mxu0 0.0
    %3388 = vmatpush1.msra.mxu0 0.0
    %3389 = vmatprep.subr.mxu0 0.0
    %3390 = vmatpush1.msra.mxu0 0.0
    %3391 = vmatprep.subr.mxu0 0.0
    %3392 = vmatpush1.msra.mxu0 0.0
    %3393 = vmatprep.subr.mxu0 0.0
    %3394 = vmatpush1.msra.mxu0 0.0
    %3395 = vmatprep.subr.mxu0 0.0
    %3396 = vmatpush1.msra.mxu0 0.0
    %3397 = vmatprep.subr.mxu0 0.0
    %3398 = vmatpush1.msra.mxu0 0.0
    %3399 = vmatprep.subr.mxu0 0.0
    %3400 = vmatpush1.msra.mxu0 0.0
    %3401 = vmatprep.subr.mxu0 0.0
    %3402 = vmatpush1.msra.mxu0 %v1092
    %3403 = vmatprep.subr.mxu0 0.0
    %3404 = vmatpush2.msra.mxu0 0.0
    %3405 = vmatprep.subr.mxu0 0.0
    %3406 = vmatpush2.msra.mxu0 0.0
    %3407 = vmatprep.subr.mxu0 0.0
    %3408 = vmatpush2.msra.mxu0 0.0
    %3409 = vmatprep.subr.mxu0 0.0
    %3410 = vmatpush2.msra.mxu0 0.0
    %3411 = vmatprep.subr.mxu0 0.0
    %3412 = vmatpush2.msra.mxu0 0.0
    %3413 = vmatprep.subr.mxu0 0.0
    %3414 = vmatpush2.msra.mxu0 0.0
    %3415 = vmatprep.subr.mxu0 0.0
    %3416 = vmatpush2.msra.mxu0 0.0
    %3417 = vmatprep.subr.mxu0 0.0
    %3418 = vmatpush2.msra.mxu0 0.0
    %3419 = vmatprep.subr.mxu0 0.0
    %3420 = vmatpush2.msra.mxu0 0.0
    %3421 = vmatprep.subr.mxu0 0.0
    %3422 = vmatpush2.msra.mxu0 0.0
    %3423 = vmatprep.subr.mxu0 0.0
    %3424 = vmatpush2.msra.mxu0 0.0
    %3425 = vmatprep.subr.mxu0 0.0
    %3426 = vmatpush2.msra.mxu0 0.0
    %3427 = vmatprep.subr.mxu0 0.0
    %3428 = vmatpush2.msra.mxu0 0.0
    %3429 = vmatprep.subr.mxu0 0.0
    %3430 = vmatpush2.msra.mxu0 0.0
    %3431 = vmatprep.subr.mxu0 0.0
    %3432 = vmatpush2.msra.mxu0 0.0
    %3433 = vmatprep.subr.mxu0 0.0
    %3434 = vmatpush2.msra.mxu0 0.0
    %3435 = vmatprep.mubr.f32.mxu0 0.0
    %3436 = vmatmul.mubr.f32.gmra.mxu0 %v3369
    %v3437 = vpop.f32.mrf.mxu0
    %v3438 = vadd.f32 0.0, %v3437
    %v3439 = vpop.f32.mrf.mxu0
    %3440 = vdwg.mxu0
    %v3441 = vadd.f32 %v3202, %v3438
    %3443 = vrot.lane.b32.xlu0 %v2486, 96
    %v3444 = vpop.permute.xlu0 %3443
    %v3445 = vsel %vm201, %v2486, 0
    %v3447 = vsel %vm201, %v3444, 0
    %3449 = vmatprep.subr.mxu0 0.0
    %3450 = vmatpush1.xpose.msra.mxu0 0.0
    %3451 = vmatprep.subr.mxu0 0.0
    %3452 = vmatpush1.xpose.msra.mxu0 0.0
    %3453 = vmatprep.subr.mxu0 0.0
    %3454 = vmatpush1.xpose.msra.mxu0 0.0
    %3455 = vmatprep.subr.mxu0 0.0
    %3456 = vmatpush1.xpose.msra.mxu0 0.0
    %3457 = vmatprep.subr.mxu0 0.0
    %3458 = vmatpush1.xpose.msra.mxu0 0.0
    %3459 = vmatprep.subr.mxu0 0.0
    %3460 = vmatpush1.xpose.msra.mxu0 0.0
    %3461 = vmatprep.subr.mxu0 0.0
    %3462 = vmatpush1.xpose.msra.mxu0 0.0
    %3463 = vmatprep.subr.mxu0 0.0
    %3464 = vmatpush1.xpose.msra.mxu0 0.0
    %3465 = vmatprep.subr.mxu0 0.0
    %3466 = vmatpush1.xpose.msra.mxu0 0.0
    %3467 = vmatprep.subr.mxu0 0.0
    %3468 = vmatpush1.xpose.msra.mxu0 0.0
    %3469 = vmatprep.subr.mxu0 0.0
    %3470 = vmatpush1.xpose.msra.mxu0 0.0
    %3471 = vmatprep.subr.mxu0 0.0
    %3472 = vmatpush1.xpose.msra.mxu0 0.0
    %3473 = vmatprep.subr.mxu0 0.0
    %3474 = vmatpush1.xpose.msra.mxu0 0.0
    %3475 = vmatprep.subr.mxu0 0.0
    %3476 = vmatpush1.xpose.msra.mxu0 0.0
    %3477 = vmatprep.subr.mxu0 0.0
    %3478 = vmatpush1.xpose.msra.mxu0 0.0
    %3479 = vmatprep.subr.mxu0 0.0
    %3480 = vmatpush1.xpose.msra.mxu0 %v3447
    %3481 = vmatprep.subr.mxu0 0.0
    %3482 = vmatpush2.xpose.msra.mxu0 0.0
    %3483 = vmatprep.subr.mxu0 0.0
    %3484 = vmatpush2.xpose.msra.mxu0 0.0
    %3485 = vmatprep.subr.mxu0 0.0
    %3486 = vmatpush2.xpose.msra.mxu0 0.0
    %3487 = vmatprep.subr.mxu0 0.0
    %3488 = vmatpush2.xpose.msra.mxu0 0.0
    %3489 = vmatprep.subr.mxu0 0.0
    %3490 = vmatpush2.xpose.msra.mxu0 0.0
    %3491 = vmatprep.subr.mxu0 0.0
    %3492 = vmatpush2.xpose.msra.mxu0 0.0
    %3493 = vmatprep.subr.mxu0 0.0
    %3494 = vmatpush2.xpose.msra.mxu0 0.0
    %3495 = vmatprep.subr.mxu0 0.0
    %3496 = vmatpush2.xpose.msra.mxu0 0.0
    %3497 = vmatprep.subr.mxu0 0.0
    %3498 = vmatpush2.xpose.msra.mxu0 0.0
    %3499 = vmatprep.subr.mxu0 0.0
    %3500 = vmatpush2.xpose.msra.mxu0 0.0
    %3501 = vmatprep.subr.mxu0 0.0
    %3502 = vmatpush2.xpose.msra.mxu0 0.0
    %3503 = vmatprep.subr.mxu0 0.0
    %3504 = vmatpush2.xpose.msra.mxu0 0.0
    %3505 = vmatprep.subr.mxu0 0.0
    %3506 = vmatpush2.xpose.msra.mxu0 0.0
    %3507 = vmatprep.subr.mxu0 0.0
    %3508 = vmatpush2.xpose.msra.mxu0 0.0
    %3509 = vmatprep.subr.mxu0 0.0
    %3510 = vmatpush2.xpose.msra.mxu0 0.0
    %3511 = vmatprep.subr.mxu0 0.0
    %3512 = vmatpush2.xpose.msra.mxu0 0.0
    %3513 = vmatprep.mubr.f32.mxu0 0.0
    %3514 = vmatmul.mubr.f32.gmra.mxu0 %v3445
    %v3515 = vpop.f32.mrf.mxu0
    %v3516 = vadd.f32 %v1171, %v3515
    %v3517 = vpop.f32.mrf.mxu0
    %3518 = vdwg.mxu0
    %v3519 = vsel %vm201, %v3516, -inf
    %3520 = vmax.xlane.f32.xlu0 %v3519
    %v3521 = vpop.xlane.xlu0 %3520
    %v3522 = vsub.f32 %v3516, %v3521
    %v3523 = vmul.f32 %v3522, 1.442695
    %v3524 = vpow.pop %v3523
    %v3525 = vsel %vm201, %v3524, 0.0
    %3526 = vadd.xlane.f32.xlu0 %v3525
    %v3527 = vpop.xlane.xlu0 %3526
    %v3528 = vrcp.pop %v3527
    %v3529 = vmul.f32 %v3524, %v3528
    %3530 = vrot.lane.b32.xlu0 %v2486, 64
    %v3531 = vpop.permute.xlu0 %3530
    %v3534 = vsel %vm201, %v3529, 0
    %3536 = vmatprep.subr.mxu0 0.0
    %3537 = vmatpush1.msra.mxu0 0.0
    %3538 = vmatprep.subr.mxu0 0.0
    %3539 = vmatpush1.msra.mxu0 0.0
    %3540 = vmatprep.subr.mxu0 0.0
    %3541 = vmatpush1.msra.mxu0 0.0
    %3542 = vmatprep.subr.mxu0 0.0
    %3543 = vmatpush1.msra.mxu0 0.0
    %3544 = vmatprep.subr.mxu0 0.0
    %3545 = vmatpush1.msra.mxu0 0.0
    %3546 = vmatprep.subr.mxu0 0.0
    %3547 = vmatpush1.msra.mxu0 0.0
    %3548 = vmatprep.subr.mxu0 0.0
    %3549 = vmatpush1.msra.mxu0 0.0
    %3550 = vmatprep.subr.mxu0 0.0
    %3551 = vmatpush1.msra.mxu0 0.0
    %3552 = vmatprep.subr.mxu0 0.0
    %3553 = vmatpush1.msra.mxu0 0.0
    %3554 = vmatprep.subr.mxu0 0.0
    %3555 = vmatpush1.msra.mxu0 0.0
    %3556 = vmatprep.subr.mxu0 0.0
    %3557 = vmatpush1.msra.mxu0 0.0
    %3558 = vmatprep.subr.mxu0 0.0
    %3559 = vmatpush1.msra.mxu0 0.0
    %3560 = vmatprep.subr.mxu0 0.0
    %3561 = vmatpush1.msra.mxu0 0.0
    %3562 = vmatprep.subr.mxu0 0.0
    %3563 = vmatpush1.msra.mxu0 0.0
    %3564 = vmatprep.subr.mxu0 0.0
    %3565 = vmatpush1.msra.mxu0 0.0
    %3566 = vmatprep.subr.mxu0 0.0
    %3567 = vmatpush1.msra.mxu0 %v3531
    %3568 = vmatprep.subr.mxu0 0.0
    %3569 = vmatpush2.msra.mxu0 0.0
    %3570 = vmatprep.subr.mxu0 0.0
    %3571 = vmatpush2.msra.mxu0 0.0
    %3572 = vmatprep.subr.mxu0 0.0
    %3573 = vmatpush2.msra.mxu0 0.0
    %3574 = vmatprep.subr.mxu0 0.0
    %3575 = vmatpush2.msra.mxu0 0.0
    %3576 = vmatprep.subr.mxu0 0.0
    %3577 = vmatpush2.msra.mxu0 0.0
    %3578 = vmatprep.subr.mxu0 0.0
    %3579 = vmatpush2.msra.mxu0 0.0
    %3580 = vmatprep.subr.mxu0 0.0
    %3581 = vmatpush2.msra.mxu0 0.0
    %3582 = vmatprep.subr.mxu0 0.0
    %3583 = vmatpush2.msra.mxu0 0.0
    %3584 = vmatprep.subr.mxu0 0.0
    %3585 = vmatpush2.msra.mxu0 0.0
    %3586 = vmatprep.subr.mxu0 0.0
    %3587 = vmatpush2.msra.mxu0 0.0
    %3588 = vmatprep.subr.mxu0 0.0
    %3589 = vmatpush2.msra.mxu0 0.0
    %3590 = vmatprep.subr.mxu0 0.0
    %3591 = vmatpush2.msra.mxu0 0.0
    %3592 = vmatprep.subr.mxu0 0.0
    %3593 = vmatpush2.msra.mxu0 0.0
    %3594 = vmatprep.subr.mxu0 0.0
    %3595 = vmatpush2.msra.mxu0 0.0
    %3596 = vmatprep.subr.mxu0 0.0
    %3597 = vmatpush2.msra.mxu0 0.0
    %3598 = vmatprep.subr.mxu0 0.0
    %3599 = vmatpush2.msra.mxu0 0.0
    %3600 = vmatprep.mubr.f32.mxu0 0.0
    %3601 = vmatmul.mubr.f32.gmra.mxu0 %v3534
    %v3602 = vpop.f32.mrf.mxu0
    %v3603 = vadd.f32 0.0, %v3602
    %v3604 = vpop.f32.mrf.mxu0
    %3605 = vdwg.mxu0
    %3606 = vrot.lane.b32.xlu0 %v2486, 120
    %v3607 = vpop.permute.xlu0 %3606
    %3608 = vrot.lane.b32.xlu0 %v2486, 88
    %v3609 = vpop.permute.xlu0 %3608
    %v3610 = vsel %vm201, %v3607, 0
    %v3612 = vsel %vm201, %v3609, 0
    %3614 = vmatprep.subr.mxu0 0.0
    %3615 = vmatpush1.xpose.msra.mxu0 0.0
    %3616 = vmatprep.subr.mxu0 0.0
    %3617 = vmatpush1.xpose.msra.mxu0 0.0
    %3618 = vmatprep.subr.mxu0 0.0
    %3619 = vmatpush1.xpose.msra.mxu0 0.0
    %3620 = vmatprep.subr.mxu0 0.0
    %3621 = vmatpush1.xpose.msra.mxu0 0.0
    %3622 = vmatprep.subr.mxu0 0.0
    %3623 = vmatpush1.xpose.msra.mxu0 0.0
    %3624 = vmatprep.subr.mxu0 0.0
    %3625 = vmatpush1.xpose.msra.mxu0 0.0
    %3626 = vmatprep.subr.mxu0 0.0
    %3627 = vmatpush1.xpose.msra.mxu0 0.0
    %3628 = vmatprep.subr.mxu0 0.0
    %3629 = vmatpush1.xpose.msra.mxu0 0.0
    %3630 = vmatprep.subr.mxu0 0.0
    %3631 = vmatpush1.xpose.msra.mxu0 0.0
    %3632 = vmatprep.subr.mxu0 0.0
    %3633 = vmatpush1.xpose.msra.mxu0 0.0
    %3634 = vmatprep.subr.mxu0 0.0
    %3635 = vmatpush1.xpose.msra.mxu0 0.0
    %3636 = vmatprep.subr.mxu0 0.0
    %3637 = vmatpush1.xpose.msra.mxu0 0.0
    %3638 = vmatprep.subr.mxu0 0.0
    %3639 = vmatpush1.xpose.msra.mxu0 0.0
    %3640 = vmatprep.subr.mxu0 0.0
    %3641 = vmatpush1.xpose.msra.mxu0 0.0
    %3642 = vmatprep.subr.mxu0 0.0
    %3643 = vmatpush1.xpose.msra.mxu0 0.0
    %3644 = vmatprep.subr.mxu0 0.0
    %3645 = vmatpush1.xpose.msra.mxu0 %v3612
    %3646 = vmatprep.subr.mxu0 0.0
    %3647 = vmatpush2.xpose.msra.mxu0 0.0
    %3648 = vmatprep.subr.mxu0 0.0
    %3649 = vmatpush2.xpose.msra.mxu0 0.0
    %3650 = vmatprep.subr.mxu0 0.0
    %3651 = vmatpush2.xpose.msra.mxu0 0.0
    %3652 = vmatprep.subr.mxu0 0.0
    %3653 = vmatpush2.xpose.msra.mxu0 0.0
    %3654 = vmatprep.subr.mxu0 0.0
    %3655 = vmatpush2.xpose.msra.mxu0 0.0
    %3656 = vmatprep.subr.mxu0 0.0
    %3657 = vmatpush2.xpose.msra.mxu0 0.0
    %3658 = vmatprep.subr.mxu0 0.0
    %3659 = vmatpush2.xpose.msra.mxu0 0.0
    %3660 = vmatprep.subr.mxu0 0.0
    %3661 = vmatpush2.xpose.msra.mxu0 0.0
    %3662 = vmatprep.subr.mxu0 0.0
    %3663 = vmatpush2.xpose.msra.mxu0 0.0
    %3664 = vmatprep.subr.mxu0 0.0
    %3665 = vmatpush2.xpose.msra.mxu0 0.0
    %3666 = vmatprep.subr.mxu0 0.0
    %3667 = vmatpush2.xpose.msra.mxu0 0.0
    %3668 = vmatprep.subr.mxu0 0.0
    %3669 = vmatpush2.xpose.msra.mxu0 0.0
    %3670 = vmatprep.subr.mxu0 0.0
    %3671 = vmatpush2.xpose.msra.mxu0 0.0
    %3672 = vmatprep.subr.mxu0 0.0
    %3673 = vmatpush2.xpose.msra.mxu0 0.0
    %3674 = vmatprep.subr.mxu0 0.0
    %3675 = vmatpush2.xpose.msra.mxu0 0.0
    %3676 = vmatprep.subr.mxu0 0.0
    %3677 = vmatpush2.xpose.msra.mxu0 0.0
    %3678 = vmatprep.mubr.f32.mxu0 0.0
    %3679 = vmatmul.mubr.f32.gmra.mxu0 %v3610
    %v3680 = vpop.f32.mrf.mxu0
    %v3681 = vadd.f32 %v1171, %v3680
    %v3682 = vpop.f32.mrf.mxu0
    %3683 = vdwg.mxu0
    %v3684 = vsel %vm201, %v3681, -inf
    %3685 = vmax.xlane.f32.xlu0 %v3684
    %v3686 = vpop.xlane.xlu0 %3685
    %v3687 = vsub.f32 %v3681, %v3686
    %v3688 = vmul.f32 %v3687, 1.442695
    %v3689 = vpow.pop %v3688
    %v3690 = vsel %vm201, %v3689, 0.0
    %3691 = vadd.xlane.f32.xlu0 %v3690
    %v3692 = vpop.xlane.xlu0 %3691
    %v3693 = vrcp.pop %v3692
    %v3694 = vmul.f32 %v3689, %v3693
    %3695 = vrot.lane.b32.xlu0 %v2486, 56
    %v3696 = vpop.permute.xlu0 %3695
    %v3699 = vsel %vm201, %v3694, 0
    %3701 = vmatprep.subr.mxu0 0.0
    %3702 = vmatpush1.msra.mxu0 0.0
    %3703 = vmatprep.subr.mxu0 0.0
    %3704 = vmatpush1.msra.mxu0 0.0
    %3705 = vmatprep.subr.mxu0 0.0
    %3706 = vmatpush1.msra.mxu0 0.0
    %3707 = vmatprep.subr.mxu0 0.0
    %3708 = vmatpush1.msra.mxu0 0.0
    %3709 = vmatprep.subr.mxu0 0.0
    %3710 = vmatpush1.msra.mxu0 0.0
    %3711 = vmatprep.subr.mxu0 0.0
    %3712 = vmatpush1.msra.mxu0 0.0
    %3713 = vmatprep.subr.mxu0 0.0
    %3714 = vmatpush1.msra.mxu0 0.0
    %3715 = vmatprep.subr.mxu0 0.0
    %3716 = vmatpush1.msra.mxu0 0.0
    %3717 = vmatprep.subr.mxu0 0.0
    %3718 = vmatpush1.msra.mxu0 0.0
    %3719 = vmatprep.subr.mxu0 0.0
    %3720 = vmatpush1.msra.mxu0 0.0
    %3721 = vmatprep.subr.mxu0 0.0
    %3722 = vmatpush1.msra.mxu0 0.0
    %3723 = vmatprep.subr.mxu0 0.0
    %3724 = vmatpush1.msra.mxu0 0.0
    %3725 = vmatprep.subr.mxu0 0.0
    %3726 = vmatpush1.msra.mxu0 0.0
    %3727 = vmatprep.subr.mxu0 0.0
    %3728 = vmatpush1.msra.mxu0 0.0
    %3729 = vmatprep.subr.mxu0 0.0
    %3730 = vmatpush1.msra.mxu0 0.0
    %3731 = vmatprep.subr.mxu0 0.0
    %3732 = vmatpush1.msra.mxu0 %v3696
    %3733 = vmatprep.subr.mxu0 0.0
    %3734 = vmatpush2.msra.mxu0 0.0
    %3735 = vmatprep.subr.mxu0 0.0
    %3736 = vmatpush2.msra.mxu0 0.0
    %3737 = vmatprep.subr.mxu0 0.0
    %3738 = vmatpush2.msra.mxu0 0.0
    %3739 = vmatprep.subr.mxu0 0.0
    %3740 = vmatpush2.msra.mxu0 0.0
    %3741 = vmatprep.subr.mxu0 0.0
    %3742 = vmatpush2.msra.mxu0 0.0
    %3743 = vmatprep.subr.mxu0 0.0
    %3744 = vmatpush2.msra.mxu0 0.0
    %3745 = vmatprep.subr.mxu0 0.0
    %3746 = vmatpush2.msra.mxu0 0.0
    %3747 = vmatprep.subr.mxu0 0.0
    %3748 = vmatpush2.msra.mxu0 0.0
    %3749 = vmatprep.subr.mxu0 0.0
    %3750 = vmatpush2.msra.mxu0 0.0
    %3751 = vmatprep.subr.mxu0 0.0
    %3752 = vmatpush2.msra.mxu0 0.0
    %3753 = vmatprep.subr.mxu0 0.0
    %3754 = vmatpush2.msra.mxu0 0.0
    %3755 = vmatprep.subr.mxu0 0.0
    %3756 = vmatpush2.msra.mxu0 0.0
    %3757 = vmatprep.subr.mxu0 0.0
    %3758 = vmatpush2.msra.mxu0 0.0
    %3759 = vmatprep.subr.mxu0 0.0
    %3760 = vmatpush2.msra.mxu0 0.0
    %3761 = vmatprep.subr.mxu0 0.0
    %3762 = vmatpush2.msra.mxu0 0.0
    %3763 = vmatprep.subr.mxu0 0.0
    %3764 = vmatpush2.msra.mxu0 0.0
    %3765 = vmatprep.mubr.f32.mxu0 0.0
    %3766 = vmatmul.mubr.f32.gmra.mxu0 %v3699
    %v3767 = vpop.f32.mrf.mxu0
    %v3768 = vadd.f32 0.0, %v3767
    %v3769 = vpop.f32.mrf.mxu0
    %3770 = vdwg.mxu0
    %v3772 = vsel %vm201, %v3768, 0
    %3774 = vmatprep.subr.mxu0 0.0
    %3775 = vmatpush1.msra.mxu0 0.0
    %3776 = vmatprep.subr.mxu0 0.0
    %3777 = vmatpush1.msra.mxu0 0.0
    %3778 = vmatprep.subr.mxu0 0.0
    %3779 = vmatpush1.msra.mxu0 0.0
    %3780 = vmatprep.subr.mxu0 0.0
    %3781 = vmatpush1.msra.mxu0 0.0
    %3782 = vmatprep.subr.mxu0 0.0
    %3783 = vmatpush1.msra.mxu0 0.0
    %3784 = vmatprep.subr.mxu0 0.0
    %3785 = vmatpush1.msra.mxu0 0.0
    %3786 = vmatprep.subr.mxu0 0.0
    %3787 = vmatpush1.msra.mxu0 0.0
    %3788 = vmatprep.subr.mxu0 0.0
    %3789 = vmatpush1.msra.mxu0 0.0
    %3790 = vmatprep.subr.mxu0 0.0
    %3791 = vmatpush1.msra.mxu0 0.0
    %3792 = vmatprep.subr.mxu0 0.0
    %3793 = vmatpush1.msra.mxu0 0.0
    %3794 = vmatprep.subr.mxu0 0.0
    %3795 = vmatpush1.msra.mxu0 0.0
    %3796 = vmatprep.subr.mxu0 0.0
    %3797 = vmatpush1.msra.mxu0 0.0
    %3798 = vmatprep.subr.mxu0 0.0
    %3799 = vmatpush1.msra.mxu0 0.0
    %3800 = vmatprep.subr.mxu0 0.0
    %3801 = vmatpush1.msra.mxu0 0.0
    %3802 = vmatprep.subr.mxu0 0.0
    %3803 = vmatpush1.msra.mxu0 0.0
    %3804 = vmatprep.subr.mxu0 0.0
    %3805 = vmatpush1.msra.mxu0 %v530
    %3806 = vmatprep.subr.mxu0 0.0
    %3807 = vmatpush2.msra.mxu0 0.0
    %3808 = vmatprep.subr.mxu0 0.0
    %3809 = vmatpush2.msra.mxu0 0.0
    %3810 = vmatprep.subr.mxu0 0.0
    %3811 = vmatpush2.msra.mxu0 0.0
    %3812 = vmatprep.subr.mxu0 0.0
    %3813 = vmatpush2.msra.mxu0 0.0
    %3814 = vmatprep.subr.mxu0 0.0
    %3815 = vmatpush2.msra.mxu0 0.0
    %3816 = vmatprep.subr.mxu0 0.0
    %3817 = vmatpush2.msra.mxu0 0.0
    %3818 = vmatprep.subr.mxu0 0.0
    %3819 = vmatpush2.msra.mxu0 0.0
    %3820 = vmatprep.subr.mxu0 0.0
    %3821 = vmatpush2.msra.mxu0 0.0
    %3822 = vmatprep.subr.mxu0 0.0
    %3823 = vmatpush2.msra.mxu0 0.0
    %3824 = vmatprep.subr.mxu0 0.0
    %3825 = vmatpush2.msra.mxu0 0.0
    %3826 = vmatprep.subr.mxu0 0.0
    %3827 = vmatpush2.msra.mxu0 0.0
    %3828 = vmatprep.subr.mxu0 0.0
    %3829 = vmatpush2.msra.mxu0 0.0
    %3830 = vmatprep.subr.mxu0 0.0
    %3831 = vmatpush2.msra.mxu0 0.0
    %3832 = vmatprep.subr.mxu0 0.0
    %3833 = vmatpush2.msra.mxu0 0.0
    %3834 = vmatprep.subr.mxu0 0.0
    %3835 = vmatpush2.msra.mxu0 0.0
    %3836 = vmatprep.subr.mxu0 0.0
    %3837 = vmatpush2.msra.mxu0 0.0
    %3838 = vmatprep.mubr.f32.mxu0 0.0
    %3839 = vmatmul.mubr.f32.gmra.mxu0 %v3772
    %v3840 = vpop.f32.mrf.mxu0
    %v3841 = vadd.f32 0.0, %v3840
    %v3842 = vpop.f32.mrf.mxu0
    %3843 = vdwg.mxu0
    %v3845 = vsel %vm201, %v3603, 0
    %3847 = vmatprep.subr.mxu0 0.0
    %3848 = vmatpush1.msra.mxu0 0.0
    %3849 = vmatprep.subr.mxu0 0.0
    %3850 = vmatpush1.msra.mxu0 0.0
    %3851 = vmatprep.subr.mxu0 0.0
    %3852 = vmatpush1.msra.mxu0 0.0
    %3853 = vmatprep.subr.mxu0 0.0
    %3854 = vmatpush1.msra.mxu0 0.0
    %3855 = vmatprep.subr.mxu0 0.0
    %3856 = vmatpush1.msra.mxu0 0.0
    %3857 = vmatprep.subr.mxu0 0.0
    %3858 = vmatpush1.msra.mxu0 0.0
    %3859 = vmatprep.subr.mxu0 0.0
    %3860 = vmatpush1.msra.mxu0 0.0
    %3861 = vmatprep.subr.mxu0 0.0
    %3862 = vmatpush1.msra.mxu0 0.0
    %3863 = vmatprep.subr.mxu0 0.0
    %3864 = vmatpush1.msra.mxu0 0.0
    %3865 = vmatprep.subr.mxu0 0.0
    %3866 = vmatpush1.msra.mxu0 0.0
    %3867 = vmatprep.subr.mxu0 0.0
    %3868 = vmatpush1.msra.mxu0 0.0
    %3869 = vmatprep.subr.mxu0 0.0
    %3870 = vmatpush1.msra.mxu0 0.0
    %3871 = vmatprep.subr.mxu0 0.0
    %3872 = vmatpush1.msra.mxu0 0.0
    %3873 = vmatprep.subr.mxu0 0.0
    %3874 = vmatpush1.msra.mxu0 0.0
    %3875 = vmatprep.subr.mxu0 0.0
    %3876 = vmatpush1.msra.mxu0 0.0
    %3877 = vmatprep.subr.mxu0 0.0
    %3878 = vmatpush1.msra.mxu0 %v607
    %3879 = vmatprep.subr.mxu0 0.0
    %3880 = vmatpush2.msra.mxu0 0.0
    %3881 = vmatprep.subr.mxu0 0.0
    %3882 = vmatpush2.msra.mxu0 0.0
    %3883 = vmatprep.subr.mxu0 0.0
    %3884 = vmatpush2.msra.mxu0 0.0
    %3885 = vmatprep.subr.mxu0 0.0
    %3886 = vmatpush2.msra.mxu0 0.0
    %3887 = vmatprep.subr.mxu0 0.0
    %3888 = vmatpush2.msra.mxu0 0.0
    %3889 = vmatprep.subr.mxu0 0.0
    %3890 = vmatpush2.msra.mxu0 0.0
    %3891 = vmatprep.subr.mxu0 0.0
    %3892 = vmatpush2.msra.mxu0 0.0
    %3893 = vmatprep.subr.mxu0 0.0
    %3894 = vmatpush2.msra.mxu0 0.0
    %3895 = vmatprep.subr.mxu0 0.0
    %3896 = vmatpush2.msra.mxu0 0.0
    %3897 = vmatprep.subr.mxu0 0.0
    %3898 = vmatpush2.msra.mxu0 0.0
    %3899 = vmatprep.subr.mxu0 0.0
    %3900 = vmatpush2.msra.mxu0 0.0
    %3901 = vmatprep.subr.mxu0 0.0
    %3902 = vmatpush2.msra.mxu0 0.0
    %3903 = vmatprep.subr.mxu0 0.0
    %3904 = vmatpush2.msra.mxu0 0.0
    %3905 = vmatprep.subr.mxu0 0.0
    %3906 = vmatpush2.msra.mxu0 0.0
    %3907 = vmatprep.subr.mxu0 0.0
    %3908 = vmatpush2.msra.mxu0 0.0
    %3909 = vmatprep.subr.mxu0 0.0
    %3910 = vmatpush2.msra.mxu0 0.0
    %3911 = vmatprep.mubr.f32.mxu0 0.0
    %3912 = vmatmul.mubr.f32.gmra.mxu0 %v3845
    %v3913 = vpop.f32.mrf.mxu0
    %v3914 = vadd.f32 %v3841, %v3913
    %v3915 = vpop.f32.mrf.mxu0
    %3916 = vdwg.mxu0
    %3917 = vrot.lane.b32.xlu0 %v2486, 112
    %v3918 = vpop.permute.xlu0 %3917
    %3919 = vrot.lane.b32.xlu0 %v2486, 80
    %v3920 = vpop.permute.xlu0 %3919
    %v3921 = vsel %vm201, %v3918, 0
    %v3923 = vsel %vm201, %v3920, 0
    %3925 = vmatprep.subr.mxu0 0.0
    %3926 = vmatpush1.xpose.msra.mxu0 0.0
    %3927 = vmatprep.subr.mxu0 0.0
    %3928 = vmatpush1.xpose.msra.mxu0 0.0
    %3929 = vmatprep.subr.mxu0 0.0
    %3930 = vmatpush1.xpose.msra.mxu0 0.0
    %3931 = vmatprep.subr.mxu0 0.0
    %3932 = vmatpush1.xpose.msra.mxu0 0.0
    %3933 = vmatprep.subr.mxu0 0.0
    %3934 = vmatpush1.xpose.msra.mxu0 0.0
    %3935 = vmatprep.subr.mxu0 0.0
    %3936 = vmatpush1.xpose.msra.mxu0 0.0
    %3937 = vmatprep.subr.mxu0 0.0
    %3938 = vmatpush1.xpose.msra.mxu0 0.0
    %3939 = vmatprep.subr.mxu0 0.0
    %3940 = vmatpush1.xpose.msra.mxu0 0.0
    %3941 = vmatprep.subr.mxu0 0.0
    %3942 = vmatpush1.xpose.msra.mxu0 0.0
    %3943 = vmatprep.subr.mxu0 0.0
    %3944 = vmatpush1.xpose.msra.mxu0 0.0
    %3945 = vmatprep.subr.mxu0 0.0
    %3946 = vmatpush1.xpose.msra.mxu0 0.0
    %3947 = vmatprep.subr.mxu0 0.0
    %3948 = vmatpush1.xpose.msra.mxu0 0.0
    %3949 = vmatprep.subr.mxu0 0.0
    %3950 = vmatpush1.xpose.msra.mxu0 0.0
    %3951 = vmatprep.subr.mxu0 0.0
    %3952 = vmatpush1.xpose.msra.mxu0 0.0
    %3953 = vmatprep.subr.mxu0 0.0
    %3954 = vmatpush1.xpose.msra.mxu0 0.0
    %3955 = vmatprep.subr.mxu0 0.0
    %3956 = vmatpush1.xpose.msra.mxu0 %v3923
    %3957 = vmatprep.subr.mxu0 0.0
    %3958 = vmatpush2.xpose.msra.mxu0 0.0
    %3959 = vmatprep.subr.mxu0 0.0
    %3960 = vmatpush2.xpose.msra.mxu0 0.0
    %3961 = vmatprep.subr.mxu0 0.0
    %3962 = vmatpush2.xpose.msra.mxu0 0.0
    %3963 = vmatprep.subr.mxu0 0.0
    %3964 = vmatpush2.xpose.msra.mxu0 0.0
    %3965 = vmatprep.subr.mxu0 0.0
    %3966 = vmatpush2.xpose.msra.mxu0 0.0
    %3967 = vmatprep.subr.mxu0 0.0
    %3968 = vmatpush2.xpose.msra.mxu0 0.0
    %3969 = vmatprep.subr.mxu0 0.0
    %3970 = vmatpush2.xpose.msra.mxu0 0.0
    %3971 = vmatprep.subr.mxu0 0.0
    %3972 = vmatpush2.xpose.msra.mxu0 0.0
    %3973 = vmatprep.subr.mxu0 0.0
    %3974 = vmatpush2.xpose.msra.mxu0 0.0
    %3975 = vmatprep.subr.mxu0 0.0
    %3976 = vmatpush2.xpose.msra.mxu0 0.0
    %3977 = vmatprep.subr.mxu0 0.0
    %3978 = vmatpush2.xpose.msra.mxu0 0.0
    %3979 = vmatprep.subr.mxu0 0.0
    %3980 = vmatpush2.xpose.msra.mxu0 0.0
    %3981 = vmatprep.subr.mxu0 0.0
    %3982 = vmatpush2.xpose.msra.mxu0 0.0
    %3983 = vmatprep.subr.mxu0 0.0
    %3984 = vmatpush2.xpose.msra.mxu0 0.0
    %3985 = vmatprep.subr.mxu0 0.0
    %3986 = vmatpush2.xpose.msra.mxu0 0.0
    %3987 = vmatprep.subr.mxu0 0.0
    %3988 = vmatpush2.xpose.msra.mxu0 0.0
    %3989 = vmatprep.mubr.f32.mxu0 0.0
    %3990 = vmatmul.mubr.f32.gmra.mxu0 %v3921
    %v3991 = vpop.f32.mrf.mxu0
    %v3992 = vadd.f32 %v1171, %v3991
    %v3993 = vpop.f32.mrf.mxu0
    %3994 = vdwg.mxu0
    %v3995 = vsel %vm201, %v3992, -inf
    %3996 = vmax.xlane.f32.xlu0 %v3995
    %v3997 = vpop.xlane.xlu0 %3996
    %v3998 = vsub.f32 %v3992, %v3997
    %v3999 = vmul.f32 %v3998, 1.442695
    %v4000 = vpow.pop %v3999
    %v4001 = vsel %vm201, %v4000, 0.0
    %4002 = vadd.xlane.f32.xlu0 %v4001
    %v4003 = vpop.xlane.xlu0 %4002
    %v4004 = vrcp.pop %v4003
    %v4005 = vmul.f32 %v4000, %v4004
    %4006 = vrot.lane.b32.xlu0 %v2486, 48
    %v4007 = vpop.permute.xlu0 %4006
    %v4010 = vsel %vm201, %v4005, 0
    %4012 = vmatprep.subr.mxu0 0.0
    %4013 = vmatpush1.msra.mxu0 0.0
    %4014 = vmatprep.subr.mxu0 0.0
    %4015 = vmatpush1.msra.mxu0 0.0
    %4016 = vmatprep.subr.mxu0 0.0
    %4017 = vmatpush1.msra.mxu0 0.0
    %4018 = vmatprep.subr.mxu0 0.0
    %4019 = vmatpush1.msra.mxu0 0.0
    %4020 = vmatprep.subr.mxu0 0.0
    %4021 = vmatpush1.msra.mxu0 0.0
    %4022 = vmatprep.subr.mxu0 0.0
    %4023 = vmatpush1.msra.mxu0 0.0
    %4024 = vmatprep.subr.mxu0 0.0
    %4025 = vmatpush1.msra.mxu0 0.0
    %4026 = vmatprep.subr.mxu0 0.0
    %4027 = vmatpush1.msra.mxu0 0.0
    %4028 = vmatprep.subr.mxu0 0.0
    %4029 = vmatpush1.msra.mxu0 0.0
    %4030 = vmatprep.subr.mxu0 0.0
    %4031 = vmatpush1.msra.mxu0 0.0
    %4032 = vmatprep.subr.mxu0 0.0
    %4033 = vmatpush1.msra.mxu0 0.0
    %4034 = vmatprep.subr.mxu0 0.0
    %4035 = vmatpush1.msra.mxu0 0.0
    %4036 = vmatprep.subr.mxu0 0.0
    %4037 = vmatpush1.msra.mxu0 0.0
    %4038 = vmatprep.subr.mxu0 0.0
    %4039 = vmatpush1.msra.mxu0 0.0
    %4040 = vmatprep.subr.mxu0 0.0
    %4041 = vmatpush1.msra.mxu0 0.0
    %4042 = vmatprep.subr.mxu0 0.0
    %4043 = vmatpush1.msra.mxu0 %v4007
    %4044 = vmatprep.subr.mxu0 0.0
    %4045 = vmatpush2.msra.mxu0 0.0
    %4046 = vmatprep.subr.mxu0 0.0
    %4047 = vmatpush2.msra.mxu0 0.0
    %4048 = vmatprep.subr.mxu0 0.0
    %4049 = vmatpush2.msra.mxu0 0.0
    %4050 = vmatprep.subr.mxu0 0.0
    %4051 = vmatpush2.msra.mxu0 0.0
    %4052 = vmatprep.subr.mxu0 0.0
    %4053 = vmatpush2.msra.mxu0 0.0
    %4054 = vmatprep.subr.mxu0 0.0
    %4055 = vmatpush2.msra.mxu0 0.0
    %4056 = vmatprep.subr.mxu0 0.0
    %4057 = vmatpush2.msra.mxu0 0.0
    %4058 = vmatprep.subr.mxu0 0.0
    %4059 = vmatpush2.msra.mxu0 0.0
    %4060 = vmatprep.subr.mxu0 0.0
    %4061 = vmatpush2.msra.mxu0 0.0
    %4062 = vmatprep.subr.mxu0 0.0
    %4063 = vmatpush2.msra.mxu0 0.0
    %4064 = vmatprep.subr.mxu0 0.0
    %4065 = vmatpush2.msra.mxu0 0.0
    %4066 = vmatprep.subr.mxu0 0.0
    %4067 = vmatpush2.msra.mxu0 0.0
    %4068 = vmatprep.subr.mxu0 0.0
    %4069 = vmatpush2.msra.mxu0 0.0
    %4070 = vmatprep.subr.mxu0 0.0
    %4071 = vmatpush2.msra.mxu0 0.0
    %4072 = vmatprep.subr.mxu0 0.0
    %4073 = vmatpush2.msra.mxu0 0.0
    %4074 = vmatprep.subr.mxu0 0.0
    %4075 = vmatpush2.msra.mxu0 0.0
    %4076 = vmatprep.mubr.f32.mxu0 0.0
    %4077 = vmatmul.mubr.f32.gmra.mxu0 %v4010
    %v4078 = vpop.f32.mrf.mxu0
    %v4079 = vadd.f32 0.0, %v4078
    %v4080 = vpop.f32.mrf.mxu0
    %4081 = vdwg.mxu0
    %v4083 = vsel %vm201, %v4079, 0
    %4085 = vmatprep.subr.mxu0 0.0
    %4086 = vmatpush1.msra.mxu0 0.0
    %4087 = vmatprep.subr.mxu0 0.0
    %4088 = vmatpush1.msra.mxu0 0.0
    %4089 = vmatprep.subr.mxu0 0.0
    %4090 = vmatpush1.msra.mxu0 0.0
    %4091 = vmatprep.subr.mxu0 0.0
    %4092 = vmatpush1.msra.mxu0 0.0
    %4093 = vmatprep.subr.mxu0 0.0
    %4094 = vmatpush1.msra.mxu0 0.0
    %4095 = vmatprep.subr.mxu0 0.0
    %4096 = vmatpush1.msra.mxu0 0.0
    %4097 = vmatprep.subr.mxu0 0.0
    %4098 = vmatpush1.msra.mxu0 0.0
    %4099 = vmatprep.subr.mxu0 0.0
    %4100 = vmatpush1.msra.mxu0 0.0
    %4101 = vmatprep.subr.mxu0 0.0
    %4102 = vmatpush1.msra.mxu0 0.0
    %4103 = vmatprep.subr.mxu0 0.0
    %4104 = vmatpush1.msra.mxu0 0.0
    %4105 = vmatprep.subr.mxu0 0.0
    %4106 = vmatpush1.msra.mxu0 0.0
    %4107 = vmatprep.subr.mxu0 0.0
    %4108 = vmatpush1.msra.mxu0 0.0
    %4109 = vmatprep.subr.mxu0 0.0
    %4110 = vmatpush1.msra.mxu0 0.0
    %4111 = vmatprep.subr.mxu0 0.0
    %4112 = vmatpush1.msra.mxu0 0.0
    %4113 = vmatprep.subr.mxu0 0.0
    %4114 = vmatpush1.msra.mxu0 0.0
    %4115 = vmatprep.subr.mxu0 0.0
    %4116 = vmatpush1.msra.mxu0 %v849
    %4117 = vmatprep.subr.mxu0 0.0
    %4118 = vmatpush2.msra.mxu0 0.0
    %4119 = vmatprep.subr.mxu0 0.0
    %4120 = vmatpush2.msra.mxu0 0.0
    %4121 = vmatprep.subr.mxu0 0.0
    %4122 = vmatpush2.msra.mxu0 0.0
    %4123 = vmatprep.subr.mxu0 0.0
    %4124 = vmatpush2.msra.mxu0 0.0
    %4125 = vmatprep.subr.mxu0 0.0
    %4126 = vmatpush2.msra.mxu0 0.0
    %4127 = vmatprep.subr.mxu0 0.0
    %4128 = vmatpush2.msra.mxu0 0.0
    %4129 = vmatprep.subr.mxu0 0.0
    %4130 = vmatpush2.msra.mxu0 0.0
    %4131 = vmatprep.subr.mxu0 0.0
    %4132 = vmatpush2.msra.mxu0 0.0
    %4133 = vmatprep.subr.mxu0 0.0
    %4134 = vmatpush2.msra.mxu0 0.0
    %4135 = vmatprep.subr.mxu0 0.0
    %4136 = vmatpush2.msra.mxu0 0.0
    %4137 = vmatprep.subr.mxu0 0.0
    %4138 = vmatpush2.msra.mxu0 0.0
    %4139 = vmatprep.subr.mxu0 0.0
    %4140 = vmatpush2.msra.mxu0 0.0
    %4141 = vmatprep.subr.mxu0 0.0
    %4142 = vmatpush2.msra.mxu0 0.0
    %4143 = vmatprep.subr.mxu0 0.0
    %4144 = vmatpush2.msra.mxu0 0.0
    %4145 = vmatprep.subr.mxu0 0.0
    %4146 = vmatpush2.msra.mxu0 0.0
    %4147 = vmatprep.subr.mxu0 0.0
    %4148 = vmatpush2.msra.mxu0 0.0
    %4149 = vmatprep.mubr.f32.mxu0 0.0
    %4150 = vmatmul.mubr.f32.gmra.mxu0 %v4083
    %v4151 = vpop.f32.mrf.mxu0
    %v4152 = vadd.f32 0.0, %v4151
    %v4153 = vpop.f32.mrf.mxu0
    %4154 = vdwg.mxu0
    %v4155 = vadd.f32 %v3914, %v4152
    %4156 = vrot.lane.b32.xlu0 %v2486, 104
    %v4157 = vpop.permute.xlu0 %4156
    %4158 = vrot.lane.b32.xlu0 %v2486, 72
    %v4159 = vpop.permute.xlu0 %4158
    %v4160 = vsel %vm201, %v4157, 0
    %v4162 = vsel %vm201, %v4159, 0
    %4164 = vmatprep.subr.mxu0 0.0
    %4165 = vmatpush1.xpose.msra.mxu0 0.0
    %4166 = vmatprep.subr.mxu0 0.0
    %4167 = vmatpush1.xpose.msra.mxu0 0.0
    %4168 = vmatprep.subr.mxu0 0.0
    %4169 = vmatpush1.xpose.msra.mxu0 0.0
    %4170 = vmatprep.subr.mxu0 0.0
    %4171 = vmatpush1.xpose.msra.mxu0 0.0
    %4172 = vmatprep.subr.mxu0 0.0
    %4173 = vmatpush1.xpose.msra.mxu0 0.0
    %4174 = vmatprep.subr.mxu0 0.0
    %4175 = vmatpush1.xpose.msra.mxu0 0.0
    %4176 = vmatprep.subr.mxu0 0.0
    %4177 = vmatpush1.xpose.msra.mxu0 0.0
    %4178 = vmatprep.subr.mxu0 0.0
    %4179 = vmatpush1.xpose.msra.mxu0 0.0
    %4180 = vmatprep.subr.mxu0 0.0
    %4181 = vmatpush1.xpose.msra.mxu0 0.0
    %4182 = vmatprep.subr.mxu0 0.0
    %4183 = vmatpush1.xpose.msra.mxu0 0.0
    %4184 = vmatprep.subr.mxu0 0.0
    %4185 = vmatpush1.xpose.msra.mxu0 0.0
    %4186 = vmatprep.subr.mxu0 0.0
    %4187 = vmatpush1.xpose.msra.mxu0 0.0
    %4188 = vmatprep.subr.mxu0 0.0
    %4189 = vmatpush1.xpose.msra.mxu0 0.0
    %4190 = vmatprep.subr.mxu0 0.0
    %4191 = vmatpush1.xpose.msra.mxu0 0.0
    %4192 = vmatprep.subr.mxu0 0.0
    %4193 = vmatpush1.xpose.msra.mxu0 0.0
    %4194 = vmatprep.subr.mxu0 0.0
    %4195 = vmatpush1.xpose.msra.mxu0 %v4162
    %4196 = vmatprep.subr.mxu0 0.0
    %4197 = vmatpush2.xpose.msra.mxu0 0.0
    %4198 = vmatprep.subr.mxu0 0.0
    %4199 = vmatpush2.xpose.msra.mxu0 0.0
    %4200 = vmatprep.subr.mxu0 0.0
    %4201 = vmatpush2.xpose.msra.mxu0 0.0
    %4202 = vmatprep.subr.mxu0 0.0
    %4203 = vmatpush2.xpose.msra.mxu0 0.0
    %4204 = vmatprep.subr.mxu0 0.0
    %4205 = vmatpush2.xpose.msra.mxu0 0.0
    %4206 = vmatprep.subr.mxu0 0.0
    %4207 = vmatpush2.xpose.msra.mxu0 0.0
    %4208 = vmatprep.subr.mxu0 0.0
    %4209 = vmatpush2.xpose.msra.mxu0 0.0
    %4210 = vmatprep.subr.mxu0 0.0
    %4211 = vmatpush2.xpose.msra.mxu0 0.0
    %4212 = vmatprep.subr.mxu0 0.0
    %4213 = vmatpush2.xpose.msra.mxu0 0.0
    %4214 = vmatprep.subr.mxu0 0.0
    %4215 = vmatpush2.xpose.msra.mxu0 0.0
    %4216 = vmatprep.subr.mxu0 0.0
    %4217 = vmatpush2.xpose.msra.mxu0 0.0
    %4218 = vmatprep.subr.mxu0 0.0
    %4219 = vmatpush2.xpose.msra.mxu0 0.0
    %4220 = vmatprep.subr.mxu0 0.0
    %4221 = vmatpush2.xpose.msra.mxu0 0.0
    %4222 = vmatprep.subr.mxu0 0.0
    %4223 = vmatpush2.xpose.msra.mxu0 0.0
    %4224 = vmatprep.subr.mxu0 0.0
    %4225 = vmatpush2.xpose.msra.mxu0 0.0
    %4226 = vmatprep.subr.mxu0 0.0
    %4227 = vmatpush2.xpose.msra.mxu0 0.0
    %4228 = vmatprep.mubr.f32.mxu0 0.0
    %4229 = vmatmul.mubr.f32.gmra.mxu0 %v4160
    %v4230 = vpop.f32.mrf.mxu0
    %v4231 = vadd.f32 %v1171, %v4230
    %v4232 = vpop.f32.mrf.mxu0
    %4233 = vdwg.mxu0
    %v4234 = vsel %vm201, %v4231, -inf
    %4235 = vmax.xlane.f32.xlu0 %v4234
    %v4236 = vpop.xlane.xlu0 %4235
    %v4237 = vsub.f32 %v4231, %v4236
    %v4238 = vmul.f32 %v4237, 1.442695
    %v4239 = vpow.pop %v4238
    %v4240 = vsel %vm201, %v4239, 0.0
    %4241 = vadd.xlane.f32.xlu0 %v4240
    %v4242 = vpop.xlane.xlu0 %4241
    %v4243 = vrcp.pop %v4242
    %v4244 = vmul.f32 %v4239, %v4243
    %4245 = vrot.lane.b32.xlu0 %v2486, 40
    %v4246 = vpop.permute.xlu0 %4245
    %v4249 = vsel %vm201, %v4244, 0
    %4251 = vmatprep.subr.mxu0 0.0
    %4252 = vmatpush1.msra.mxu0 0.0
    %4253 = vmatprep.subr.mxu0 0.0
    %4254 = vmatpush1.msra.mxu0 0.0
    %4255 = vmatprep.subr.mxu0 0.0
    %4256 = vmatpush1.msra.mxu0 0.0
    %4257 = vmatprep.subr.mxu0 0.0
    %4258 = vmatpush1.msra.mxu0 0.0
    %4259 = vmatprep.subr.mxu0 0.0
    %4260 = vmatpush1.msra.mxu0 0.0
    %4261 = vmatprep.subr.mxu0 0.0
    %4262 = vmatpush1.msra.mxu0 0.0
    %4263 = vmatprep.subr.mxu0 0.0
    %4264 = vmatpush1.msra.mxu0 0.0
    %4265 = vmatprep.subr.mxu0 0.0
    %4266 = vmatpush1.msra.mxu0 0.0
    %4267 = vmatprep.subr.mxu0 0.0
    %4268 = vmatpush1.msra.mxu0 0.0
    %4269 = vmatprep.subr.mxu0 0.0
    %4270 = vmatpush1.msra.mxu0 0.0
    %4271 = vmatprep.subr.mxu0 0.0
    %4272 = vmatpush1.msra.mxu0 0.0
    %4273 = vmatprep.subr.mxu0 0.0
    %4274 = vmatpush1.msra.mxu0 0.0
    %4275 = vmatprep.subr.mxu0 0.0
    %4276 = vmatpush1.msra.mxu0 0.0
    %4277 = vmatprep.subr.mxu0 0.0
    %4278 = vmatpush1.msra.mxu0 0.0
    %4279 = vmatprep.subr.mxu0 0.0
    %4280 = vmatpush1.msra.mxu0 0.0
    %4281 = vmatprep.subr.mxu0 0.0
    %4282 = vmatpush1.msra.mxu0 %v4246
    %4283 = vmatprep.subr.mxu0 0.0
    %4284 = vmatpush2.msra.mxu0 0.0
    %4285 = vmatprep.subr.mxu0 0.0
    %4286 = vmatpush2.msra.mxu0 0.0
    %4287 = vmatprep.subr.mxu0 0.0
    %4288 = vmatpush2.msra.mxu0 0.0
    %4289 = vmatprep.subr.mxu0 0.0
    %4290 = vmatpush2.msra.mxu0 0.0
    %4291 = vmatprep.subr.mxu0 0.0
    %4292 = vmatpush2.msra.mxu0 0.0
    %4293 = vmatprep.subr.mxu0 0.0
    %4294 = vmatpush2.msra.mxu0 0.0
    %4295 = vmatprep.subr.mxu0 0.0
    %4296 = vmatpush2.msra.mxu0 0.0
    %4297 = vmatprep.subr.mxu0 0.0
    %4298 = vmatpush2.msra.mxu0 0.0
    %4299 = vmatprep.subr.mxu0 0.0
    %4300 = vmatpush2.msra.mxu0 0.0
    %4301 = vmatprep.subr.mxu0 0.0
    %4302 = vmatpush2.msra.mxu0 0.0
    %4303 = vmatprep.subr.mxu0 0.0
    %4304 = vmatpush2.msra.mxu0 0.0
    %4305 = vmatprep.subr.mxu0 0.0
    %4306 = vmatpush2.msra.mxu0 0.0
    %4307 = vmatprep.subr.mxu0 0.0
    %4308 = vmatpush2.msra.mxu0 0.0
    %4309 = vmatprep.subr.mxu0 0.0
    %4310 = vmatpush2.msra.mxu0 0.0
    %4311 = vmatprep.subr.mxu0 0.0
    %4312 = vmatpush2.msra.mxu0 0.0
    %4313 = vmatprep.subr.mxu0 0.0
    %4314 = vmatpush2.msra.mxu0 0.0
    %4315 = vmatprep.mubr.f32.mxu0 0.0
    %4316 = vmatmul.mubr.f32.gmra.mxu0 %v4249
    %v4317 = vpop.f32.mrf.mxu0
    %v4318 = vadd.f32 0.0, %v4317
    %v4319 = vpop.f32.mrf.mxu0
    %4320 = vdwg.mxu0
    %v4322 = vsel %vm201, %v4318, 0
    %4324 = vmatprep.subr.mxu0 0.0
    %4325 = vmatpush1.msra.mxu0 0.0
    %4326 = vmatprep.subr.mxu0 0.0
    %4327 = vmatpush1.msra.mxu0 0.0
    %4328 = vmatprep.subr.mxu0 0.0
    %4329 = vmatpush1.msra.mxu0 0.0
    %4330 = vmatprep.subr.mxu0 0.0
    %4331 = vmatpush1.msra.mxu0 0.0
    %4332 = vmatprep.subr.mxu0 0.0
    %4333 = vmatpush1.msra.mxu0 0.0
    %4334 = vmatprep.subr.mxu0 0.0
    %4335 = vmatpush1.msra.mxu0 0.0
    %4336 = vmatprep.subr.mxu0 0.0
    %4337 = vmatpush1.msra.mxu0 0.0
    %4338 = vmatprep.subr.mxu0 0.0
    %4339 = vmatpush1.msra.mxu0 0.0
    %4340 = vmatprep.subr.mxu0 0.0
    %4341 = vmatpush1.msra.mxu0 0.0
    %4342 = vmatprep.subr.mxu0 0.0
    %4343 = vmatpush1.msra.mxu0 0.0
    %4344 = vmatprep.subr.mxu0 0.0
    %4345 = vmatpush1.msra.mxu0 0.0
    %4346 = vmatprep.subr.mxu0 0.0
    %4347 = vmatpush1.msra.mxu0 0.0
    %4348 = vmatprep.subr.mxu0 0.0
    %4349 = vmatpush1.msra.mxu0 0.0
    %4350 = vmatprep.subr.mxu0 0.0
    %4351 = vmatpush1.msra.mxu0 0.0
    %4352 = vmatprep.subr.mxu0 0.0
    %4353 = vmatpush1.msra.mxu0 0.0
    %4354 = vmatprep.subr.mxu0 0.0
    %4355 = vmatpush1.msra.mxu0 %v1092
    %4356 = vmatprep.subr.mxu0 0.0
    %4357 = vmatpush2.msra.mxu0 0.0
    %4358 = vmatprep.subr.mxu0 0.0
    %4359 = vmatpush2.msra.mxu0 0.0
    %4360 = vmatprep.subr.mxu0 0.0
    %4361 = vmatpush2.msra.mxu0 0.0
    %4362 = vmatprep.subr.mxu0 0.0
    %4363 = vmatpush2.msra.mxu0 0.0
    %4364 = vmatprep.subr.mxu0 0.0
    %4365 = vmatpush2.msra.mxu0 0.0
    %4366 = vmatprep.subr.mxu0 0.0
    %4367 = vmatpush2.msra.mxu0 0.0
    %4368 = vmatprep.subr.mxu0 0.0
    %4369 = vmatpush2.msra.mxu0 0.0
    %4370 = vmatprep.subr.mxu0 0.0
    %4371 = vmatpush2.msra.mxu0 0.0
    %4372 = vmatprep.subr.mxu0 0.0
    %4373 = vmatpush2.msra.mxu0 0.0
    %4374 = vmatprep.subr.mxu0 0.0
    %4375 = vmatpush2.msra.mxu0 0.0
    %4376 = vmatprep.subr.mxu0 0.0
    %4377 = vmatpush2.msra.mxu0 0.0
    %4378 = vmatprep.subr.mxu0 0.0
    %4379 = vmatpush2.msra.mxu0 0.0
    %4380 = vmatprep.subr.mxu0 0.0
    %4381 = vmatpush2.msra.mxu0 0.0
    %4382 = vmatprep.subr.mxu0 0.0
    %4383 = vmatpush2.msra.mxu0 0.0
    %4384 = vmatprep.subr.mxu0 0.0
    %4385 = vmatpush2.msra.mxu0 0.0
    %4386 = vmatprep.subr.mxu0 0.0
    %4387 = vmatpush2.msra.mxu0 0.0
    %4388 = vmatprep.mubr.f32.mxu0 0.0
    %4389 = vmatmul.mubr.f32.gmra.mxu0 %v4322
    %v4390 = vpop.f32.mrf.mxu0
    %v4391 = vadd.f32 0.0, %v4390
    %v4392 = vpop.f32.mrf.mxu0
    %4393 = vdwg.mxu0
    %v4394 = vadd.f32 %v4155, %v4391
    %v4395 = vadd.f32 %v2362, %v3441
    %v4396 = vadd.f32 %v2363, %v4394
    %v4397 = vadd.f32 %v4395, %v2130
    %v4398 = vadd.f32 %v4396, %v2130
    %v4399 = vsel %vm52, %v4397, 0.0
    %4400 = vadd.xlane.f32.xlu0 %v4399
    %v4401 = vpop.xlane.xlu0 %4400
    %v4402 = vsel %vm52, %v4398, 0.0
    %4403 = vadd.xlane.f32.xlu0 %v4402
    %v4404 = vpop.xlane.xlu0 %4403
    %v4405 = vmul.f32 %v4401, %v59
    %v4406 = vmul.f32 %v4404, %v59
    %v4407 = vsub.f32 %v4397, %v4405
    %v4408 = vsub.f32 %v4398, %v4406
    %v4409 = vmul.f32 %v4407, %v4407
    %v4410 = vmul.f32 %v4408, %v4408
    %v4411 = vsel %vm52, %v4409, 0.0
    %4412 = vadd.xlane.f32.xlu0 %v4411
    %v4413 = vpop.xlane.xlu0 %4412
    %v4414 = vsel %vm52, %v4410, 0.0
    %4415 = vadd.xlane.f32.xlu0 %v4414
    %v4416 = vpop.xlane.xlu0 %4415
    %v4417 = vmul.f32 %v4413, %v72
    %v4418 = vmul.f32 %v4416, %v72
    %v4419 = vrsqrt.pop %v4417
    %v4420 = vmul.f32 %v4417, %v4419
    %vm4421 = vcmp.eq.f32.partialorder %v4417, inf
    %v4422 = vsel %vm4421, %v4417, %v4420
    %vm4423 = vcmp.eq.f32.partialorder %v4417, 0.0
    %v4424 = vand.u32 %v4417, 2147483648
    %v4425 = vsel %vm4423, %v4424, %v4422
    %v4426 = vrsqrt.pop %v4418
    %v4427 = vmul.f32 %v4418, %v4426
    %vm4428 = vcmp.eq.f32.partialorder %v4418, inf
    %v4429 = vsel %vm4428, %v4418, %v4427
    %vm4430 = vcmp.eq.f32.partialorder %v4418, 0.0
    %v4431 = vand.u32 %v4418, 2147483648
    %v4432 = vsel %vm4430, %v4431, %v4429
    %v4433 = vmul.f32 %v2170, %v4407
    %v4434 = vmul.f32 %v2170, %v4408
    %v4435 = vadd.f32 %v4425, 1e-06
    %v4436 = vadd.f32 %v4432, 1e-06
    %v4437 = vrcp.pop %v4435
    %v4438 = vmul.f32 %v4433, %v4437
    %v4439 = vrcp.pop %v4436
    %v4440 = vmul.f32 %v4434, %v4439
    %v4441 = vadd.f32 %v4438, %v2182
    %v4442 = vadd.f32 %v4440, %v2182
    %v4444 = vsel %vm52, %v4441, 0
    %v4447 = vsel %vm52, %v4442, 0
    %4449 = vmatprep.subr.mxu0 0.0
    %4450 = vmatpush1.msra.mxu0 0.0
    %4451 = vmatprep.subr.mxu0 0.0
    %4452 = vmatpush1.msra.mxu0 0.0
    %4453 = vmatprep.subr.mxu0 0.0
    %4454 = vmatpush1.msra.mxu0 0.0
    %4455 = vmatprep.subr.mxu0 0.0
    %4456 = vmatpush1.msra.mxu0 0.0
    %4457 = vmatprep.subr.mxu0 0.0
    %4458 = vmatpush1.msra.mxu0 0.0
    %4459 = vmatprep.subr.mxu0 0.0
    %4460 = vmatpush1.msra.mxu0 0.0
    %4461 = vmatprep.subr.mxu0 0.0
    %4462 = vmatpush1.msra.mxu0 0.0
    %4463 = vmatprep.subr.mxu0 0.0
    %4464 = vmatpush1.msra.mxu0 0.0
    %4465 = vmatprep.subr.mxu0 0.0
    %4466 = vmatpush1.msra.mxu0 0.0
    %4467 = vmatprep.subr.mxu0 0.0
    %4468 = vmatpush1.msra.mxu0 0.0
    %4469 = vmatprep.subr.mxu0 0.0
    %4470 = vmatpush1.msra.mxu0 0.0
    %4471 = vmatprep.subr.mxu0 0.0
    %4472 = vmatpush1.msra.mxu0 0.0
    %4473 = vmatprep.subr.mxu0 0.0
    %4474 = vmatpush1.msra.mxu0 %v42
    %4475 = vmatprep.subr.mxu0 0.0
    %4476 = vmatpush1.msra.mxu0 %v41
    %4477 = vmatprep.subr.mxu0 0.0
    %4478 = vmatpush1.msra.mxu0 %v40
    %4479 = vmatprep.subr.mxu0 0.0
    %4480 = vmatpush1.msra.mxu0 %v39
    %4481 = vmatprep.subr.mxu0 0.0
    %4482 = vmatpush2.msra.mxu0 0.0
    %4483 = vmatprep.subr.mxu0 0.0
    %4484 = vmatpush2.msra.mxu0 0.0
    %4485 = vmatprep.subr.mxu0 0.0
    %4486 = vmatpush2.msra.mxu0 0.0
    %4487 = vmatprep.subr.mxu0 0.0
    %4488 = vmatpush2.msra.mxu0 0.0
    %4489 = vmatprep.subr.mxu0 0.0
    %4490 = vmatpush2.msra.mxu0 0.0
    %4491 = vmatprep.subr.mxu0 0.0
    %4492 = vmatpush2.msra.mxu0 0.0
    %4493 = vmatprep.subr.mxu0 0.0
    %4494 = vmatpush2.msra.mxu0 0.0
    %4495 = vmatprep.subr.mxu0 0.0
    %4496 = vmatpush2.msra.mxu0 0.0
    %4497 = vmatprep.subr.mxu0 0.0
    %4498 = vmatpush2.msra.mxu0 0.0
    %4499 = vmatprep.subr.mxu0 0.0
    %4500 = vmatpush2.msra.mxu0 0.0
    %4501 = vmatprep.subr.mxu0 0.0
    %4502 = vmatpush2.msra.mxu0 0.0
    %4503 = vmatprep.subr.mxu0 0.0
    %4504 = vmatpush2.msra.mxu0 0.0
    %4505 = vmatprep.subr.mxu0 0.0
    %4506 = vmatpush2.msra.mxu0 0.0
    %4507 = vmatprep.subr.mxu0 0.0
    %4508 = vmatpush2.msra.mxu0 0.0
    %4509 = vmatprep.subr.mxu0 0.0
    %4510 = vmatpush2.msra.mxu0 0.0
    %4511 = vmatprep.subr.mxu0 0.0
    %4512 = vmatpush2.msra.mxu0 0.0
    %4513 = vmatprep.mubr.f32.mxu0 0.0
    %4514 = vmatmul.mubr.f32.gmra.mxu0 %v4444
    %v4515 = vpop.f32.mrf.mxu0
    %v4516 = vadd.f32 %v2189, %v4515
    %v4517 = vpop.f32.mrf.mxu0
    %4518 = vmatprep.mubr.f32.mxu0 0.0
    %4519 = vmatmul.mubr.f32.gmra.mxu0 %v4447
    %v4520 = vpop.f32.mrf.mxu0
    %v4521 = vadd.f32 %v2189, %v4520
    %v4522 = vpop.f32.mrf.mxu0
    %4523 = vdwg.mxu0
    %v4524 = vmax.f32 %v4516, 0.0
    %v4525 = vmax.f32 %v4521, 0.0
    %v4527 = vsel %vm2274, %v4524, 0
    %v4530 = vsel %vm2274, %v4525, 0
    %4532 = vmatprep.subr.mxu0 0.0
    %4533 = vmatpush1.msra.mxu0 0.0
    %4534 = vmatprep.subr.mxu0 0.0
    %4535 = vmatpush1.msra.mxu0 0.0
    %4536 = vmatprep.subr.mxu0 0.0
    %4537 = vmatpush1.msra.mxu0 0.0
    %4538 = vmatprep.subr.mxu0 0.0
    %4539 = vmatpush1.msra.mxu0 0.0
    %4540 = vmatprep.subr.mxu0 0.0
    %4541 = vmatpush1.msra.mxu0 0.0
    %4542 = vmatprep.subr.mxu0 0.0
    %4543 = vmatpush1.msra.mxu0 0.0
    %4544 = vmatprep.subr.mxu0 0.0
    %4545 = vmatpush1.msra.mxu0 0.0
    %4546 = vmatprep.subr.mxu0 0.0
    %4547 = vmatpush1.msra.mxu0 0.0
    %4548 = vmatprep.subr.mxu0 0.0
    %4549 = vmatpush1.msra.mxu0 %v51
    %4550 = vmatprep.subr.mxu0 0.0
    %4551 = vmatpush1.msra.mxu0 %v50
    %4552 = vmatprep.subr.mxu0 0.0
    %4553 = vmatpush1.msra.mxu0 %v49
    %4554 = vmatprep.subr.mxu0 0.0
    %4555 = vmatpush1.msra.mxu0 %v48
    %4556 = vmatprep.subr.mxu0 0.0
    %4557 = vmatpush1.msra.mxu0 %v47
    %4558 = vmatprep.subr.mxu0 0.0
    %4559 = vmatpush1.msra.mxu0 %v46
    %4560 = vmatprep.subr.mxu0 0.0
    %4561 = vmatpush1.msra.mxu0 %v45
    %4562 = vmatprep.subr.mxu0 0.0
    %4563 = vmatpush1.msra.mxu0 %v44
    %4564 = vmatprep.subr.mxu0 0.0
    %4565 = vmatpush2.msra.mxu0 0.0
    %4566 = vmatprep.subr.mxu0 0.0
    %4567 = vmatpush2.msra.mxu0 0.0
    %4568 = vmatprep.subr.mxu0 0.0
    %4569 = vmatpush2.msra.mxu0 0.0
    %4570 = vmatprep.subr.mxu0 0.0
    %4571 = vmatpush2.msra.mxu0 0.0
    %4572 = vmatprep.subr.mxu0 0.0
    %4573 = vmatpush2.msra.mxu0 0.0
    %4574 = vmatprep.subr.mxu0 0.0
    %4575 = vmatpush2.msra.mxu0 0.0
    %4576 = vmatprep.subr.mxu0 0.0
    %4577 = vmatpush2.msra.mxu0 0.0
    %4578 = vmatprep.subr.mxu0 0.0
    %4579 = vmatpush2.msra.mxu0 0.0
    %4580 = vmatprep.subr.mxu0 0.0
    %4581 = vmatpush2.msra.mxu0 0.0
    %4582 = vmatprep.subr.mxu0 0.0
    %4583 = vmatpush2.msra.mxu0 0.0
    %4584 = vmatprep.subr.mxu0 0.0
    %4585 = vmatpush2.msra.mxu0 0.0
    %4586 = vmatprep.subr.mxu0 0.0
    %4587 = vmatpush2.msra.mxu0 0.0
    %4588 = vmatprep.subr.mxu0 0.0
    %4589 = vmatpush2.msra.mxu0 0.0
    %4590 = vmatprep.subr.mxu0 0.0
    %4591 = vmatpush2.msra.mxu0 0.0
    %4592 = vmatprep.subr.mxu0 0.0
    %4593 = vmatpush2.msra.mxu0 0.0
    %4594 = vmatprep.subr.mxu0 0.0
    %4595 = vmatpush2.msra.mxu0 0.0
    %4596 = vmatprep.mubr.f32.mxu0 0.0
    %4597 = vmatmul.mubr.f32.gmra.mxu0 %v4527
    %v4598 = vpop.f32.mrf.mxu0
    %v4599 = vadd.f32 0.0, %v4598
    %v4600 = vpop.f32.mrf.mxu0
    %4601 = vmatprep.mubr.f32.mxu0 0.0
    %4602 = vmatmul.mubr.f32.gmra.mxu0 %v4530
    %v4603 = vpop.f32.mrf.mxu0
    %v4604 = vadd.f32 0.0, %v4603
    %v4605 = vpop.f32.mrf.mxu0
    %4606 = vdwg.mxu0
    %v4607 = vadd.f32 %v4397, %v4599
    %v4608 = vadd.f32 %v4398, %v4604
    %v4609 = vadd.f32 %v4607, %v2361
    %v4610 = vadd.f32 %v4608, %v2361
    %v4611 = vsel %vm52, %v4609, 0.0
    %4612 = vadd.xlane.f32.xlu0 %v4611
    %v4613 = vpop.xlane.xlu0 %4612
    %v4614 = vsel %vm52, %v4610, 0.0
    %4615 = vadd.xlane.f32.xlu0 %v4614
    %v4616 = vpop.xlane.xlu0 %4615
    %v4617 = vmul.f32 %v4613, %v59
    %v4618 = vmul.f32 %v4616, %v59
    %v4619 = vsub.f32 %v4609, %v4617
    %v4620 = vsub.f32 %v4610, %v4618
    %v4621 = vmul.f32 %v4619, %v4619
    %v4622 = vmul.f32 %v4620, %v4620
    %v4623 = vsel %vm52, %v4621, 0.0
    %4624 = vadd.xlane.f32.xlu0 %v4623
    %v4625 = vpop.xlane.xlu0 %4624
    %v4626 = vsel %vm52, %v4622, 0.0
    %4627 = vadd.xlane.f32.xlu0 %v4626
    %v4628 = vpop.xlane.xlu0 %4627
    %v4629 = vmul.f32 %v4625, %v72
    %v4630 = vmul.f32 %v4628, %v72
    %v4631 = vrsqrt.pop %v4629
    %v4632 = vmul.f32 %v4629, %v4631
    %vm4633 = vcmp.eq.f32.partialorder %v4629, inf
    %v4634 = vsel %vm4633, %v4629, %v4632
    %vm4635 = vcmp.eq.f32.partialorder %v4629, 0.0
    %v4636 = vand.u32 %v4629, 2147483648
    %v4637 = vsel %vm4635, %v4636, %v4634
    %v4638 = vrsqrt.pop %v4630
    %v4639 = vmul.f32 %v4630, %v4638
    %vm4640 = vcmp.eq.f32.partialorder %v4630, inf
    %v4641 = vsel %vm4640, %v4630, %v4639
    %vm4642 = vcmp.eq.f32.partialorder %v4630, 0.0
    %v4643 = vand.u32 %v4630, 2147483648
    %v4644 = vsel %vm4642, %v4643, %v4641
    %v4645 = vlaneseq
    %v4646 = vshrl.u32 %v4645, 7
    %v4647 = vsub.s32 6, %v4646
    %v4648 = vrot.slane %v38, %v4647
    %v4649 = vmul.f32 %v4648, %v4619
    %v4650 = vmul.f32 %v4648, %v4620
    %v4651 = vadd.f32 %v4637, 1e-06
    %v4652 = vadd.f32 %v4644, 1e-06
    %v4653 = vrcp.pop %v4651
    %v4654 = vmul.f32 %v4649, %v4653
    %v4655 = vrcp.pop %v4652
    %v4656 = vmul.f32 %v4650, %v4655
    %v4657 = vlaneseq
    %v4658 = vshrl.u32 %v4657, 7
    %v4659 = vsub.s32 7, %v4658
    %v4660 = vrot.slane %v38, %v4659
    %v4661 = vadd.f32 %v4654, %v4660
    %v4662 = vadd.f32 %v4656, %v4660
    %4663 = vst.msk [vmem:[#allocation2] sm:$0xff] %vm52, %v4661
    %4664 = vst.msk [vmem:[#allocation2 + $0x8] sm:$0xff] %vm52, %v4662
    // Predicated region
    $region34: #{encoder_forward.1} parent=1 // pred_check
      _
    $region35: #{encoder_forward.1} parent=1 // pred_check_branch
      %4666 = sbr.rel (0) target = $region37
    $region36: #{encoder_forward.1} parent=1 // pred_region
      %s4668 = ssub.s32 256, 256
      %4669 = vsyncadd [#allocation3], %s4668
      %s4670 = sshll.u32 [#allocation2], 4
      %s4671 = int_to_ptr.vmem [resolvable:$true] %s4670
      %4676 = dma.vmem_to_hbm [thread:$0]  %s4671, 256, %s8, [#allocation3], 128, 128, 8
    $region37: #{encoder_forward.1} parent=1 // pred_fallthru
      _
    // Predicated region
    $region38: #{encoder_forward.1} parent=1 // pred_check
      _
    $region39: #{encoder_forward.1} parent=1 // pred_check_branch
      %4678 = sbr.rel (0) target = $region41
    $region40: #{encoder_forward.1} parent=1 // pred_region
      %4679 = dma.done [#allocation3], 256
    $region41: #{encoder_forward.1} parent=1 // pred_fallthru
      _
    %4680 = vsyncpa [#allocation3], 1

</llo_original>
